<compile_context>
chip_gen: v6e
topology: v6e:2x2x1
jax: 0.10.0
libtpu: 0.0.40
codegen_flags: <defaults>
</compile_context>

<pallas_src>
import math

import numpy as np

import jax
import jax.numpy as jnp
from jax.experimental import pallas as pl
from jax.experimental.pallas import tpu as pltpu


def _cdiv(a: int, b: int) -> int:
    return -(-a // b)


def _interp_taps(in_size: int, out_size: int, scale: float):
    """Static 2-tap weights reproducing PyTorch linear interpolation with
    align_corners=False (half-pixel centers, src clamped >= 0, upper index
    clamped to in_size - 1).  Uses src = (o + 0.5)/scale - 0.5, matching
    F.interpolate(scale_factor=s) with the default recompute_scale_factor."""
    taps = []
    for o in range(out_size):
        src = (o + 0.5) / float(scale) - 0.5
        src = max(src, 0.0)
        i0 = min(int(math.floor(src)), in_size - 1)
        lam = float(src - i0)
        i1 = min(i0 + 1, in_size - 1)
        taps.append((i0, i1, lam))
    return tuple(taps)


def _interp_matrix(in_size: int, out_size: int, scale: float) -> jnp.ndarray:
    """(in_size, out_size) column-stochastic interpolation matrix (for the
    lane-axis W interpolation as a plain (M, K) @ (K, N) matmul)."""
    a = np.zeros((in_size, out_size), np.float32)
    for o, (i0, i1, lam) in enumerate(_interp_taps(in_size, out_size, scale)):
        a[i0, o] += 1.0 - lam
        a[i1, o] += lam
    return jnp.asarray(a)


def _make_upsample_kernel(h_taps, d_taps):
    """Kernel closure over the static H / D interpolation taps."""

    def kernel(x_ref, aw_ref, o_ref, yw_ref, yh_ref):
        B, D, H, W = x_ref.shape
        Wo = aw_ref.shape[1]

        # 1) W interpolation (lane-axis gather expressed as an MXU matmul).
        #    Compute dtype follows the input dtype (bf16 inputs use the
        #    bf16-native MXU path); accumulation is always f32.
        x2 = x_ref[...].reshape(B * D * H, W)
        yw = jax.lax.dot_general(
            x2, aw_ref[...],
            (((1,), (0,)), ((), ())),
            preferred_element_type=jnp.float32,
        )
        yw_ref[...] = yw.reshape(B, D, H, Wo)

        # 2) H interpolation: static 2-tap blend on the VPU (unrolled over Ho).
        for ho, (h0, h1, lam) in enumerate(h_taps):
            a = yw_ref[:, :, h0, :]
            if lam == 0.0:
                yh_ref[:, :, ho, :] = a
            else:
                yh_ref[:, :, ho, :] = (1.0 - lam) * a + lam * yw_ref[:, :, h1, :]

        # 3) D interpolation: static 2-tap blend, each step stores a
        #    contiguous (B, Ho, Wo) slab of the output block.
        for do, (d0, d1, lam) in enumerate(d_taps):
            a = yh_ref[:, d0, :, :]
            if lam == 0.0:
                z = a
            else:
                z = (1.0 - lam) * a + lam * yh_ref[:, d1, :, :]
            o_ref[:, do, :, :] = z.astype(o_ref.dtype)

    return kernel


def _choose_channel_block(nc: int, per_channel_bytes: int, budget_bytes: int,
                          min_steps: int = 4):
    """Pick the channel block size B and the grid step count.

    Targets at least `min_steps` grid steps so prologue/epilogue DMAs overlap
    with compute, prefers an even step count (v7x has 2 TensorCores sharing
    the 'parallel' grid axis), and allows non-divisor blocks (the wrapper pads
    NC up to B * steps)."""
    max_b = max(1, int(budget_bytes) // max(int(per_channel_bytes), 1))
    max_b = min(max_b, nc)
    steps = max(min_steps, _cdiv(nc, max_b))
    if steps < nc and steps % 2:
        steps += 1
    steps = min(steps, nc)
    b = _cdiv(nc, steps)
    steps = _cdiv(nc, b)          # minimize padding (< 1 block of waste)
    return int(b), int(steps)


def upsample_trilinear(x: jnp.ndarray, scale_factor) -> jnp.ndarray:
    """Equivalent of nn.functional.interpolate(x, scale_factor=scale_factor,
    mode='trilinear', align_corners=False) for a 5-D NCDHW input."""
    N, C, D, H, W = x.shape
    sf = float(scale_factor)
    Do = int(math.floor(D * sf))
    Ho = int(math.floor(H * sf))
    Wo = int(math.floor(W * sf))
    NC = N * C

    h_taps = _interp_taps(H, Ho, sf)
    d_taps = _interp_taps(D, Do, sf)
    # Keep weights in the input dtype (f32 stays f32 to match PyTorch's f32
    # computation; bf16 inputs naturally use the bf16 MXU path with f32 acc).
    a_w = _interp_matrix(W, Wo, sf).astype(x.dtype)          # (W, Wo)

    itemsize = jnp.dtype(x.dtype).itemsize
    per_channel = (2 * D * H * W * itemsize        # double-buffered input
                   + 2 * Do * Ho * Wo * itemsize   # double-buffered output
                   + D * H * Wo * 4                # yw scratch (f32)
                   + D * Ho * Wo * 4)              # yh scratch (f32)
    fixed = 2 * a_w.size * jnp.dtype(a_w.dtype).itemsize     # tiny (W, Wo)

    # Generation-aware VMEM sizing (64 MiB/TC on v7x, 128 MiB on v5e/v6e).
    try:
        vmem_cap = int(pltpu.get_tpu_info().vmem_capacity_bytes)
    except Exception:
        vmem_cap = 64 << 20
    budget = int(vmem_cap * 0.55) - fixed - (2 << 20)

    B, steps = _choose_channel_block(NC, per_channel, budget, min_steps=4)
    NC_pad = B * steps
    # TODO(synk): for very small NC (N=1, few channels) add a second parallel
    # grid axis over Do so both v7x TensorCores stay busy.

    xf = x.reshape(NC, D, H, W)
    if NC_pad != NC:
        xf = jnp.pad(xf, ((0, NC_pad - NC), (0, 0), (0, 0), (0, 0)))

    usage = B * per_channel + fixed
    vmem_limit = max(16 << 20, min(int(vmem_cap * 0.9), usage + (4 << 20)))

    cost = pl.CostEstimate(
        flops=int(2 * NC_pad * D * H * W * Wo
                  + 3 * NC_pad * (D + Do) * Ho * Wo),
        transcendentals=0,
        bytes_accessed=int(NC_pad * D * H * W * itemsize
                           + NC_pad * Do * Ho * Wo * itemsize
                           + a_w.size * jnp.dtype(a_w.dtype).itemsize),
    )

    kernel = _make_upsample_kernel(h_taps, d_taps)
    out = pl.pallas_call(
        kernel,
        out_shape=jax.ShapeDtypeStruct((NC_pad, Do, Ho, Wo), x.dtype),
        grid=(steps,),
        in_specs=[
            pl.BlockSpec((B, D, H, W), lambda i: (i, 0, 0, 0)),
            pl.BlockSpec((W, Wo), lambda i: (0, 0)),
        ],
        out_specs=pl.BlockSpec((B, Do, Ho, Wo), lambda i: (i, 0, 0, 0)),
        scratch_shapes=[
            pltpu.VMEM((B, D, H, Wo), jnp.float32),    # yw (after W interp)
            pltpu.VMEM((B, D, Ho, Wo), jnp.float32),   # yh (after H interp)
        ],
        compiler_params=pltpu.CompilerParams(
            dimension_semantics=("parallel",),
            vmem_limit_bytes=int(vmem_limit),
        ),
        cost_estimate=cost,
    )(xf, a_w)

    if NC_pad != NC:
        out = out[:NC]
    # TODO(synk): if Wo % 128 != 0 the output stores are lane-masked; a padded
    # (B*Do, Ho, Wo) store layout could be used if profiling shows the store
    # slot saturating.
    return out.reshape(N, C, Do, Ho, Wo)


def _reference_upsample(x, scale_factor):
    """Pure-JAX reference using the per-axis separable formulation (W, H, D)."""
    N, C, D, H, W = x.shape
    sf = float(scale_factor)
    Do = int(math.floor(D * sf))
    Ho = int(math.floor(H * sf))
    Wo = int(math.floor(W * sf))
    aw = _interp_matrix(W, Wo, sf)   # (W, Wo)
    ah = _interp_matrix(H, Ho, sf)   # (H, Ho)
    ad = _interp_matrix(D, Do, sf)   # (D, Do)
    y = x.astype(jnp.float32)
    y = jnp.einsum("ncdhw,wx->ncdhx", y, aw)
    y = jnp.einsum("ncdhx,hy->ncdyx", y, ah)
    y = jnp.einsum("ncdyx,dz->nczyx", y, ad)
    return y.astype(x.dtype)


if __name__ == "__main__":
    # Upsample has no learnable parameters; scale_factor=2, mode='trilinear'.
    key = jax.random.PRNGKey(0)
    N, C, D, H, W = 2, 4, 8, 8, 8
    x = jax.random.normal(key, (N, C, D, H, W), dtype=jnp.float32)

    out = upsample_trilinear(x, scale_factor=2)
    out = jax.block_until_ready(out)

    assert out.shape == (N, C, 2 * D, 2 * H, 2 * W), out.shape

    # correctness: kernel vs pure-JAX separable reference
    ref = _reference_upsample(x, 2)
    assert jnp.allclose(out, ref, atol=1e-5, rtol=1e-5)

    # sanity: constant volumes stay constant under trilinear upsampling
    ones = jnp.ones((1, 1, D, H, W), jnp.float32)
    up1 = jax.block_until_ready(upsample_trilinear(ones, 2))
    assert jnp.allclose(up1, 1.0, atol=1e-6)

    print("KERNEL_OK")
</pallas_src>

<mosaic_0001>
module attributes {stable_mosaic.version = 11 : i64} {
  func.func @kernel(%arg0: i32, %arg1: memref<2x8x8x8xf32, #tpu.memory_space<vmem>>, %arg2: memref<8x16xf32, #tpu.memory_space<vmem>>, %arg3: memref<2x16x16x16xf32, #tpu.memory_space<vmem>>, %arg4: memref<2x8x8x16xf32, #tpu.memory_space<vmem>>, %arg5: memref<2x8x16x16xf32, #tpu.memory_space<vmem>>) attributes {dimension_semantics = [#tpu.dimension_semantics<parallel>], iteration_bounds = array<i64: 4>, scalar_prefetch = 0 : i64, scratch_operands = 2 : i64, tpu.core_type = #tpu.core_type<tc>, window_params = [{transform_indices = @transform_0, window_bounds = array<i64: 2, 8, 8, 8>}, {pipeline_mode = #tpu.pipeline_mode<synchronous>, transform_indices = @transform_1, window_bounds = array<i64: 8, 16>}, {transform_indices = @transform_2, window_bounds = array<i64: 2, 16, 16, 16>}]} {
    %c0 = arith.constant 0 : index
    %c0_0 = arith.constant 0 : index
    %c0_1 = arith.constant 0 : index
    %c0_2 = arith.constant 0 : index
    %0 = vector.load %arg1[%c0, %c0_0, %c0_1, %c0_2] : memref<2x8x8x8xf32, #tpu.memory_space<vmem>>, vector<2x8x8x8xf32>
    %1 = vector.shape_cast %0 : vector<2x8x8x8xf32> to vector<128x8xf32>
    %c0_3 = arith.constant 0 : index
    %c0_4 = arith.constant 0 : index
    %2 = vector.load %arg2[%c0_3, %c0_4] : memref<8x16xf32, #tpu.memory_space<vmem>>, vector<8x16xf32>
    %cst = arith.constant dense<0.000000e+00> : vector<128x16xf32>
    %3 = tpu.matmul %1, %2, %cst {dimension_numbers = #tpu.dot_dimension_numbers<[1], [0], [0], [1], [0, 0, 1, 1], [], []>} : vector<128x8xf32>, vector<8x16xf32>, vector<128x16xf32> -> vector<128x16xf32>
    %4 = vector.shape_cast %3 : vector<128x16xf32> to vector<2x8x8x16xf32>
    %c0_5 = arith.constant 0 : index
    %c0_6 = arith.constant 0 : index
    %c0_7 = arith.constant 0 : index
    %c0_8 = arith.constant 0 : index
    %5 = vector.load %arg4[%c0_5, %c0_6, %c0_7, %c0_8] : memref<2x8x8x16xf32, #tpu.memory_space<vmem>>, vector<2x8x8x16xf32>
    tpu.vector_store %arg4[%c0_5, %c0_6, %c0_7, %c0_8], %4 {strides = array<i32>} : memref<2x8x8x16xf32, #tpu.memory_space<vmem>>, vector<2x8x8x16xf32>,
    %c0_9 = arith.constant 0 : index
    %c0_10 = arith.constant 0 : index
    %c0_11 = arith.constant 0 : index
    %c0_12 = arith.constant 0 : index
    %6 = vector.load %arg4[%c0_9, %c0_10, %c0_11, %c0_12] : memref<2x8x8x16xf32, #tpu.memory_space<vmem>>, vector<2x8x1x16xf32>
    %7 = vector.shape_cast %6 : vector<2x8x1x16xf32> to vector<2x8x16xf32>
    %c0_13 = arith.constant 0 : index
    %c0_14 = arith.constant 0 : index
    %c0_15 = arith.constant 0 : index
    %c0_16 = arith.constant 0 : index
    %8 = vector.load %arg5[%c0_13, %c0_14, %c0_15, %c0_16] : memref<2x8x16x16xf32, #tpu.memory_space<vmem>>, vector<2x8x1x16xf32>
    %9 = vector.shape_cast %8 : vector<2x8x1x16xf32> to vector<2x8x16xf32>
    %10 = vector.shape_cast %7 : vector<2x8x16xf32> to vector<2x8x1x16xf32>
    tpu.vector_store %arg5[%c0_13, %c0_14, %c0_15, %c0_16], %10 {strides = array<i32>} : memref<2x8x16x16xf32, #tpu.memory_space<vmem>>, vector<2x8x1x16xf32>,
    %c0_17 = arith.constant 0 : index
    %c0_18 = arith.constant 0 : index
    %c0_19 = arith.constant 0 : index
    %c0_20 = arith.constant 0 : index
    %11 = vector.load %arg4[%c0_17, %c0_18, %c0_19, %c0_20] : memref<2x8x8x16xf32, #tpu.memory_space<vmem>>, vector<2x8x1x16xf32>
    %12 = vector.shape_cast %11 : vector<2x8x1x16xf32> to vector<2x8x16xf32>
    %cst_21 = arith.constant 7.500000e-01 : f32
    %13 = vector.broadcast %cst_21 : f32 to vector<2x8x16xf32>
    %14 = arith.mulf %13, %12 : vector<2x8x16xf32>
    %c0_22 = arith.constant 0 : index
    %c0_23 = arith.constant 0 : index
    %c1 = arith.constant 1 : index
    %c0_24 = arith.constant 0 : index
    %15 = vector.load %arg4[%c0_22, %c0_23, %c1, %c0_24] : memref<2x8x8x16xf32, #tpu.memory_space<vmem>>, vector<2x8x1x16xf32>
    %16 = vector.shape_cast %15 : vector<2x8x1x16xf32> to vector<2x8x16xf32>
    %cst_25 = arith.constant 2.500000e-01 : f32
    %17 = vector.broadcast %cst_25 : f32 to vector<2x8x16xf32>
    %18 = arith.mulf %17, %16 : vector<2x8x16xf32>
    %19 = arith.addf %14, %18 : vector<2x8x16xf32>
    %c0_26 = arith.constant 0 : index
    %c0_27 = arith.constant 0 : index
    %c1_28 = arith.constant 1 : index
    %c0_29 = arith.constant 0 : index
    %20 = vector.load %arg5[%c0_26, %c0_27, %c1_28, %c0_29] : memref<2x8x16x16xf32, #tpu.memory_space<vmem>>, vector<2x8x1x16xf32>
    %21 = vector.shape_cast %20 : vector<2x8x1x16xf32> to vector<2x8x16xf32>
    %22 = vector.shape_cast %19 : vector<2x8x16xf32> to vector<2x8x1x16xf32>
    tpu.vector_store %arg5[%c0_26, %c0_27, %c1_28, %c0_29], %22 {strides = array<i32>} : memref<2x8x16x16xf32, #tpu.memory_space<vmem>>, vector<2x8x1x16xf32>,
    %c0_30 = arith.constant 0 : index
    %c0_31 = arith.constant 0 : index
    %c0_32 = arith.constant 0 : index
    %c0_33 = arith.constant 0 : index
    %23 = vector.load %arg4[%c0_30, %c0_31, %c0_32, %c0_33] : memref<2x8x8x16xf32, #tpu.memory_space<vmem>>, vector<2x8x1x16xf32>
    %24 = vector.shape_cast %23 : vector<2x8x1x16xf32> to vector<2x8x16xf32>
    %cst_34 = arith.constant 2.500000e-01 : f32
    %25 = vector.broadcast %cst_34 : f32 to vector<2x8x16xf32>
    %26 = arith.mulf %25, %24 : vector<2x8x16xf32>
    %c0_35 = arith.constant 0 : index
    %c0_36 = arith.constant 0 : index
    %c1_37 = arith.constant 1 : index
    %c0_38 = arith.constant 0 : index
    %27 = vector.load %arg4[%c0_35, %c0_36, %c1_37, %c0_38] : memref<2x8x8x16xf32, #tpu.memory_space<vmem>>, vector<2x8x1x16xf32>
    %28 = vector.shape_cast %27 : vector<2x8x1x16xf32> to vector<2x8x16xf32>
    %cst_39 = arith.constant 7.500000e-01 : f32
    %29 = vector.broadcast %cst_39 : f32 to vector<2x8x16xf32>
    %30 = arith.mulf %29, %28 : vector<2x8x16xf32>
    %31 = arith.addf %26, %30 : vector<2x8x16xf32>
    %c0_40 = arith.constant 0 : index
    %c0_41 = arith.constant 0 : index
    %c2 = arith.constant 2 : index
    %c0_42 = arith.constant 0 : index
    %32 = vector.load %arg5[%c0_40, %c0_41, %c2, %c0_42] : memref<2x8x16x16xf32, #tpu.memory_space<vmem>>, vector<2x8x1x16xf32>
    %33 = vector.shape_cast %32 : vector<2x8x1x16xf32> to vector<2x8x16xf32>
    %34 = vector.shape_cast %31 : vector<2x8x16xf32> to vector<2x8x1x16xf32>
    tpu.vector_store %arg5[%c0_40, %c0_41, %c2, %c0_42], %34 {strides = array<i32>} : memref<2x8x16x16xf32, #tpu.memory_space<vmem>>, vector<2x8x1x16xf32>,
    %c0_43 = arith.constant 0 : index
    %c0_44 = arith.constant 0 : index
    %c1_45 = arith.constant 1 : index
    %c0_46 = arith.constant 0 : index
    %35 = vector.load %arg4[%c0_43, %c0_44, %c1_45, %c0_46] : memref<2x8x8x16xf32, #tpu.memory_space<vmem>>, vector<2x8x1x16xf32>
    %36 = vector.shape_cast %35 : vector<2x8x1x16xf32> to vector<2x8x16xf32>
    %cst_47 = arith.constant 7.500000e-01 : f32
    %37 = vector.broadcast %cst_47 : f32 to vector<2x8x16xf32>
    %38 = arith.mulf %37, %36 : vector<2x8x16xf32>
    %c0_48 = arith.constant 0 : index
    %c0_49 = arith.constant 0 : index
    %c2_50 = arith.constant 2 : index
    %c0_51 = arith.constant 0 : index
    %39 = vector.load %arg4[%c0_48, %c0_49, %c2_50, %c0_51] : memref<2x8x8x16xf32, #tpu.memory_space<vmem>>, vector<2x8x1x16xf32>
    %40 = vector.shape_cast %39 : vector<2x8x1x16xf32> to vector<2x8x16xf32>
    %cst_52 = arith.constant 2.500000e-01 : f32
    %41 = vector.broadcast %cst_52 : f32 to vector<2x8x16xf32>
    %42 = arith.mulf %41, %40 : vector<2x8x16xf32>
    %43 = arith.addf %38, %42 : vector<2x8x16xf32>
    %c0_53 = arith.constant 0 : index
    %c0_54 = arith.constant 0 : index
    %c3 = arith.constant 3 : index
    %c0_55 = arith.constant 0 : index
    %44 = vector.load %arg5[%c0_53, %c0_54, %c3, %c0_55] : memref<2x8x16x16xf32, #tpu.memory_space<vmem>>, vector<2x8x1x16xf32>
    %45 = vector.shape_cast %44 : vector<2x8x1x16xf32> to vector<2x8x16xf32>
    %46 = vector.shape_cast %43 : vector<2x8x16xf32> to vector<2x8x1x16xf32>
    tpu.vector_store %arg5[%c0_53, %c0_54, %c3, %c0_55], %46 {strides = array<i32>} : memref<2x8x16x16xf32, #tpu.memory_space<vmem>>, vector<2x8x1x16xf32>,
    %c0_56 = arith.constant 0 : index
    %c0_57 = arith.constant 0 : index
    %c1_58 = arith.constant 1 : index
    %c0_59 = arith.constant 0 : index
    %47 = vector.load %arg4[%c0_56, %c0_57, %c1_58, %c0_59] : memref<2x8x8x16xf32, #tpu.memory_space<vmem>>, vector<2x8x1x16xf32>
    %48 = vector.shape_cast %47 : vector<2x8x1x16xf32> to vector<2x8x16xf32>
    %cst_60 = arith.constant 2.500000e-01 : f32
    %49 = vector.broadcast %cst_60 : f32 to vector<2x8x16xf32>
    %50 = arith.mulf %49, %48 : vector<2x8x16xf32>
    %c0_61 = arith.constant 0 : index
    %c0_62 = arith.constant 0 : index
    %c2_63 = arith.constant 2 : index
    %c0_64 = arith.constant 0 : index
    %51 = vector.load %arg4[%c0_61, %c0_62, %c2_63, %c0_64] : memref<2x8x8x16xf32, #tpu.memory_space<vmem>>, vector<2x8x1x16xf32>
    %52 = vector.shape_cast %51 : vector<2x8x1x16xf32> to vector<2x8x16xf32>
    %cst_65 = arith.constant 7.500000e-01 : f32
    %53 = vector.broadcast %cst_65 : f32 to vector<2x8x16xf32>
    %54 = arith.mulf %53, %52 : vector<2x8x16xf32>
    %55 = arith.addf %50, %54 : vector<2x8x16xf32>
    %c0_66 = arith.constant 0 : index
    %c0_67 = arith.constant 0 : index
    %c4 = arith.constant 4 : index
    %c0_68 = arith.constant 0 : index
    %56 = vector.load %arg5[%c0_66, %c0_67, %c4, %c0_68] : memref<2x8x16x16xf32, #tpu.memory_space<vmem>>, vector<2x8x1x16xf32>
    %57 = vector.shape_cast %56 : vector<2x8x1x16xf32> to vector<2x8x16xf32>
    %58 = vector.shape_cast %55 : vector<2x8x16xf32> to vector<2x8x1x16xf32>
    tpu.vector_store %arg5[%c0_66, %c0_67, %c4, %c0_68], %58 {strides = array<i32>} : memref<2x8x16x16xf32, #tpu.memory_space<vmem>>, vector<2x8x1x16xf32>,
    %c0_69 = arith.constant 0 : index
    %c0_70 = arith.constant 0 : index
    %c2_71 = arith.constant 2 : index
    %c0_72 = arith.constant 0 : index
    %59 = vector.load %arg4[%c0_69, %c0_70, %c2_71, %c0_72] : memref<2x8x8x16xf32, #tpu.memory_space<vmem>>, vector<2x8x1x16xf32>
    %60 = vector.shape_cast %59 : vector<2x8x1x16xf32> to vector<2x8x16xf32>
    %cst_73 = arith.constant 7.500000e-01 : f32
    %61 = vector.broadcast %cst_73 : f32 to vector<2x8x16xf32>
    %62 = arith.mulf %61, %60 : vector<2x8x16xf32>
    %c0_74 = arith.constant 0 : index
    %c0_75 = arith.constant 0 : index
    %c3_76 = arith.constant 3 : index
    %c0_77 = arith.constant 0 : index
    %63 = vector.load %arg4[%c0_74, %c0_75, %c3_76, %c0_77] : memref<2x8x8x16xf32, #tpu.memory_space<vmem>>, vector<2x8x1x16xf32>
    %64 = vector.shape_cast %63 : vector<2x8x1x16xf32> to vector<2x8x16xf32>
    %cst_78 = arith.constant 2.500000e-01 : f32
    %65 = vector.broadcast %cst_78 : f32 to vector<2x8x16xf32>
    %66 = arith.mulf %65, %64 : vector<2x8x16xf32>
    %67 = arith.addf %62, %66 : vector<2x8x16xf32>
    %c0_79 = arith.constant 0 : index
    %c0_80 = arith.constant 0 : index
    %c5 = arith.constant 5 : index
    %c0_81 = arith.constant 0 : index
    %68 = vector.load %arg5[%c0_79, %c0_80, %c5, %c0_81] : memref<2x8x16x16xf32, #tpu.memory_space<vmem>>, vector<2x8x1x16xf32>
    %69 = vector.shape_cast %68 : vector<2x8x1x16xf32> to vector<2x8x16xf32>
    %70 = vector.shape_cast %67 : vector<2x8x16xf32> to vector<2x8x1x16xf32>
    tpu.vector_store %arg5[%c0_79, %c0_80, %c5, %c0_81], %70 {strides = array<i32>} : memref<2x8x16x16xf32, #tpu.memory_space<vmem>>, vector<2x8x1x16xf32>,
    %c0_82 = arith.constant 0 : index
    %c0_83 = arith.constant 0 : index
    %c2_84 = arith.constant 2 : index
    %c0_85 = arith.constant 0 : index
    %71 = vector.load %arg4[%c0_82, %c0_83, %c2_84, %c0_85] : memref<2x8x8x16xf32, #tpu.memory_space<vmem>>, vector<2x8x1x16xf32>
    %72 = vector.shape_cast %71 : vector<2x8x1x16xf32> to vector<2x8x16xf32>
    %cst_86 = arith.constant 2.500000e-01 : f32
    %73 = vector.broadcast %cst_86 : f32 to vector<2x8x16xf32>
    %74 = arith.mulf %73, %72 : vector<2x8x16xf32>
    %c0_87 = arith.constant 0 : index
    %c0_88 = arith.constant 0 : index
    %c3_89 = arith.constant 3 : index
    %c0_90 = arith.constant 0 : index
    %75 = vector.load %arg4[%c0_87, %c0_88, %c3_89, %c0_90] : memref<2x8x8x16xf32, #tpu.memory_space<vmem>>, vector<2x8x1x16xf32>
    %76 = vector.shape_cast %75 : vector<2x8x1x16xf32> to vector<2x8x16xf32>
    %cst_91 = arith.constant 7.500000e-01 : f32
    %77 = vector.broadcast %cst_91 : f32 to vector<2x8x16xf32>
    %78 = arith.mulf %77, %76 : vector<2x8x16xf32>
    %79 = arith.addf %74, %78 : vector<2x8x16xf32>
    %c0_92 = arith.constant 0 : index
    %c0_93 = arith.constant 0 : index
    %c6 = arith.constant 6 : index
    %c0_94 = arith.constant 0 : index
    %80 = vector.load %arg5[%c0_92, %c0_93, %c6, %c0_94] : memref<2x8x16x16xf32, #tpu.memory_space<vmem>>, vector<2x8x1x16xf32>
    %81 = vector.shape_cast %80 : vector<2x8x1x16xf32> to vector<2x8x16xf32>
    %82 = vector.shape_cast %79 : vector<2x8x16xf32> to vector<2x8x1x16xf32>
    tpu.vector_store %arg5[%c0_92, %c0_93, %c6, %c0_94], %82 {strides = array<i32>} : memref<2x8x16x16xf32, #tpu.memory_space<vmem>>, vector<2x8x1x16xf32>,
    %c0_95 = arith.constant 0 : index
    %c0_96 = arith.constant 0 : index
    %c3_97 = arith.constant 3 : index
    %c0_98 = arith.constant 0 : index
    %83 = vector.load %arg4[%c0_95, %c0_96, %c3_97, %c0_98] : memref<2x8x8x16xf32, #tpu.memory_space<vmem>>, vector<2x8x1x16xf32>
    %84 = vector.shape_cast %83 : vector<2x8x1x16xf32> to vector<2x8x16xf32>
    %cst_99 = arith.constant 7.500000e-01 : f32
    %85 = vector.broadcast %cst_99 : f32 to vector<2x8x16xf32>
    %86 = arith.mulf %85, %84 : vector<2x8x16xf32>
    %c0_100 = arith.constant 0 : index
    %c0_101 = arith.constant 0 : index
    %c4_102 = arith.constant 4 : index
    %c0_103 = arith.constant 0 : index
    %87 = vector.load %arg4[%c0_100, %c0_101, %c4_102, %c0_103] : memref<2x8x8x16xf32, #tpu.memory_space<vmem>>, vector<2x8x1x16xf32>
    %88 = vector.shape_cast %87 : vector<2x8x1x16xf32> to vector<2x8x16xf32>
    %cst_104 = arith.constant 2.500000e-01 : f32
    %89 = vector.broadcast %cst_104 : f32 to vector<2x8x16xf32>
    %90 = arith.mulf %89, %88 : vector<2x8x16xf32>
    %91 = arith.addf %86, %90 : vector<2x8x16xf32>
    %c0_105 = arith.constant 0 : index
    %c0_106 = arith.constant 0 : index
    %c7 = arith.constant 7 : index
    %c0_107 = arith.constant 0 : index
    %92 = vector.load %arg5[%c0_105, %c0_106, %c7, %c0_107] : memref<2x8x16x16xf32, #tpu.memory_space<vmem>>, vector<2x8x1x16xf32>
    %93 = vector.shape_cast %92 : vector<2x8x1x16xf32> to vector<2x8x16xf32>
    %94 = vector.shape_cast %91 : vector<2x8x16xf32> to vector<2x8x1x16xf32>
    tpu.vector_store %arg5[%c0_105, %c0_106, %c7, %c0_107], %94 {strides = array<i32>} : memref<2x8x16x16xf32, #tpu.memory_space<vmem>>, vector<2x8x1x16xf32>,
    %c0_108 = arith.constant 0 : index
    %c0_109 = arith.constant 0 : index
    %c3_110 = arith.constant 3 : index
    %c0_111 = arith.constant 0 : index
    %95 = vector.load %arg4[%c0_108, %c0_109, %c3_110, %c0_111] : memref<2x8x8x16xf32, #tpu.memory_space<vmem>>, vector<2x8x1x16xf32>
    %96 = vector.shape_cast %95 : vector<2x8x1x16xf32> to vector<2x8x16xf32>
    %cst_112 = arith.constant 2.500000e-01 : f32
    %97 = vector.broadcast %cst_112 : f32 to vector<2x8x16xf32>
    %98 = arith.mulf %97, %96 : vector<2x8x16xf32>
    %c0_113 = arith.constant 0 : index
    %c0_114 = arith.constant 0 : index
    %c4_115 = arith.constant 4 : index
    %c0_116 = arith.constant 0 : index
    %99 = vector.load %arg4[%c0_113, %c0_114, %c4_115, %c0_116] : memref<2x8x8x16xf32, #tpu.memory_space<vmem>>, vector<2x8x1x16xf32>
    %100 = vector.shape_cast %99 : vector<2x8x1x16xf32> to vector<2x8x16xf32>
    %cst_117 = arith.constant 7.500000e-01 : f32
    %101 = vector.broadcast %cst_117 : f32 to vector<2x8x16xf32>
    %102 = arith.mulf %101, %100 : vector<2x8x16xf32>
    %103 = arith.addf %98, %102 : vector<2x8x16xf32>
    %c0_118 = arith.constant 0 : index
    %c0_119 = arith.constant 0 : index
    %c8 = arith.constant 8 : index
    %c0_120 = arith.constant 0 : index
    %104 = vector.load %arg5[%c0_118, %c0_119, %c8, %c0_120] : memref<2x8x16x16xf32, #tpu.memory_space<vmem>>, vector<2x8x1x16xf32>
    %105 = vector.shape_cast %104 : vector<2x8x1x16xf32> to vector<2x8x16xf32>
    %106 = vector.shape_cast %103 : vector<2x8x16xf32> to vector<2x8x1x16xf32>
    tpu.vector_store %arg5[%c0_118, %c0_119, %c8, %c0_120], %106 {strides = array<i32>} : memref<2x8x16x16xf32, #tpu.memory_space<vmem>>, vector<2x8x1x16xf32>,
    %c0_121 = arith.constant 0 : index
    %c0_122 = arith.constant 0 : index
    %c4_123 = arith.constant 4 : index
    %c0_124 = arith.constant 0 : index
    %107 = vector.load %arg4[%c0_121, %c0_122, %c4_123, %c0_124] : memref<2x8x8x16xf32, #tpu.memory_space<vmem>>, vector<2x8x1x16xf32>
    %108 = vector.shape_cast %107 : vector<2x8x1x16xf32> to vector<2x8x16xf32>
    %cst_125 = arith.constant 7.500000e-01 : f32
    %109 = vector.broadcast %cst_125 : f32 to vector<2x8x16xf32>
    %110 = arith.mulf %109, %108 : vector<2x8x16xf32>
    %c0_126 = arith.constant 0 : index
    %c0_127 = arith.constant 0 : index
    %c5_128 = arith.constant 5 : index
    %c0_129 = arith.constant 0 : index
    %111 = vector.load %arg4[%c0_126, %c0_127, %c5_128, %c0_129] : memref<2x8x8x16xf32, #tpu.memory_space<vmem>>, vector<2x8x1x16xf32>
    %112 = vector.shape_cast %111 : vector<2x8x1x16xf32> to vector<2x8x16xf32>
    %cst_130 = arith.constant 2.500000e-01 : f32
    %113 = vector.broadcast %cst_130 : f32 to vector<2x8x16xf32>
    %114 = arith.mulf %113, %112 : vector<2x8x16xf32>
    %115 = arith.addf %110, %114 : vector<2x8x16xf32>
    %c0_131 = arith.constant 0 : index
    %c0_132 = arith.constant 0 : index
    %c9 = arith.constant 9 : index
    %c0_133 = arith.constant 0 : index
    %116 = vector.load %arg5[%c0_131, %c0_132, %c9, %c0_133] : memref<2x8x16x16xf32, #tpu.memory_space<vmem>>, vector<2x8x1x16xf32>
    %117 = vector.shape_cast %116 : vector<2x8x1x16xf32> to vector<2x8x16xf32>
    %118 = vector.shape_cast %115 : vector<2x8x16xf32> to vector<2x8x1x16xf32>
    tpu.vector_store %arg5[%c0_131, %c0_132, %c9, %c0_133], %118 {strides = array<i32>} : memref<2x8x16x16xf32, #tpu.memory_space<vmem>>, vector<2x8x1x16xf32>,
    %c0_134 = arith.constant 0 : index
    %c0_135 = arith.constant 0 : index
    %c4_136 = arith.constant 4 : index
    %c0_137 = arith.constant 0 : index
    %119 = vector.load %arg4[%c0_134, %c0_135, %c4_136, %c0_137] : memref<2x8x8x16xf32, #tpu.memory_space<vmem>>, vector<2x8x1x16xf32>
    %120 = vector.shape_cast %119 : vector<2x8x1x16xf32> to vector<2x8x16xf32>
    %cst_138 = arith.constant 2.500000e-01 : f32
    %121 = vector.broadcast %cst_138 : f32 to vector<2x8x16xf32>
    %122 = arith.mulf %121, %120 : vector<2x8x16xf32>
    %c0_139 = arith.constant 0 : index
    %c0_140 = arith.constant 0 : index
    %c5_141 = arith.constant 5 : index
    %c0_142 = arith.constant 0 : index
    %123 = vector.load %arg4[%c0_139, %c0_140, %c5_141, %c0_142] : memref<2x8x8x16xf32, #tpu.memory_space<vmem>>, vector<2x8x1x16xf32>
    %124 = vector.shape_cast %123 : vector<2x8x1x16xf32> to vector<2x8x16xf32>
    %cst_143 = arith.constant 7.500000e-01 : f32
    %125 = vector.broadcast %cst_143 : f32 to vector<2x8x16xf32>
    %126 = arith.mulf %125, %124 : vector<2x8x16xf32>
    %127 = arith.addf %122, %126 : vector<2x8x16xf32>
    %c0_144 = arith.constant 0 : index
    %c0_145 = arith.constant 0 : index
    %c10 = arith.constant 10 : index
    %c0_146 = arith.constant 0 : index
    %128 = vector.load %arg5[%c0_144, %c0_145, %c10, %c0_146] : memref<2x8x16x16xf32, #tpu.memory_space<vmem>>, vector<2x8x1x16xf32>
    %129 = vector.shape_cast %128 : vector<2x8x1x16xf32> to vector<2x8x16xf32>
    %130 = vector.shape_cast %127 : vector<2x8x16xf32> to vector<2x8x1x16xf32>
    tpu.vector_store %arg5[%c0_144, %c0_145, %c10, %c0_146], %130 {strides = array<i32>} : memref<2x8x16x16xf32, #tpu.memory_space<vmem>>, vector<2x8x1x16xf32>,
    %c0_147 = arith.constant 0 : index
    %c0_148 = arith.constant 0 : index
    %c5_149 = arith.constant 5 : index
    %c0_150 = arith.constant 0 : index
    %131 = vector.load %arg4[%c0_147, %c0_148, %c5_149, %c0_150] : memref<2x8x8x16xf32, #tpu.memory_space<vmem>>, vector<2x8x1x16xf32>
    %132 = vector.shape_cast %131 : vector<2x8x1x16xf32> to vector<2x8x16xf32>
    %cst_151 = arith.constant 7.500000e-01 : f32
    %133 = vector.broadcast %cst_151 : f32 to vector<2x8x16xf32>
    %134 = arith.mulf %133, %132 : vector<2x8x16xf32>
    %c0_152 = arith.constant 0 : index
    %c0_153 = arith.constant 0 : index
    %c6_154 = arith.constant 6 : index
    %c0_155 = arith.constant 0 : index
    %135 = vector.load %arg4[%c0_152, %c0_153, %c6_154, %c0_155] : memref<2x8x8x16xf32, #tpu.memory_space<vmem>>, vector<2x8x1x16xf32>
    %136 = vector.shape_cast %135 : vector<2x8x1x16xf32> to vector<2x8x16xf32>
    %cst_156 = arith.constant 2.500000e-01 : f32
    %137 = vector.broadcast %cst_156 : f32 to vector<2x8x16xf32>
    %138 = arith.mulf %137, %136 : vector<2x8x16xf32>
    %139 = arith.addf %134, %138 : vector<2x8x16xf32>
    %c0_157 = arith.constant 0 : index
    %c0_158 = arith.constant 0 : index
    %c11 = arith.constant 11 : index
    %c0_159 = arith.constant 0 : index
    %140 = vector.load %arg5[%c0_157, %c0_158, %c11, %c0_159] : memref<2x8x16x16xf32, #tpu.memory_space<vmem>>, vector<2x8x1x16xf32>
    %141 = vector.shape_cast %140 : vector<2x8x1x16xf32> to vector<2x8x16xf32>
    %142 = vector.shape_cast %139 : vector<2x8x16xf32> to vector<2x8x1x16xf32>
    tpu.vector_store %arg5[%c0_157, %c0_158, %c11, %c0_159], %142 {strides = array<i32>} : memref<2x8x16x16xf32, #tpu.memory_space<vmem>>, vector<2x8x1x16xf32>,
    %c0_160 = arith.constant 0 : index
    %c0_161 = arith.constant 0 : index
    %c5_162 = arith.constant 5 : index
    %c0_163 = arith.constant 0 : index
    %143 = vector.load %arg4[%c0_160, %c0_161, %c5_162, %c0_163] : memref<2x8x8x16xf32, #tpu.memory_space<vmem>>, vector<2x8x1x16xf32>
    %144 = vector.shape_cast %143 : vector<2x8x1x16xf32> to vector<2x8x16xf32>
    %cst_164 = arith.constant 2.500000e-01 : f32
    %145 = vector.broadcast %cst_164 : f32 to vector<2x8x16xf32>
    %146 = arith.mulf %145, %144 : vector<2x8x16xf32>
    %c0_165 = arith.constant 0 : index
    %c0_166 = arith.constant 0 : index
    %c6_167 = arith.constant 6 : index
    %c0_168 = arith.constant 0 : index
    %147 = vector.load %arg4[%c0_165, %c0_166, %c6_167, %c0_168] : memref<2x8x8x16xf32, #tpu.memory_space<vmem>>, vector<2x8x1x16xf32>
    %148 = vector.shape_cast %147 : vector<2x8x1x16xf32> to vector<2x8x16xf32>
    %cst_169 = arith.constant 7.500000e-01 : f32
    %149 = vector.broadcast %cst_169 : f32 to vector<2x8x16xf32>
    %150 = arith.mulf %149, %148 : vector<2x8x16xf32>
    %151 = arith.addf %146, %150 : vector<2x8x16xf32>
    %c0_170 = arith.constant 0 : index
    %c0_171 = arith.constant 0 : index
    %c12 = arith.constant 12 : index
    %c0_172 = arith.constant 0 : index
    %152 = vector.load %arg5[%c0_170, %c0_171, %c12, %c0_172] : memref<2x8x16x16xf32, #tpu.memory_space<vmem>>, vector<2x8x1x16xf32>
    %153 = vector.shape_cast %152 : vector<2x8x1x16xf32> to vector<2x8x16xf32>
    %154 = vector.shape_cast %151 : vector<2x8x16xf32> to vector<2x8x1x16xf32>
    tpu.vector_store %arg5[%c0_170, %c0_171, %c12, %c0_172], %154 {strides = array<i32>} : memref<2x8x16x16xf32, #tpu.memory_space<vmem>>, vector<2x8x1x16xf32>,
    %c0_173 = arith.constant 0 : index
    %c0_174 = arith.constant 0 : index
    %c6_175 = arith.constant 6 : index
    %c0_176 = arith.constant 0 : index
    %155 = vector.load %arg4[%c0_173, %c0_174, %c6_175, %c0_176] : memref<2x8x8x16xf32, #tpu.memory_space<vmem>>, vector<2x8x1x16xf32>
    %156 = vector.shape_cast %155 : vector<2x8x1x16xf32> to vector<2x8x16xf32>
    %cst_177 = arith.constant 7.500000e-01 : f32
    %157 = vector.broadcast %cst_177 : f32 to vector<2x8x16xf32>
    %158 = arith.mulf %157, %156 : vector<2x8x16xf32>
    %c0_178 = arith.constant 0 : index
    %c0_179 = arith.constant 0 : index
    %c7_180 = arith.constant 7 : index
    %c0_181 = arith.constant 0 : index
    %159 = vector.load %arg4[%c0_178, %c0_179, %c7_180, %c0_181] : memref<2x8x8x16xf32, #tpu.memory_space<vmem>>, vector<2x8x1x16xf32>
    %160 = vector.shape_cast %159 : vector<2x8x1x16xf32> to vector<2x8x16xf32>
    %cst_182 = arith.constant 2.500000e-01 : f32
    %161 = vector.broadcast %cst_182 : f32 to vector<2x8x16xf32>
    %162 = arith.mulf %161, %160 : vector<2x8x16xf32>
    %163 = arith.addf %158, %162 : vector<2x8x16xf32>
    %c0_183 = arith.constant 0 : index
    %c0_184 = arith.constant 0 : index
    %c13 = arith.constant 13 : index
    %c0_185 = arith.constant 0 : index
    %164 = vector.load %arg5[%c0_183, %c0_184, %c13, %c0_185] : memref<2x8x16x16xf32, #tpu.memory_space<vmem>>, vector<2x8x1x16xf32>
    %165 = vector.shape_cast %164 : vector<2x8x1x16xf32> to vector<2x8x16xf32>
    %166 = vector.shape_cast %163 : vector<2x8x16xf32> to vector<2x8x1x16xf32>
    tpu.vector_store %arg5[%c0_183, %c0_184, %c13, %c0_185], %166 {strides = array<i32>} : memref<2x8x16x16xf32, #tpu.memory_space<vmem>>, vector<2x8x1x16xf32>,
    %c0_186 = arith.constant 0 : index
    %c0_187 = arith.constant 0 : index
    %c6_188 = arith.constant 6 : index
    %c0_189 = arith.constant 0 : index
    %167 = vector.load %arg4[%c0_186, %c0_187, %c6_188, %c0_189] : memref<2x8x8x16xf32, #tpu.memory_space<vmem>>, vector<2x8x1x16xf32>
    %168 = vector.shape_cast %167 : vector<2x8x1x16xf32> to vector<2x8x16xf32>
    %cst_190 = arith.constant 2.500000e-01 : f32
    %169 = vector.broadcast %cst_190 : f32 to vector<2x8x16xf32>
    %170 = arith.mulf %169, %168 : vector<2x8x16xf32>
    %c0_191 = arith.constant 0 : index
    %c0_192 = arith.constant 0 : index
    %c7_193 = arith.constant 7 : index
    %c0_194 = arith.constant 0 : index
    %171 = vector.load %arg4[%c0_191, %c0_192, %c7_193, %c0_194] : memref<2x8x8x16xf32, #tpu.memory_space<vmem>>, vector<2x8x1x16xf32>
    %172 = vector.shape_cast %171 : vector<2x8x1x16xf32> to vector<2x8x16xf32>
    %cst_195 = arith.constant 7.500000e-01 : f32
    %173 = vector.broadcast %cst_195 : f32 to vector<2x8x16xf32>
    %174 = arith.mulf %173, %172 : vector<2x8x16xf32>
    %175 = arith.addf %170, %174 : vector<2x8x16xf32>
    %c0_196 = arith.constant 0 : index
    %c0_197 = arith.constant 0 : index
    %c14 = arith.constant 14 : index
    %c0_198 = arith.constant 0 : index
    %176 = vector.load %arg5[%c0_196, %c0_197, %c14, %c0_198] : memref<2x8x16x16xf32, #tpu.memory_space<vmem>>, vector<2x8x1x16xf32>
    %177 = vector.shape_cast %176 : vector<2x8x1x16xf32> to vector<2x8x16xf32>
    %178 = vector.shape_cast %175 : vector<2x8x16xf32> to vector<2x8x1x16xf32>
    tpu.vector_store %arg5[%c0_196, %c0_197, %c14, %c0_198], %178 {strides = array<i32>} : memref<2x8x16x16xf32, #tpu.memory_space<vmem>>, vector<2x8x1x16xf32>,
    %c0_199 = arith.constant 0 : index
    %c0_200 = arith.constant 0 : index
    %c7_201 = arith.constant 7 : index
    %c0_202 = arith.constant 0 : index
    %179 = vector.load %arg4[%c0_199, %c0_200, %c7_201, %c0_202] : memref<2x8x8x16xf32, #tpu.memory_space<vmem>>, vector<2x8x1x16xf32>
    %180 = vector.shape_cast %179 : vector<2x8x1x16xf32> to vector<2x8x16xf32>
    %cst_203 = arith.constant 7.500000e-01 : f32
    %181 = vector.broadcast %cst_203 : f32 to vector<2x8x16xf32>
    %182 = arith.mulf %181, %180 : vector<2x8x16xf32>
    %c0_204 = arith.constant 0 : index
    %c0_205 = arith.constant 0 : index
    %c7_206 = arith.constant 7 : index
    %c0_207 = arith.constant 0 : index
    %183 = vector.load %arg4[%c0_204, %c0_205, %c7_206, %c0_207] : memref<2x8x8x16xf32, #tpu.memory_space<vmem>>, vector<2x8x1x16xf32>
    %184 = vector.shape_cast %183 : vector<2x8x1x16xf32> to vector<2x8x16xf32>
    %cst_208 = arith.constant 2.500000e-01 : f32
    %185 = vector.broadcast %cst_208 : f32 to vector<2x8x16xf32>
    %186 = arith.mulf %185, %184 : vector<2x8x16xf32>
    %187 = arith.addf %182, %186 : vector<2x8x16xf32>
    %c0_209 = arith.constant 0 : index
    %c0_210 = arith.constant 0 : index
    %c15 = arith.constant 15 : index
    %c0_211 = arith.constant 0 : index
    %188 = vector.load %arg5[%c0_209, %c0_210, %c15, %c0_211] : memref<2x8x16x16xf32, #tpu.memory_space<vmem>>, vector<2x8x1x16xf32>
    %189 = vector.shape_cast %188 : vector<2x8x1x16xf32> to vector<2x8x16xf32>
    %190 = vector.shape_cast %187 : vector<2x8x16xf32> to vector<2x8x1x16xf32>
    tpu.vector_store %arg5[%c0_209, %c0_210, %c15, %c0_211], %190 {strides = array<i32>} : memref<2x8x16x16xf32, #tpu.memory_space<vmem>>, vector<2x8x1x16xf32>,
    %c0_212 = arith.constant 0 : index
    %c0_213 = arith.constant 0 : index
    %c0_214 = arith.constant 0 : index
    %c0_215 = arith.constant 0 : index
    %191 = vector.load %arg5[%c0_212, %c0_213, %c0_214, %c0_215] : memref<2x8x16x16xf32, #tpu.memory_space<vmem>>, vector<2x1x16x16xf32>
    %192 = vector.shape_cast %191 : vector<2x1x16x16xf32> to vector<2x16x16xf32>
    %c0_216 = arith.constant 0 : index
    %c0_217 = arith.constant 0 : index
    %c0_218 = arith.constant 0 : index
    %c0_219 = arith.constant 0 : index
    %193 = vector.load %arg3[%c0_216, %c0_217, %c0_218, %c0_219] : memref<2x16x16x16xf32, #tpu.memory_space<vmem>>, vector<2x1x16x16xf32>
    %194 = vector.shape_cast %193 : vector<2x1x16x16xf32> to vector<2x16x16xf32>
    %195 = vector.shape_cast %192 : vector<2x16x16xf32> to vector<2x1x16x16xf32>
    tpu.vector_store %arg3[%c0_216, %c0_217, %c0_218, %c0_219], %195 {strides = array<i32>} : memref<2x16x16x16xf32, #tpu.memory_space<vmem>>, vector<2x1x16x16xf32>,
    %c0_220 = arith.constant 0 : index
    %c0_221 = arith.constant 0 : index
    %c0_222 = arith.constant 0 : index
    %c0_223 = arith.constant 0 : index
    %196 = vector.load %arg5[%c0_220, %c0_221, %c0_222, %c0_223] : memref<2x8x16x16xf32, #tpu.memory_space<vmem>>, vector<2x1x16x16xf32>
    %197 = vector.shape_cast %196 : vector<2x1x16x16xf32> to vector<2x16x16xf32>
    %cst_224 = arith.constant 7.500000e-01 : f32
    %198 = vector.broadcast %cst_224 : f32 to vector<2x16x16xf32>
    %199 = arith.mulf %198, %197 : vector<2x16x16xf32>
    %c0_225 = arith.constant 0 : index
    %c1_226 = arith.constant 1 : index
    %c0_227 = arith.constant 0 : index
    %c0_228 = arith.constant 0 : index
    %200 = vector.load %arg5[%c0_225, %c1_226, %c0_227, %c0_228] : memref<2x8x16x16xf32, #tpu.memory_space<vmem>>, vector<2x1x16x16xf32>
    %201 = vector.shape_cast %200 : vector<2x1x16x16xf32> to vector<2x16x16xf32>
    %cst_229 = arith.constant 2.500000e-01 : f32
    %202 = vector.broadcast %cst_229 : f32 to vector<2x16x16xf32>
    %203 = arith.mulf %202, %201 : vector<2x16x16xf32>
    %204 = arith.addf %199, %203 : vector<2x16x16xf32>
    %c0_230 = arith.constant 0 : index
    %c1_231 = arith.constant 1 : index
    %c0_232 = arith.constant 0 : index
    %c0_233 = arith.constant 0 : index
    %205 = vector.load %arg3[%c0_230, %c1_231, %c0_232, %c0_233] : memref<2x16x16x16xf32, #tpu.memory_space<vmem>>, vector<2x1x16x16xf32>
    %206 = vector.shape_cast %205 : vector<2x1x16x16xf32> to vector<2x16x16xf32>
    %207 = vector.shape_cast %204 : vector<2x16x16xf32> to vector<2x1x16x16xf32>
    tpu.vector_store %arg3[%c0_230, %c1_231, %c0_232, %c0_233], %207 {strides = array<i32>} : memref<2x16x16x16xf32, #tpu.memory_space<vmem>>, vector<2x1x16x16xf32>,
    %c0_234 = arith.constant 0 : index
    %c0_235 = arith.constant 0 : index
    %c0_236 = arith.constant 0 : index
    %c0_237 = arith.constant 0 : index
    %208 = vector.load %arg5[%c0_234, %c0_235, %c0_236, %c0_237] : memref<2x8x16x16xf32, #tpu.memory_space<vmem>>, vector<2x1x16x16xf32>
    %209 = vector.shape_cast %208 : vector<2x1x16x16xf32> to vector<2x16x16xf32>
    %cst_238 = arith.constant 2.500000e-01 : f32
    %210 = vector.broadcast %cst_238 : f32 to vector<2x16x16xf32>
    %211 = arith.mulf %210, %209 : vector<2x16x16xf32>
    %c0_239 = arith.constant 0 : index
    %c1_240 = arith.constant 1 : index
    %c0_241 = arith.constant 0 : index
    %c0_242 = arith.constant 0 : index
    %212 = vector.load %arg5[%c0_239, %c1_240, %c0_241, %c0_242] : memref<2x8x16x16xf32, #tpu.memory_space<vmem>>, vector<2x1x16x16xf32>
    %213 = vector.shape_cast %212 : vector<2x1x16x16xf32> to vector<2x16x16xf32>
    %cst_243 = arith.constant 7.500000e-01 : f32
    %214 = vector.broadcast %cst_243 : f32 to vector<2x16x16xf32>
    %215 = arith.mulf %214, %213 : vector<2x16x16xf32>
    %216 = arith.addf %211, %215 : vector<2x16x16xf32>
    %c0_244 = arith.constant 0 : index
    %c2_245 = arith.constant 2 : index
    %c0_246 = arith.constant 0 : index
    %c0_247 = arith.constant 0 : index
    %217 = vector.load %arg3[%c0_244, %c2_245, %c0_246, %c0_247] : memref<2x16x16x16xf32, #tpu.memory_space<vmem>>, vector<2x1x16x16xf32>
    %218 = vector.shape_cast %217 : vector<2x1x16x16xf32> to vector<2x16x16xf32>
    %219 = vector.shape_cast %216 : vector<2x16x16xf32> to vector<2x1x16x16xf32>
    tpu.vector_store %arg3[%c0_244, %c2_245, %c0_246, %c0_247], %219 {strides = array<i32>} : memref<2x16x16x16xf32, #tpu.memory_space<vmem>>, vector<2x1x16x16xf32>,
    %c0_248 = arith.constant 0 : index
    %c1_249 = arith.constant 1 : index
    %c0_250 = arith.constant 0 : index
    %c0_251 = arith.constant 0 : index
    %220 = vector.load %arg5[%c0_248, %c1_249, %c0_250, %c0_251] : memref<2x8x16x16xf32, #tpu.memory_space<vmem>>, vector<2x1x16x16xf32>
    %221 = vector.shape_cast %220 : vector<2x1x16x16xf32> to vector<2x16x16xf32>
    %cst_252 = arith.constant 7.500000e-01 : f32
    %222 = vector.broadcast %cst_252 : f32 to vector<2x16x16xf32>
    %223 = arith.mulf %222, %221 : vector<2x16x16xf32>
    %c0_253 = arith.constant 0 : index
    %c2_254 = arith.constant 2 : index
    %c0_255 = arith.constant 0 : index
    %c0_256 = arith.constant 0 : index
    %224 = vector.load %arg5[%c0_253, %c2_254, %c0_255, %c0_256] : memref<2x8x16x16xf32, #tpu.memory_space<vmem>>, vector<2x1x16x16xf32>
    %225 = vector.shape_cast %224 : vector<2x1x16x16xf32> to vector<2x16x16xf32>
    %cst_257 = arith.constant 2.500000e-01 : f32
    %226 = vector.broadcast %cst_257 : f32 to vector<2x16x16xf32>
    %227 = arith.mulf %226, %225 : vector<2x16x16xf32>
    %228 = arith.addf %223, %227 : vector<2x16x16xf32>
    %c0_258 = arith.constant 0 : index
    %c3_259 = arith.constant 3 : index
    %c0_260 = arith.constant 0 : index
    %c0_261 = arith.constant 0 : index
    %229 = vector.load %arg3[%c0_258, %c3_259, %c0_260, %c0_261] : memref<2x16x16x16xf32, #tpu.memory_space<vmem>>, vector<2x1x16x16xf32>
    %230 = vector.shape_cast %229 : vector<2x1x16x16xf32> to vector<2x16x16xf32>
    %231 = vector.shape_cast %228 : vector<2x16x16xf32> to vector<2x1x16x16xf32>
    tpu.vector_store %arg3[%c0_258, %c3_259, %c0_260, %c0_261], %231 {strides = array<i32>} : memref<2x16x16x16xf32, #tpu.memory_space<vmem>>, vector<2x1x16x16xf32>,
    %c0_262 = arith.constant 0 : index
    %c1_263 = arith.constant 1 : index
    %c0_264 = arith.constant 0 : index
    %c0_265 = arith.constant 0 : index
    %232 = vector.load %arg5[%c0_262, %c1_263, %c0_264, %c0_265] : memref<2x8x16x16xf32, #tpu.memory_space<vmem>>, vector<2x1x16x16xf32>
    %233 = vector.shape_cast %232 : vector<2x1x16x16xf32> to vector<2x16x16xf32>
    %cst_266 = arith.constant 2.500000e-01 : f32
    %234 = vector.broadcast %cst_266 : f32 to vector<2x16x16xf32>
    %235 = arith.mulf %234, %233 : vector<2x16x16xf32>
    %c0_267 = arith.constant 0 : index
    %c2_268 = arith.constant 2 : index
    %c0_269 = arith.constant 0 : index
    %c0_270 = arith.constant 0 : index
    %236 = vector.load %arg5[%c0_267, %c2_268, %c0_269, %c0_270] : memref<2x8x16x16xf32, #tpu.memory_space<vmem>>, vector<2x1x16x16xf32>
    %237 = vector.shape_cast %236 : vector<2x1x16x16xf32> to vector<2x16x16xf32>
    %cst_271 = arith.constant 7.500000e-01 : f32
    %238 = vector.broadcast %cst_271 : f32 to vector<2x16x16xf32>
    %239 = arith.mulf %238, %237 : vector<2x16x16xf32>
    %240 = arith.addf %235, %239 : vector<2x16x16xf32>
    %c0_272 = arith.constant 0 : index
    %c4_273 = arith.constant 4 : index
    %c0_274 = arith.constant 0 : index
    %c0_275 = arith.constant 0 : index
    %241 = vector.load %arg3[%c0_272, %c4_273, %c0_274, %c0_275] : memref<2x16x16x16xf32, #tpu.memory_space<vmem>>, vector<2x1x16x16xf32>
    %242 = vector.shape_cast %241 : vector<2x1x16x16xf32> to vector<2x16x16xf32>
    %243 = vector.shape_cast %240 : vector<2x16x16xf32> to vector<2x1x16x16xf32>
    tpu.vector_store %arg3[%c0_272, %c4_273, %c0_274, %c0_275], %243 {strides = array<i32>} : memref<2x16x16x16xf32, #tpu.memory_space<vmem>>, vector<2x1x16x16xf32>,
    %c0_276 = arith.constant 0 : index
    %c2_277 = arith.constant 2 : index
    %c0_278 = arith.constant 0 : index
    %c0_279 = arith.constant 0 : index
    %244 = vector.load %arg5[%c0_276, %c2_277, %c0_278, %c0_279] : memref<2x8x16x16xf32, #tpu.memory_space<vmem>>, vector<2x1x16x16xf32>
    %245 = vector.shape_cast %244 : vector<2x1x16x16xf32> to vector<2x16x16xf32>
    %cst_280 = arith.constant 7.500000e-01 : f32
    %246 = vector.broadcast %cst_280 : f32 to vector<2x16x16xf32>
    %247 = arith.mulf %246, %245 : vector<2x16x16xf32>
    %c0_281 = arith.constant 0 : index
    %c3_282 = arith.constant 3 : index
    %c0_283 = arith.constant 0 : index
    %c0_284 = arith.constant 0 : index
    %248 = vector.load %arg5[%c0_281, %c3_282, %c0_283, %c0_284] : memref<2x8x16x16xf32, #tpu.memory_space<vmem>>, vector<2x1x16x16xf32>
    %249 = vector.shape_cast %248 : vector<2x1x16x16xf32> to vector<2x16x16xf32>
    %cst_285 = arith.constant 2.500000e-01 : f32
    %250 = vector.broadcast %cst_285 : f32 to vector<2x16x16xf32>
    %251 = arith.mulf %250, %249 : vector<2x16x16xf32>
    %252 = arith.addf %247, %251 : vector<2x16x16xf32>
    %c0_286 = arith.constant 0 : index
    %c5_287 = arith.constant 5 : index
    %c0_288 = arith.constant 0 : index
    %c0_289 = arith.constant 0 : index
    %253 = vector.load %arg3[%c0_286, %c5_287, %c0_288, %c0_289] : memref<2x16x16x16xf32, #tpu.memory_space<vmem>>, vector<2x1x16x16xf32>
    %254 = vector.shape_cast %253 : vector<2x1x16x16xf32> to vector<2x16x16xf32>
    %255 = vector.shape_cast %252 : vector<2x16x16xf32> to vector<2x1x16x16xf32>
    tpu.vector_store %arg3[%c0_286, %c5_287, %c0_288, %c0_289], %255 {strides = array<i32>} : memref<2x16x16x16xf32, #tpu.memory_space<vmem>>, vector<2x1x16x16xf32>,
    %c0_290 = arith.constant 0 : index
    %c2_291 = arith.constant 2 : index
    %c0_292 = arith.constant 0 : index
    %c0_293 = arith.constant 0 : index
    %256 = vector.load %arg5[%c0_290, %c2_291, %c0_292, %c0_293] : memref<2x8x16x16xf32, #tpu.memory_space<vmem>>, vector<2x1x16x16xf32>
    %257 = vector.shape_cast %256 : vector<2x1x16x16xf32> to vector<2x16x16xf32>
    %cst_294 = arith.constant 2.500000e-01 : f32
    %258 = vector.broadcast %cst_294 : f32 to vector<2x16x16xf32>
    %259 = arith.mulf %258, %257 : vector<2x16x16xf32>
    %c0_295 = arith.constant 0 : index
    %c3_296 = arith.constant 3 : index
    %c0_297 = arith.constant 0 : index
    %c0_298 = arith.constant 0 : index
    %260 = vector.load %arg5[%c0_295, %c3_296, %c0_297, %c0_298] : memref<2x8x16x16xf32, #tpu.memory_space<vmem>>, vector<2x1x16x16xf32>
    %261 = vector.shape_cast %260 : vector<2x1x16x16xf32> to vector<2x16x16xf32>
    %cst_299 = arith.constant 7.500000e-01 : f32
    %262 = vector.broadcast %cst_299 : f32 to vector<2x16x16xf32>
    %263 = arith.mulf %262, %261 : vector<2x16x16xf32>
    %264 = arith.addf %259, %263 : vector<2x16x16xf32>
    %c0_300 = arith.constant 0 : index
    %c6_301 = arith.constant 6 : index
    %c0_302 = arith.constant 0 : index
    %c0_303 = arith.constant 0 : index
    %265 = vector.load %arg3[%c0_300, %c6_301, %c0_302, %c0_303] : memref<2x16x16x16xf32, #tpu.memory_space<vmem>>, vector<2x1x16x16xf32>
    %266 = vector.shape_cast %265 : vector<2x1x16x16xf32> to vector<2x16x16xf32>
    %267 = vector.shape_cast %264 : vector<2x16x16xf32> to vector<2x1x16x16xf32>
    tpu.vector_store %arg3[%c0_300, %c6_301, %c0_302, %c0_303], %267 {strides = array<i32>} : memref<2x16x16x16xf32, #tpu.memory_space<vmem>>, vector<2x1x16x16xf32>,
    %c0_304 = arith.constant 0 : index
    %c3_305 = arith.constant 3 : index
    %c0_306 = arith.constant 0 : index
    %c0_307 = arith.constant 0 : index
    %268 = vector.load %arg5[%c0_304, %c3_305, %c0_306, %c0_307] : memref<2x8x16x16xf32, #tpu.memory_space<vmem>>, vector<2x1x16x16xf32>
    %269 = vector.shape_cast %268 : vector<2x1x16x16xf32> to vector<2x16x16xf32>
    %cst_308 = arith.constant 7.500000e-01 : f32
    %270 = vector.broadcast %cst_308 : f32 to vector<2x16x16xf32>
    %271 = arith.mulf %270, %269 : vector<2x16x16xf32>
    %c0_309 = arith.constant 0 : index
    %c4_310 = arith.constant 4 : index
    %c0_311 = arith.constant 0 : index
    %c0_312 = arith.constant 0 : index
    %272 = vector.load %arg5[%c0_309, %c4_310, %c0_311, %c0_312] : memref<2x8x16x16xf32, #tpu.memory_space<vmem>>, vector<2x1x16x16xf32>
    %273 = vector.shape_cast %272 : vector<2x1x16x16xf32> to vector<2x16x16xf32>
    %cst_313 = arith.constant 2.500000e-01 : f32
    %274 = vector.broadcast %cst_313 : f32 to vector<2x16x16xf32>
    %275 = arith.mulf %274, %273 : vector<2x16x16xf32>
    %276 = arith.addf %271, %275 : vector<2x16x16xf32>
    %c0_314 = arith.constant 0 : index
    %c7_315 = arith.constant 7 : index
    %c0_316 = arith.constant 0 : index
    %c0_317 = arith.constant 0 : index
    %277 = vector.load %arg3[%c0_314, %c7_315, %c0_316, %c0_317] : memref<2x16x16x16xf32, #tpu.memory_space<vmem>>, vector<2x1x16x16xf32>
    %278 = vector.shape_cast %277 : vector<2x1x16x16xf32> to vector<2x16x16xf32>
    %279 = vector.shape_cast %276 : vector<2x16x16xf32> to vector<2x1x16x16xf32>
    tpu.vector_store %arg3[%c0_314, %c7_315, %c0_316, %c0_317], %279 {strides = array<i32>} : memref<2x16x16x16xf32, #tpu.memory_space<vmem>>, vector<2x1x16x16xf32>,
    %c0_318 = arith.constant 0 : index
    %c3_319 = arith.constant 3 : index
    %c0_320 = arith.constant 0 : index
    %c0_321 = arith.constant 0 : index
    %280 = vector.load %arg5[%c0_318, %c3_319, %c0_320, %c0_321] : memref<2x8x16x16xf32, #tpu.memory_space<vmem>>, vector<2x1x16x16xf32>
    %281 = vector.shape_cast %280 : vector<2x1x16x16xf32> to vector<2x16x16xf32>
    %cst_322 = arith.constant 2.500000e-01 : f32
    %282 = vector.broadcast %cst_322 : f32 to vector<2x16x16xf32>
    %283 = arith.mulf %282, %281 : vector<2x16x16xf32>
    %c0_323 = arith.constant 0 : index
    %c4_324 = arith.constant 4 : index
    %c0_325 = arith.constant 0 : index
    %c0_326 = arith.constant 0 : index
    %284 = vector.load %arg5[%c0_323, %c4_324, %c0_325, %c0_326] : memref<2x8x16x16xf32, #tpu.memory_space<vmem>>, vector<2x1x16x16xf32>
    %285 = vector.shape_cast %284 : vector<2x1x16x16xf32> to vector<2x16x16xf32>
    %cst_327 = arith.constant 7.500000e-01 : f32
    %286 = vector.broadcast %cst_327 : f32 to vector<2x16x16xf32>
    %287 = arith.mulf %286, %285 : vector<2x16x16xf32>
    %288 = arith.addf %283, %287 : vector<2x16x16xf32>
    %c0_328 = arith.constant 0 : index
    %c8_329 = arith.constant 8 : index
    %c0_330 = arith.constant 0 : index
    %c0_331 = arith.constant 0 : index
    %289 = vector.load %arg3[%c0_328, %c8_329, %c0_330, %c0_331] : memref<2x16x16x16xf32, #tpu.memory_space<vmem>>, vector<2x1x16x16xf32>
    %290 = vector.shape_cast %289 : vector<2x1x16x16xf32> to vector<2x16x16xf32>
    %291 = vector.shape_cast %288 : vector<2x16x16xf32> to vector<2x1x16x16xf32>
    tpu.vector_store %arg3[%c0_328, %c8_329, %c0_330, %c0_331], %291 {strides = array<i32>} : memref<2x16x16x16xf32, #tpu.memory_space<vmem>>, vector<2x1x16x16xf32>,
    %c0_332 = arith.constant 0 : index
    %c4_333 = arith.constant 4 : index
    %c0_334 = arith.constant 0 : index
    %c0_335 = arith.constant 0 : index
    %292 = vector.load %arg5[%c0_332, %c4_333, %c0_334, %c0_335] : memref<2x8x16x16xf32, #tpu.memory_space<vmem>>, vector<2x1x16x16xf32>
    %293 = vector.shape_cast %292 : vector<2x1x16x16xf32> to vector<2x16x16xf32>
    %cst_336 = arith.constant 7.500000e-01 : f32
    %294 = vector.broadcast %cst_336 : f32 to vector<2x16x16xf32>
    %295 = arith.mulf %294, %293 : vector<2x16x16xf32>
    %c0_337 = arith.constant 0 : index
    %c5_338 = arith.constant 5 : index
    %c0_339 = arith.constant 0 : index
    %c0_340 = arith.constant 0 : index
    %296 = vector.load %arg5[%c0_337, %c5_338, %c0_339, %c0_340] : memref<2x8x16x16xf32, #tpu.memory_space<vmem>>, vector<2x1x16x16xf32>
    %297 = vector.shape_cast %296 : vector<2x1x16x16xf32> to vector<2x16x16xf32>
    %cst_341 = arith.constant 2.500000e-01 : f32
    %298 = vector.broadcast %cst_341 : f32 to vector<2x16x16xf32>
    %299 = arith.mulf %298, %297 : vector<2x16x16xf32>
    %300 = arith.addf %295, %299 : vector<2x16x16xf32>
    %c0_342 = arith.constant 0 : index
    %c9_343 = arith.constant 9 : index
    %c0_344 = arith.constant 0 : index
    %c0_345 = arith.constant 0 : index
    %301 = vector.load %arg3[%c0_342, %c9_343, %c0_344, %c0_345] : memref<2x16x16x16xf32, #tpu.memory_space<vmem>>, vector<2x1x16x16xf32>
    %302 = vector.shape_cast %301 : vector<2x1x16x16xf32> to vector<2x16x16xf32>
    %303 = vector.shape_cast %300 : vector<2x16x16xf32> to vector<2x1x16x16xf32>
    tpu.vector_store %arg3[%c0_342, %c9_343, %c0_344, %c0_345], %303 {strides = array<i32>} : memref<2x16x16x16xf32, #tpu.memory_space<vmem>>, vector<2x1x16x16xf32>,
    %c0_346 = arith.constant 0 : index
    %c4_347 = arith.constant 4 : index
    %c0_348 = arith.constant 0 : index
    %c0_349 = arith.constant 0 : index
    %304 = vector.load %arg5[%c0_346, %c4_347, %c0_348, %c0_349] : memref<2x8x16x16xf32, #tpu.memory_space<vmem>>, vector<2x1x16x16xf32>
    %305 = vector.shape_cast %304 : vector<2x1x16x16xf32> to vector<2x16x16xf32>
    %cst_350 = arith.constant 2.500000e-01 : f32
    %306 = vector.broadcast %cst_350 : f32 to vector<2x16x16xf32>
    %307 = arith.mulf %306, %305 : vector<2x16x16xf32>
    %c0_351 = arith.constant 0 : index
    %c5_352 = arith.constant 5 : index
    %c0_353 = arith.constant 0 : index
    %c0_354 = arith.constant 0 : index
    %308 = vector.load %arg5[%c0_351, %c5_352, %c0_353, %c0_354] : memref<2x8x16x16xf32, #tpu.memory_space<vmem>>, vector<2x1x16x16xf32>
    %309 = vector.shape_cast %308 : vector<2x1x16x16xf32> to vector<2x16x16xf32>
    %cst_355 = arith.constant 7.500000e-01 : f32
    %310 = vector.broadcast %cst_355 : f32 to vector<2x16x16xf32>
    %311 = arith.mulf %310, %309 : vector<2x16x16xf32>
    %312 = arith.addf %307, %311 : vector<2x16x16xf32>
    %c0_356 = arith.constant 0 : index
    %c10_357 = arith.constant 10 : index
    %c0_358 = arith.constant 0 : index
    %c0_359 = arith.constant 0 : index
    %313 = vector.load %arg3[%c0_356, %c10_357, %c0_358, %c0_359] : memref<2x16x16x16xf32, #tpu.memory_space<vmem>>, vector<2x1x16x16xf32>
    %314 = vector.shape_cast %313 : vector<2x1x16x16xf32> to vector<2x16x16xf32>
    %315 = vector.shape_cast %312 : vector<2x16x16xf32> to vector<2x1x16x16xf32>
    tpu.vector_store %arg3[%c0_356, %c10_357, %c0_358, %c0_359], %315 {strides = array<i32>} : memref<2x16x16x16xf32, #tpu.memory_space<vmem>>, vector<2x1x16x16xf32>,
    %c0_360 = arith.constant 0 : index
    %c5_361 = arith.constant 5 : index
    %c0_362 = arith.constant 0 : index
    %c0_363 = arith.constant 0 : index
    %316 = vector.load %arg5[%c0_360, %c5_361, %c0_362, %c0_363] : memref<2x8x16x16xf32, #tpu.memory_space<vmem>>, vector<2x1x16x16xf32>
    %317 = vector.shape_cast %316 : vector<2x1x16x16xf32> to vector<2x16x16xf32>
    %cst_364 = arith.constant 7.500000e-01 : f32
    %318 = vector.broadcast %cst_364 : f32 to vector<2x16x16xf32>
    %319 = arith.mulf %318, %317 : vector<2x16x16xf32>
    %c0_365 = arith.constant 0 : index
    %c6_366 = arith.constant 6 : index
    %c0_367 = arith.constant 0 : index
    %c0_368 = arith.constant 0 : index
    %320 = vector.load %arg5[%c0_365, %c6_366, %c0_367, %c0_368] : memref<2x8x16x16xf32, #tpu.memory_space<vmem>>, vector<2x1x16x16xf32>
    %321 = vector.shape_cast %320 : vector<2x1x16x16xf32> to vector<2x16x16xf32>
    %cst_369 = arith.constant 2.500000e-01 : f32
    %322 = vector.broadcast %cst_369 : f32 to vector<2x16x16xf32>
    %323 = arith.mulf %322, %321 : vector<2x16x16xf32>
    %324 = arith.addf %319, %323 : vector<2x16x16xf32>
    %c0_370 = arith.constant 0 : index
    %c11_371 = arith.constant 11 : index
    %c0_372 = arith.constant 0 : index
    %c0_373 = arith.constant 0 : index
    %325 = vector.load %arg3[%c0_370, %c11_371, %c0_372, %c0_373] : memref<2x16x16x16xf32, #tpu.memory_space<vmem>>, vector<2x1x16x16xf32>
    %326 = vector.shape_cast %325 : vector<2x1x16x16xf32> to vector<2x16x16xf32>
    %327 = vector.shape_cast %324 : vector<2x16x16xf32> to vector<2x1x16x16xf32>
    tpu.vector_store %arg3[%c0_370, %c11_371, %c0_372, %c0_373], %327 {strides = array<i32>} : memref<2x16x16x16xf32, #tpu.memory_space<vmem>>, vector<2x1x16x16xf32>,
    %c0_374 = arith.constant 0 : index
    %c5_375 = arith.constant 5 : index
    %c0_376 = arith.constant 0 : index
    %c0_377 = arith.constant 0 : index
    %328 = vector.load %arg5[%c0_374, %c5_375, %c0_376, %c0_377] : memref<2x8x16x16xf32, #tpu.memory_space<vmem>>, vector<2x1x16x16xf32>
    %329 = vector.shape_cast %328 : vector<2x1x16x16xf32> to vector<2x16x16xf32>
    %cst_378 = arith.constant 2.500000e-01 : f32
    %330 = vector.broadcast %cst_378 : f32 to vector<2x16x16xf32>
    %331 = arith.mulf %330, %329 : vector<2x16x16xf32>
    %c0_379 = arith.constant 0 : index
    %c6_380 = arith.constant 6 : index
    %c0_381 = arith.constant 0 : index
    %c0_382 = arith.constant 0 : index
    %332 = vector.load %arg5[%c0_379, %c6_380, %c0_381, %c0_382] : memref<2x8x16x16xf32, #tpu.memory_space<vmem>>, vector<2x1x16x16xf32>
    %333 = vector.shape_cast %332 : vector<2x1x16x16xf32> to vector<2x16x16xf32>
    %cst_383 = arith.constant 7.500000e-01 : f32
    %334 = vector.broadcast %cst_383 : f32 to vector<2x16x16xf32>
    %335 = arith.mulf %334, %333 : vector<2x16x16xf32>
    %336 = arith.addf %331, %335 : vector<2x16x16xf32>
    %c0_384 = arith.constant 0 : index
    %c12_385 = arith.constant 12 : index
    %c0_386 = arith.constant 0 : index
    %c0_387 = arith.constant 0 : index
    %337 = vector.load %arg3[%c0_384, %c12_385, %c0_386, %c0_387] : memref<2x16x16x16xf32, #tpu.memory_space<vmem>>, vector<2x1x16x16xf32>
    %338 = vector.shape_cast %337 : vector<2x1x16x16xf32> to vector<2x16x16xf32>
    %339 = vector.shape_cast %336 : vector<2x16x16xf32> to vector<2x1x16x16xf32>
    tpu.vector_store %arg3[%c0_384, %c12_385, %c0_386, %c0_387], %339 {strides = array<i32>} : memref<2x16x16x16xf32, #tpu.memory_space<vmem>>, vector<2x1x16x16xf32>,
    %c0_388 = arith.constant 0 : index
    %c6_389 = arith.constant 6 : index
    %c0_390 = arith.constant 0 : index
    %c0_391 = arith.constant 0 : index
    %340 = vector.load %arg5[%c0_388, %c6_389, %c0_390, %c0_391] : memref<2x8x16x16xf32, #tpu.memory_space<vmem>>, vector<2x1x16x16xf32>
    %341 = vector.shape_cast %340 : vector<2x1x16x16xf32> to vector<2x16x16xf32>
    %cst_392 = arith.constant 7.500000e-01 : f32
    %342 = vector.broadcast %cst_392 : f32 to vector<2x16x16xf32>
    %343 = arith.mulf %342, %341 : vector<2x16x16xf32>
    %c0_393 = arith.constant 0 : index
    %c7_394 = arith.constant 7 : index
    %c0_395 = arith.constant 0 : index
    %c0_396 = arith.constant 0 : index
    %344 = vector.load %arg5[%c0_393, %c7_394, %c0_395, %c0_396] : memref<2x8x16x16xf32, #tpu.memory_space<vmem>>, vector<2x1x16x16xf32>
    %345 = vector.shape_cast %344 : vector<2x1x16x16xf32> to vector<2x16x16xf32>
    %cst_397 = arith.constant 2.500000e-01 : f32
    %346 = vector.broadcast %cst_397 : f32 to vector<2x16x16xf32>
    %347 = arith.mulf %346, %345 : vector<2x16x16xf32>
    %348 = arith.addf %343, %347 : vector<2x16x16xf32>
    %c0_398 = arith.constant 0 : index
    %c13_399 = arith.constant 13 : index
    %c0_400 = arith.constant 0 : index
    %c0_401 = arith.constant 0 : index
    %349 = vector.load %arg3[%c0_398, %c13_399, %c0_400, %c0_401] : memref<2x16x16x16xf32, #tpu.memory_space<vmem>>, vector<2x1x16x16xf32>
    %350 = vector.shape_cast %349 : vector<2x1x16x16xf32> to vector<2x16x16xf32>
    %351 = vector.shape_cast %348 : vector<2x16x16xf32> to vector<2x1x16x16xf32>
    tpu.vector_store %arg3[%c0_398, %c13_399, %c0_400, %c0_401], %351 {strides = array<i32>} : memref<2x16x16x16xf32, #tpu.memory_space<vmem>>, vector<2x1x16x16xf32>,
    %c0_402 = arith.constant 0 : index
    %c6_403 = arith.constant 6 : index
    %c0_404 = arith.constant 0 : index
    %c0_405 = arith.constant 0 : index
    %352 = vector.load %arg5[%c0_402, %c6_403, %c0_404, %c0_405] : memref<2x8x16x16xf32, #tpu.memory_space<vmem>>, vector<2x1x16x16xf32>
    %353 = vector.shape_cast %352 : vector<2x1x16x16xf32> to vector<2x16x16xf32>
    %cst_406 = arith.constant 2.500000e-01 : f32
    %354 = vector.broadcast %cst_406 : f32 to vector<2x16x16xf32>
    %355 = arith.mulf %354, %353 : vector<2x16x16xf32>
    %c0_407 = arith.constant 0 : index
    %c7_408 = arith.constant 7 : index
    %c0_409 = arith.constant 0 : index
    %c0_410 = arith.constant 0 : index
    %356 = vector.load %arg5[%c0_407, %c7_408, %c0_409, %c0_410] : memref<2x8x16x16xf32, #tpu.memory_space<vmem>>, vector<2x1x16x16xf32>
    %357 = vector.shape_cast %356 : vector<2x1x16x16xf32> to vector<2x16x16xf32>
    %cst_411 = arith.constant 7.500000e-01 : f32
    %358 = vector.broadcast %cst_411 : f32 to vector<2x16x16xf32>
    %359 = arith.mulf %358, %357 : vector<2x16x16xf32>
    %360 = arith.addf %355, %359 : vector<2x16x16xf32>
    %c0_412 = arith.constant 0 : index
    %c14_413 = arith.constant 14 : index
    %c0_414 = arith.constant 0 : index
    %c0_415 = arith.constant 0 : index
    %361 = vector.load %arg3[%c0_412, %c14_413, %c0_414, %c0_415] : memref<2x16x16x16xf32, #tpu.memory_space<vmem>>, vector<2x1x16x16xf32>
    %362 = vector.shape_cast %361 : vector<2x1x16x16xf32> to vector<2x16x16xf32>
    %363 = vector.shape_cast %360 : vector<2x16x16xf32> to vector<2x1x16x16xf32>
    tpu.vector_store %arg3[%c0_412, %c14_413, %c0_414, %c0_415], %363 {strides = array<i32>} : memref<2x16x16x16xf32, #tpu.memory_space<vmem>>, vector<2x1x16x16xf32>,
    %c0_416 = arith.constant 0 : index
    %c7_417 = arith.constant 7 : index
    %c0_418 = arith.constant 0 : index
    %c0_419 = arith.constant 0 : index
    %364 = vector.load %arg5[%c0_416, %c7_417, %c0_418, %c0_419] : memref<2x8x16x16xf32, #tpu.memory_space<vmem>>, vector<2x1x16x16xf32>
    %365 = vector.shape_cast %364 : vector<2x1x16x16xf32> to vector<2x16x16xf32>
    %cst_420 = arith.constant 7.500000e-01 : f32
    %366 = vector.broadcast %cst_420 : f32 to vector<2x16x16xf32>
    %367 = arith.mulf %366, %365 : vector<2x16x16xf32>
    %c0_421 = arith.constant 0 : index
    %c7_422 = arith.constant 7 : index
    %c0_423 = arith.constant 0 : index
    %c0_424 = arith.constant 0 : index
    %368 = vector.load %arg5[%c0_421, %c7_422, %c0_423, %c0_424] : memref<2x8x16x16xf32, #tpu.memory_space<vmem>>, vector<2x1x16x16xf32>
    %369 = vector.shape_cast %368 : vector<2x1x16x16xf32> to vector<2x16x16xf32>
    %cst_425 = arith.constant 2.500000e-01 : f32
    %370 = vector.broadcast %cst_425 : f32 to vector<2x16x16xf32>
    %371 = arith.mulf %370, %369 : vector<2x16x16xf32>
    %372 = arith.addf %367, %371 : vector<2x16x16xf32>
    %c0_426 = arith.constant 0 : index
    %c15_427 = arith.constant 15 : index
    %c0_428 = arith.constant 0 : index
    %c0_429 = arith.constant 0 : index
    %373 = vector.load %arg3[%c0_426, %c15_427, %c0_428, %c0_429] : memref<2x16x16x16xf32, #tpu.memory_space<vmem>>, vector<2x1x16x16xf32>
    %374 = vector.shape_cast %373 : vector<2x1x16x16xf32> to vector<2x16x16xf32>
    %375 = vector.shape_cast %372 : vector<2x16x16xf32> to vector<2x1x16x16xf32>
    tpu.vector_store %arg3[%c0_426, %c15_427, %c0_428, %c0_429], %375 {strides = array<i32>} : memref<2x16x16x16xf32, #tpu.memory_space<vmem>>, vector<2x1x16x16xf32>,
    return
  }
  func.func @transform_0(%arg0: i32) -> (i32, i32, i32, i32) {
    %c0_i32 = arith.constant 0 : i32
    %c0_i32_0 = arith.constant 0 : i32
    %c0_i32_1 = arith.constant 0 : i32
    %c0_i32_2 = arith.constant 0 : i32
    return %arg0, %c0_i32, %c0_i32_0, %c0_i32_1 : i32, i32, i32, i32
  }
  func.func @transform_1(%arg0: i32) -> (i32, i32) {
    %c0_i32 = arith.constant 0 : i32
    %c0_i32_0 = arith.constant 0 : i32
    %c0_i32_1 = arith.constant 0 : i32
    return %c0_i32, %c0_i32_0 : i32, i32
  }
  func.func @transform_2(%arg0: i32) -> (i32, i32, i32, i32) {
    %c0_i32 = arith.constant 0 : i32
    %c0_i32_0 = arith.constant 0 : i32
    %c0_i32_1 = arith.constant 0 : i32
    %c0_i32_2 = arith.constant 0 : i32
    return %arg0, %c0_i32, %c0_i32_0, %c0_i32_1 : i32, i32, i32, i32
  }
}

</mosaic_0001>

<llo_original>
// kernel: tpu_custom_call.1
$region0: #{tpu_custom_call.1}
  #allocation0 [shape = 'u32[]', space=smem, size = 0x4, offset = 0x4, fixed_abs, tag = 'smem constant byte address 0x4 - core index']
  #allocation1 [shape = 'u32[144,128]{1,0:T(1,128)}', space=vmem, size = 0x12000, scoped, tag = 'internal scratch']
  #allocation2 [shape = 'f32[2,8,8,16]{3,2,1,0:T(8,128)}', space=vmem, size = 0x10000, scoped, tag = 'scratch operand']
  #allocation3 [shape = 'f32[2,8,16,16]{3,2,1,0:T(8,128)}', space=vmem, size = 0x20000, scoped, tag = 'scratch operand']
  %s0 = inlined_call_operand.hbm [shape: f32[8,8,8,8], index: 0, kind: input, shape index: {}]
  %s1 = inlined_call_operand.hbm [shape: f32[8,16], index: 1, kind: input, shape index: {}]
  %s2 = inlined_call_operand.hbm [shape: f32[8,16,16,16], index: 2, kind: output, shape index: {}]
  %s3 = sld [smem:[#allocation0]]
  $region49: #{tpu_custom_call.1} parent=0
    _
  %s5 = ssub.s32 1, %s3
  %s6 = scalar_select 0, %s5, %s3
  $region1: #{tpu_custom_call.1} parent=0
    #allocation4 [shape = 'u8[131072]{0}', space=vmem, size = 0x20000, scoped, tag = 'input window, operand 0']
    #allocation5 [shape = 's32[2]{0}', space=sflag, size = 0x8, scoped, tag = 'scoped memory for tpu_custom_call.1']
    #allocation6 [shape = 's32[2]{0}', space=sflag, size = 0x8, scoped, tag = 'scoped memory for tpu_custom_call.1']
    #allocation7 [shape = 'u8[4096]{0}', space=vmem, size = 0x1000, scoped, tag = 'input window, operand 1, single buffered']
    #allocation8 [shape = 's32[1]{0}', space=sflag, size = 0x4, scoped, tag = 'scoped memory for tpu_custom_call.1']
    #allocation9 [shape = 'u8[524288]{0}', space=vmem, size = 0x80000, scoped, tag = 'output window, operand 0']
    %7 = vsyncpa [#allocation5], 0
    %s8 = scalar_lea.sflag [#allocation5], 1
    %9 = vsyncpa %s8, 0
    %10 = vsyncpa [#allocation8], 0
    %11 = vsyncpa [#allocation6], 0
    %s12 = scalar_lea.sflag [#allocation6], 1
    %13 = vsyncpa %s12, 0
    loop: start=0, step=1, limit=6
    $region2: #{tpu_custom_call.1} parent=1 // loop_pre_header
      _
    $region3: #{tpu_custom_call.1} parent=1 // loop_header
      %s15 = sphi 0, %s19
      %p16 = scmp.ge.s32.totalorder %s15, 6
      %s25 = sphi 0, %s27
      %s28 = sphi 0, %s25
      %s29 = sphi 0, %s28
      %s45 = sphi 0, %s29
      %s49 = sphi 0, %s49
      %s51 = sphi 0, %s49
      %s52 = sphi 0, %s51
      %s66 = sphi 0, %s52
      %s72 = sphi 0, %s74
      %s75 = sphi 0, %s72
      %s76 = sphi 0, %s75
      %s92 = sphi 0, %s76
    $region4: #{tpu_custom_call.1} parent=1 // loop_header_branch
      %18 = sbr.rel (%p16) target = $region8
    $region5: #{tpu_custom_call.1} parent=1 // loop_body
      %s20 = ssub.s32 %s15, 1
      %s21 = ssub.s32 %s15, 2
      %s22 = sadd.s32 %s15, 1
      %s23 = ssub.s32 %s15, %s22
      %p24 = scmp.eq.s32.totalorder %s23, 0
      %s26 = sadd.s32 %s25, 1
      %s27 = scalar_select %p24, %s25, %s26
      %p30 = pneg %p24
      %p31 = scmp.eq.s32.totalorder %s15, 3
      %p32 = por %p30, %p31
      %p33 = scmp.ne.s32.totalorder %s25, %s28
      %p34 = scmp.eq.s32.totalorder %s15, 0
      %p35 = por %p33, %p34
      %p36 = scmp.ne.s32.totalorder %s25, %s28
      %p37 = scmp.eq.s32.totalorder %s20, 3
      %p38 = por %p36, %p37
      %p39 = scmp.ne.s32.totalorder %s28, %s29
      %p40 = scmp.eq.s32.totalorder %s20, 0
      %p41 = por %p39, %p40
      %p42 = scmp.ne.s32.totalorder %s28, %s29
      %p43 = scmp.eq.s32.totalorder %s21, 3
      %p44 = por %p42, %p43
      %p46 = scmp.ne.s32.totalorder %s29, %s45
      %p47 = scmp.eq.s32.totalorder %s21, 0
      %p48 = por %p46, %p47
      %s50 = sadd.s32 %s49, 1
      %p53 = scmp.eq.s32.totalorder %s15, 3
      %p54 = scmp.ne.s32.totalorder %s49, %s51
      %p55 = scmp.eq.s32.totalorder %s15, 0
      %p56 = por %p54, %p55
      %p57 = scmp.ne.s32.totalorder %s49, %s51
      %p58 = scmp.eq.s32.totalorder %s20, 3
      %p59 = por %p57, %p58
      %p60 = scmp.ne.s32.totalorder %s51, %s52
      %p61 = scmp.eq.s32.totalorder %s20, 0
      %p62 = por %p60, %p61
      %p63 = scmp.ne.s32.totalorder %s51, %s52
      %p64 = scmp.eq.s32.totalorder %s21, 3
      %p65 = por %p63, %p64
      %p67 = scmp.ne.s32.totalorder %s52, %s66
      %p68 = scmp.eq.s32.totalorder %s21, 0
      %p69 = por %p67, %p68
      %s70 = ssub.s32 %s15, %s22
      %p71 = scmp.eq.s32.totalorder %s70, 0
      %s73 = sadd.s32 %s72, 1
      %s74 = scalar_select %p71, %s72, %s73
      %p77 = pneg %p71
      %p78 = scmp.eq.s32.totalorder %s15, 3
      %p79 = por %p77, %p78
      %p80 = scmp.ne.s32.totalorder %s72, %s75
      %p81 = scmp.eq.s32.totalorder %s15, 0
      %p82 = por %p80, %p81
      %p83 = scmp.ne.s32.totalorder %s72, %s75
      %p84 = scmp.eq.s32.totalorder %s20, 3
      %p85 = por %p83, %p84
      %p86 = scmp.ne.s32.totalorder %s75, %s76
      %p87 = scmp.eq.s32.totalorder %s20, 0
      %p88 = por %p86, %p87
      %p89 = scmp.ne.s32.totalorder %s75, %s76
      %p90 = scmp.eq.s32.totalorder %s21, 3
      %p91 = por %p89, %p90
      %p93 = scmp.ne.s32.totalorder %s76, %s92
      %p94 = scmp.eq.s32.totalorder %s21, 0
      %p95 = por %p93, %p94
      %p96 = scmp.le.s32.totalorder 1, %s15
      %p97 = scmp.lt.s32.totalorder %s15, 5
      %p98 = pnand %p96, %p97
      %p99 = pneg %p98
      // Predicated region
      $region9: #{tpu_custom_call.1} parent=5 // pred_check
        _
      $region10: #{tpu_custom_call.1} parent=5 // pred_check_branch
        %101 = sbr.rel (%p98) target = $region12
      $region11: #{tpu_custom_call.1} parent=5 // pred_region
        %s102 = ssub.s32 %s15, 1
        // Predicated region
        $region13: #{tpu_custom_call.1} parent=11 // pred_check
          %p103 = pneg %p62
        $region14: #{tpu_custom_call.1} parent=11 // pred_check_branch
          %105 = sbr.rel (%p103) target = $region16
        $region15: #{tpu_custom_call.1} parent=11 // pred_region
          %s107 = ssub.s32 128, 128
          %108 = vsyncadd [#allocation8], %s107
          %s110 = sshll.u32 [#allocation7], 4
          %s111 = int_to_ptr.vmem [resolvable:$true] %s110
          %113 = dma.hbm_to_vmem [thread:$0]  %s1, 128, %s111, [#allocation8]
        $region16: #{tpu_custom_call.1} parent=11 // pred_fallthru
          _
      $region12: #{tpu_custom_call.1} parent=5 // pred_fallthru
        _
      %p114 = scmp.lt.s32.totalorder %s15, 4
      // Predicated region
      $region17: #{tpu_custom_call.1} parent=5 // pred_check
        %p115 = pneg %p114
      $region18: #{tpu_custom_call.1} parent=5 // pred_check_branch
        %117 = sbr.rel (%p115) target = $region20
      $region19: #{tpu_custom_call.1} parent=5 // pred_region
        // Predicated region
        $region21: #{tpu_custom_call.1} parent=19 // pred_check
          %p118 = pneg %p35
        $region22: #{tpu_custom_call.1} parent=19 // pred_check_branch
          %120 = sbr.rel (%p118) target = $region24
        $region23: #{tpu_custom_call.1} parent=19 // pred_region
          %s121 = sand.u32 %s25, 1
          %s122 = scalar_lea.sflag [#allocation5], %s121
          %s123 = sand.u32 %s25, 1
          %s124 = smul.addr %s123, 128
          %s125 = scalar_lea.vmem [#allocation4], %s124
          %s126 = smul.u32 2, %s15
          %s128 = ssub.s32 2048, 2048
          %129 = vsyncadd %s122, %s128
          %s130 = smul.addr %s126, 8
          %s131 = smul.addr %s130, 128
          %s132 = scalar_lea.hbm %s0, %s131
          %s133 = sshll.u32 %s125, 4
          %s134 = int_to_ptr.vmem [resolvable:$true] %s133
          %139 = dma.hbm_to_vmem [thread:$0]  %s132, 2048, %s134, %s122, 128, 128, 8
        $region24: #{tpu_custom_call.1} parent=19 // pred_fallthru
          _
      $region20: #{tpu_custom_call.1} parent=5 // pred_fallthru
        _
      %p140 = scmp.le.s32.totalorder 1, %s15
      %p141 = scmp.lt.s32.totalorder %s15, 5
      %p142 = pnand %p140, %p141
      %p143 = pneg %p142
      // Predicated region
      $region25: #{tpu_custom_call.1} parent=5 // pred_check
        _
      $region26: #{tpu_custom_call.1} parent=5 // pred_check_branch
        %145 = sbr.rel (%p142) target = $region28
      $region27: #{tpu_custom_call.1} parent=5 // pred_region
        %s146 = ssub.s32 %s15, 1
        %s147 = sand.u32 %s28, 1
        %s148 = scalar_lea.sflag [#allocation5], %s147
        %s149 = sand.u32 %s28, 1
        %s150 = smul.addr %s149, 128
        %s151 = scalar_lea.vmem [#allocation4], %s150
        // Predicated region
        $region29: #{tpu_custom_call.1} parent=27 // pred_check
          %p152 = pneg %p41
        $region30: #{tpu_custom_call.1} parent=27 // pred_check_branch
          %154 = sbr.rel (%p152) target = $region32
        $region31: #{tpu_custom_call.1} parent=27 // pred_region
          %155 = dma.done %s148, 2048
        $region32: #{tpu_custom_call.1} parent=27 // pred_fallthru
          _
        // Predicated region
        $region33: #{tpu_custom_call.1} parent=27 // pred_check
          %p156 = pneg %p62
        $region34: #{tpu_custom_call.1} parent=27 // pred_check_branch
          %158 = sbr.rel (%p156) target = $region36
        $region35: #{tpu_custom_call.1} parent=27 // pred_region
          %159 = dma.done [#allocation8], 128
        $region36: #{tpu_custom_call.1} parent=27 // pred_fallthru
          _
        %s160 = sand.u32 %s28, 1
        %s161 = scalar_lea.sflag [#allocation5], %s160
        %s162 = sand.u32 %s28, 1
        %s163 = smul.addr %s162, 128
        %s164 = scalar_lea.vmem [#allocation4], %s163
        %p165 = pneg %p41
        %p166 = pneg %p38
        %p167 = pneg %p62
        %p168 = pneg %p59
        %p169 = pneg %p88
        %p170 = pneg %p85
        %s171 = sand.u32 %s75, 1
        %s172 = scalar_lea.sflag [#allocation6], %s171
        %s173 = sand.u32 %s75, 1
        %s174 = smul.addr %s173, 512
        %s175 = scalar_lea.vmem [#allocation9], %s174
        %s176 = smul.u32 2, %s20
        %s177 = smul.u32 2, %s20
        %v178 = vld [vmem:[%s151] sm:$0xff]
        %v179 = vld [vmem:[%s151 + $0x8] sm:$0xff]
        %v180 = vld [vmem:[%s151 + $0x10] sm:$0xff]
        %v181 = vld [vmem:[%s151 + $0x18] sm:$0xff]
        %v182 = vld [vmem:[%s151 + $0x20] sm:$0xff]
        %v183 = vld [vmem:[%s151 + $0x28] sm:$0xff]
        %v184 = vld [vmem:[%s151 + $0x30] sm:$0xff]
        %v185 = vld [vmem:[%s151 + $0x38] sm:$0xff]
        %v186 = vld [vmem:[%s151 + $0x40] sm:$0xff]
        %v187 = vld [vmem:[%s151 + $0x48] sm:$0xff]
        %v188 = vld [vmem:[%s151 + $0x50] sm:$0xff]
        %v189 = vld [vmem:[%s151 + $0x58] sm:$0xff]
        %v190 = vld [vmem:[%s151 + $0x60] sm:$0xff]
        %v191 = vld [vmem:[%s151 + $0x68] sm:$0xff]
        %v192 = vld [vmem:[%s151 + $0x70] sm:$0xff]
        %v193 = vld [vmem:[%s151 + $0x78] sm:$0xff]
        %v194 = vld [vmem:[#allocation7] sm:$0xff]
        %vm195 = vcmask 64512
        %v197 = vsel %vm195, %v178, 0
        %v200 = vsel %vm195, %v179, 0
        %v203 = vsel %vm195, %v180, 0
        %v206 = vsel %vm195, %v181, 0
        %v209 = vsel %vm195, %v182, 0
        %v212 = vsel %vm195, %v183, 0
        %v215 = vsel %vm195, %v184, 0
        %v218 = vsel %vm195, %v185, 0
        %v221 = vsel %vm195, %v186, 0
        %v224 = vsel %vm195, %v187, 0
        %v227 = vsel %vm195, %v188, 0
        %v230 = vsel %vm195, %v189, 0
        %v233 = vsel %vm195, %v190, 0
        %v236 = vsel %vm195, %v191, 0
        %v239 = vsel %vm195, %v192, 0
        %v242 = vsel %vm195, %v193, 0
        %244 = vmatprep.subr.mxu0 0.0
        %245 = vmatpush1.msra.mxu0 0.0
        %246 = vmatprep.subr.mxu0 0.0
        %247 = vmatpush1.msra.mxu0 0.0
        %248 = vmatprep.subr.mxu0 0.0
        %249 = vmatpush1.msra.mxu0 0.0
        %250 = vmatprep.subr.mxu0 0.0
        %251 = vmatpush1.msra.mxu0 0.0
        %252 = vmatprep.subr.mxu0 0.0
        %253 = vmatpush1.msra.mxu0 0.0
        %254 = vmatprep.subr.mxu0 0.0
        %255 = vmatpush1.msra.mxu0 0.0
        %256 = vmatprep.subr.mxu0 0.0
        %257 = vmatpush1.msra.mxu0 0.0
        %258 = vmatprep.subr.mxu0 0.0
        %259 = vmatpush1.msra.mxu0 0.0
        %260 = vmatprep.subr.mxu0 0.0
        %261 = vmatpush1.msra.mxu0 0.0
        %262 = vmatprep.subr.mxu0 0.0
        %263 = vmatpush1.msra.mxu0 0.0
        %264 = vmatprep.subr.mxu0 0.0
        %265 = vmatpush1.msra.mxu0 0.0
        %266 = vmatprep.subr.mxu0 0.0
        %267 = vmatpush1.msra.mxu0 0.0
        %268 = vmatprep.subr.mxu0 0.0
        %269 = vmatpush1.msra.mxu0 0.0
        %270 = vmatprep.subr.mxu0 0.0
        %271 = vmatpush1.msra.mxu0 0.0
        %272 = vmatprep.subr.mxu0 0.0
        %273 = vmatpush1.msra.mxu0 0.0
        %274 = vmatprep.subr.mxu0 0.0
        %275 = vmatpush1.msra.mxu0 %v194
        %276 = vmatprep.subr.mxu0 0.0
        %277 = vmatpush2.msra.mxu0 0.0
        %278 = vmatprep.subr.mxu0 0.0
        %279 = vmatpush2.msra.mxu0 0.0
        %280 = vmatprep.subr.mxu0 0.0
        %281 = vmatpush2.msra.mxu0 0.0
        %282 = vmatprep.subr.mxu0 0.0
        %283 = vmatpush2.msra.mxu0 0.0
        %284 = vmatprep.subr.mxu0 0.0
        %285 = vmatpush2.msra.mxu0 0.0
        %286 = vmatprep.subr.mxu0 0.0
        %287 = vmatpush2.msra.mxu0 0.0
        %288 = vmatprep.subr.mxu0 0.0
        %289 = vmatpush2.msra.mxu0 0.0
        %290 = vmatprep.subr.mxu0 0.0
        %291 = vmatpush2.msra.mxu0 0.0
        %292 = vmatprep.subr.mxu0 0.0
        %293 = vmatpush2.msra.mxu0 0.0
        %294 = vmatprep.subr.mxu0 0.0
        %295 = vmatpush2.msra.mxu0 0.0
        %296 = vmatprep.subr.mxu0 0.0
        %297 = vmatpush2.msra.mxu0 0.0
        %298 = vmatprep.subr.mxu0 0.0
        %299 = vmatpush2.msra.mxu0 0.0
        %300 = vmatprep.subr.mxu0 0.0
        %301 = vmatpush2.msra.mxu0 0.0
        %302 = vmatprep.subr.mxu0 0.0
        %303 = vmatpush2.msra.mxu0 0.0
        %304 = vmatprep.subr.mxu0 0.0
        %305 = vmatpush2.msra.mxu0 0.0
        %306 = vmatprep.subr.mxu0 0.0
        %307 = vmatpush2.msra.mxu0 0.0
        %308 = vmatprep.mubr.f32.mxu0 0.0
        %309 = vmatmul.mubr.f32.gmra.mxu0 %v197
        %v310 = vpop.f32.mrf.mxu0
        %v311 = vadd.f32 0.0, %v310
        %v312 = vpop.f32.mrf.mxu0
        %313 = vmatprep.mubr.f32.mxu0 0.0
        %314 = vmatmul.mubr.f32.gmra.mxu0 %v200
        %v315 = vpop.f32.mrf.mxu0
        %v316 = vadd.f32 0.0, %v315
        %v317 = vpop.f32.mrf.mxu0
        %318 = vmatprep.mubr.f32.mxu0 0.0
        %319 = vmatmul.mubr.f32.gmra.mxu0 %v203
        %v320 = vpop.f32.mrf.mxu0
        %v321 = vadd.f32 0.0, %v320
        %v322 = vpop.f32.mrf.mxu0
        %323 = vmatprep.mubr.f32.mxu0 0.0
        %324 = vmatmul.mubr.f32.gmra.mxu0 %v206
        %v325 = vpop.f32.mrf.mxu0
        %v326 = vadd.f32 0.0, %v325
        %v327 = vpop.f32.mrf.mxu0
        %328 = vmatprep.mubr.f32.mxu0 0.0
        %329 = vmatmul.mubr.f32.gmra.mxu0 %v209
        %v330 = vpop.f32.mrf.mxu0
        %v331 = vadd.f32 0.0, %v330
        %v332 = vpop.f32.mrf.mxu0
        %333 = vmatprep.mubr.f32.mxu0 0.0
        %334 = vmatmul.mubr.f32.gmra.mxu0 %v212
        %v335 = vpop.f32.mrf.mxu0
        %v336 = vadd.f32 0.0, %v335
        %v337 = vpop.f32.mrf.mxu0
        %338 = vmatprep.mubr.f32.mxu0 0.0
        %339 = vmatmul.mubr.f32.gmra.mxu0 %v215
        %v340 = vpop.f32.mrf.mxu0
        %v341 = vadd.f32 0.0, %v340
        %v342 = vpop.f32.mrf.mxu0
        %343 = vmatprep.mubr.f32.mxu0 0.0
        %344 = vmatmul.mubr.f32.gmra.mxu0 %v218
        %v345 = vpop.f32.mrf.mxu0
        %v346 = vadd.f32 0.0, %v345
        %v347 = vpop.f32.mrf.mxu0
        %348 = vmatprep.mubr.f32.mxu0 0.0
        %349 = vmatmul.mubr.f32.gmra.mxu0 %v221
        %v350 = vpop.f32.mrf.mxu0
        %v351 = vadd.f32 0.0, %v350
        %v352 = vpop.f32.mrf.mxu0
        %353 = vmatprep.mubr.f32.mxu0 0.0
        %354 = vmatmul.mubr.f32.gmra.mxu0 %v224
        %v355 = vpop.f32.mrf.mxu0
        %v356 = vadd.f32 0.0, %v355
        %v357 = vpop.f32.mrf.mxu0
        %358 = vmatprep.mubr.f32.mxu0 0.0
        %359 = vmatmul.mubr.f32.gmra.mxu0 %v227
        %v360 = vpop.f32.mrf.mxu0
        %v361 = vadd.f32 0.0, %v360
        %v362 = vpop.f32.mrf.mxu0
        %363 = vmatprep.mubr.f32.mxu0 0.0
        %364 = vmatmul.mubr.f32.gmra.mxu0 %v230
        %v365 = vpop.f32.mrf.mxu0
        %v366 = vadd.f32 0.0, %v365
        %v367 = vpop.f32.mrf.mxu0
        %368 = vmatprep.mubr.f32.mxu0 0.0
        %369 = vmatmul.mubr.f32.gmra.mxu0 %v233
        %v370 = vpop.f32.mrf.mxu0
        %v371 = vadd.f32 0.0, %v370
        %v372 = vpop.f32.mrf.mxu0
        %373 = vmatprep.mubr.f32.mxu0 0.0
        %374 = vmatmul.mubr.f32.gmra.mxu0 %v236
        %v375 = vpop.f32.mrf.mxu0
        %v376 = vadd.f32 0.0, %v375
        %v377 = vpop.f32.mrf.mxu0
        %378 = vmatprep.mubr.f32.mxu0 0.0
        %379 = vmatmul.mubr.f32.gmra.mxu0 %v239
        %v380 = vpop.f32.mrf.mxu0
        %v381 = vadd.f32 0.0, %v380
        %v382 = vpop.f32.mrf.mxu0
        %383 = vmatprep.mubr.f32.mxu0 0.0
        %384 = vmatmul.mubr.f32.gmra.mxu0 %v242
        %v385 = vpop.f32.mrf.mxu0
        %v386 = vadd.f32 0.0, %v385
        %v387 = vpop.f32.mrf.mxu0
        %388 = vdwg.mxu0
        %vm389 = vcmask 130048
        %390 = vst.msk [vmem:[#allocation2] sm:$0xff] %vm389, %v311
        %391 = vst.msk [vmem:[#allocation2 + $0x8] sm:$0xff] %vm389, %v316
        %392 = vst.msk [vmem:[#allocation2 + $0x10] sm:$0xff] %vm389, %v321
        %393 = vst.msk [vmem:[#allocation2 + $0x18] sm:$0xff] %vm389, %v326
        %394 = vst.msk [vmem:[#allocation2 + $0x20] sm:$0xff] %vm389, %v331
        %395 = vst.msk [vmem:[#allocation2 + $0x28] sm:$0xff] %vm389, %v336
        %396 = vst.msk [vmem:[#allocation2 + $0x30] sm:$0xff] %vm389, %v341
        %397 = vst.msk [vmem:[#allocation2 + $0x38] sm:$0xff] %vm389, %v346
        %398 = vst.msk [vmem:[#allocation2 + $0x40] sm:$0xff] %vm389, %v351
        %399 = vst.msk [vmem:[#allocation2 + $0x48] sm:$0xff] %vm389, %v356
        %400 = vst.msk [vmem:[#allocation2 + $0x50] sm:$0xff] %vm389, %v361
        %401 = vst.msk [vmem:[#allocation2 + $0x58] sm:$0xff] %vm389, %v366
        %402 = vst.msk [vmem:[#allocation2 + $0x60] sm:$0xff] %vm389, %v371
        %403 = vst.msk [vmem:[#allocation2 + $0x68] sm:$0xff] %vm389, %v376
        %404 = vst.msk [vmem:[#allocation2 + $0x70] sm:$0xff] %vm389, %v381
        %405 = vst.msk [vmem:[#allocation2 + $0x78] sm:$0xff] %vm389, %v386
        %v406 = vld [vmem:[#allocation2] sm:$0x1]
        %v407 = vld [vmem:[#allocation2 + $0x8] sm:$0x1]
        %v408 = vld [vmem:[#allocation2 + $0x10] sm:$0x1]
        %v409 = vld [vmem:[#allocation2 + $0x18] sm:$0x1]
        %v410 = vld [vmem:[#allocation2 + $0x20] sm:$0x1]
        %v411 = vld [vmem:[#allocation2 + $0x28] sm:$0x1]
        %v412 = vld [vmem:[#allocation2 + $0x30] sm:$0x1]
        %v413 = vld [vmem:[#allocation2 + $0x38] sm:$0x1]
        %v414 = vld [vmem:[#allocation2 + $0x40] sm:$0x1]
        %v415 = vld [vmem:[#allocation2 + $0x48] sm:$0x1]
        %v416 = vld [vmem:[#allocation2 + $0x50] sm:$0x1]
        %v417 = vld [vmem:[#allocation2 + $0x58] sm:$0x1]
        %v418 = vld [vmem:[#allocation2 + $0x60] sm:$0x1]
        %v419 = vld [vmem:[#allocation2 + $0x68] sm:$0x1]
        %v420 = vld [vmem:[#allocation2 + $0x70] sm:$0x1]
        %v421 = vld [vmem:[#allocation2 + $0x78] sm:$0x1]
        %vm422 = vcmask 122880
        %423 = vst.msk [vmem:[#allocation3] sm:$0x1] %vm422, %v406
        %424 = vst.msk [vmem:[#allocation3 + $0x10] sm:$0x1] %vm422, %v407
        %425 = vst.msk [vmem:[#allocation3 + $0x20] sm:$0x1] %vm422, %v408
        %426 = vst.msk [vmem:[#allocation3 + $0x30] sm:$0x1] %vm422, %v409
        %427 = vst.msk [vmem:[#allocation3 + $0x40] sm:$0x1] %vm422, %v410
        %428 = vst.msk [vmem:[#allocation3 + $0x50] sm:$0x1] %vm422, %v411
        %429 = vst.msk [vmem:[#allocation3 + $0x60] sm:$0x1] %vm422, %v412
        %430 = vst.msk [vmem:[#allocation3 + $0x70] sm:$0x1] %vm422, %v413
        %431 = vst.msk [vmem:[#allocation3 + $0x80] sm:$0x1] %vm422, %v414
        %432 = vst.msk [vmem:[#allocation3 + $0x90] sm:$0x1] %vm422, %v415
        %433 = vst.msk [vmem:[#allocation3 + $0xa0] sm:$0x1] %vm422, %v416
        %434 = vst.msk [vmem:[#allocation3 + $0xb0] sm:$0x1] %vm422, %v417
        %435 = vst.msk [vmem:[#allocation3 + $0xc0] sm:$0x1] %vm422, %v418
        %436 = vst.msk [vmem:[#allocation3 + $0xd0] sm:$0x1] %vm422, %v419
        %437 = vst.msk [vmem:[#allocation3 + $0xe0] sm:$0x1] %vm422, %v420
        %438 = vst.msk [vmem:[#allocation3 + $0xf0] sm:$0x1] %vm422, %v421
        %v439 = vld [vmem:[#allocation2] sm:$0x1]
        %v440 = vld [vmem:[#allocation2 + $0x8] sm:$0x1]
        %v441 = vld [vmem:[#allocation2 + $0x10] sm:$0x1]
        %v442 = vld [vmem:[#allocation2 + $0x18] sm:$0x1]
        %v443 = vld [vmem:[#allocation2 + $0x20] sm:$0x1]
        %v444 = vld [vmem:[#allocation2 + $0x28] sm:$0x1]
        %v445 = vld [vmem:[#allocation2 + $0x30] sm:$0x1]
        %v446 = vld [vmem:[#allocation2 + $0x38] sm:$0x1]
        %v447 = vld [vmem:[#allocation2 + $0x40] sm:$0x1]
        %v448 = vld [vmem:[#allocation2 + $0x48] sm:$0x1]
        %v449 = vld [vmem:[#allocation2 + $0x50] sm:$0x1]
        %v450 = vld [vmem:[#allocation2 + $0x58] sm:$0x1]
        %v451 = vld [vmem:[#allocation2 + $0x60] sm:$0x1]
        %v452 = vld [vmem:[#allocation2 + $0x68] sm:$0x1]
        %v453 = vld [vmem:[#allocation2 + $0x70] sm:$0x1]
        %v454 = vld [vmem:[#allocation2 + $0x78] sm:$0x1]
        %v455 = vmul.f32 %v439, 0.75
        %v456 = vmul.f32 %v440, 0.75
        %v457 = vmul.f32 %v441, 0.75
        %v458 = vmul.f32 %v442, 0.75
        %v459 = vmul.f32 %v443, 0.75
        %v460 = vmul.f32 %v444, 0.75
        %v461 = vmul.f32 %v445, 0.75
        %v462 = vmul.f32 %v446, 0.75
        %v463 = vmul.f32 %v447, 0.75
        %v464 = vmul.f32 %v448, 0.75
        %v465 = vmul.f32 %v449, 0.75
        %v466 = vmul.f32 %v450, 0.75
        %v467 = vmul.f32 %v451, 0.75
        %v468 = vmul.f32 %v452, 0.75
        %v469 = vmul.f32 %v453, 0.75
        %v470 = vmul.f32 %v454, 0.75
        %v471 = vld [vmem:[#allocation2 + $0x1] sm:$0x1]
        %v472 = vld [vmem:[#allocation2 + $0x9] sm:$0x1]
        %v473 = vld [vmem:[#allocation2 + $0x11] sm:$0x1]
        %v474 = vld [vmem:[#allocation2 + $0x19] sm:$0x1]
        %v475 = vld [vmem:[#allocation2 + $0x21] sm:$0x1]
        %v476 = vld [vmem:[#allocation2 + $0x29] sm:$0x1]
        %v477 = vld [vmem:[#allocation2 + $0x31] sm:$0x1]
        %v478 = vld [vmem:[#allocation2 + $0x39] sm:$0x1]
        %v479 = vld [vmem:[#allocation2 + $0x41] sm:$0x1]
        %v480 = vld [vmem:[#allocation2 + $0x49] sm:$0x1]
        %v481 = vld [vmem:[#allocation2 + $0x51] sm:$0x1]
        %v482 = vld [vmem:[#allocation2 + $0x59] sm:$0x1]
        %v483 = vld [vmem:[#allocation2 + $0x61] sm:$0x1]
        %v484 = vld [vmem:[#allocation2 + $0x69] sm:$0x1]
        %v485 = vld [vmem:[#allocation2 + $0x71] sm:$0x1]
        %v486 = vld [vmem:[#allocation2 + $0x79] sm:$0x1]
        %v487 = vmul.f32 %v471, 0.25
        %v488 = vmul.f32 %v472, 0.25
        %v489 = vmul.f32 %v473, 0.25
        %v490 = vmul.f32 %v474, 0.25
        %v491 = vmul.f32 %v475, 0.25
        %v492 = vmul.f32 %v476, 0.25
        %v493 = vmul.f32 %v477, 0.25
        %v494 = vmul.f32 %v478, 0.25
        %v495 = vmul.f32 %v479, 0.25
        %v496 = vmul.f32 %v480, 0.25
        %v497 = vmul.f32 %v481, 0.25
        %v498 = vmul.f32 %v482, 0.25
        %v499 = vmul.f32 %v483, 0.25
        %v500 = vmul.f32 %v484, 0.25
        %v501 = vmul.f32 %v485, 0.25
        %v502 = vmul.f32 %v486, 0.25
        %v503 = vadd.f32 %v455, %v487
        %v504 = vadd.f32 %v456, %v488
        %v505 = vadd.f32 %v457, %v489
        %v506 = vadd.f32 %v458, %v490
        %v507 = vadd.f32 %v459, %v491
        %v508 = vadd.f32 %v460, %v492
        %v509 = vadd.f32 %v461, %v493
        %v510 = vadd.f32 %v462, %v494
        %v511 = vadd.f32 %v463, %v495
        %v512 = vadd.f32 %v464, %v496
        %v513 = vadd.f32 %v465, %v497
        %v514 = vadd.f32 %v466, %v498
        %v515 = vadd.f32 %v467, %v499
        %v516 = vadd.f32 %v468, %v500
        %v517 = vadd.f32 %v469, %v501
        %v518 = vadd.f32 %v470, %v502
        %519 = vst.msk [vmem:[#allocation3 + $0x1] sm:$0x1] %vm422, %v503
        %520 = vst.msk [vmem:[#allocation3 + $0x11] sm:$0x1] %vm422, %v504
        %521 = vst.msk [vmem:[#allocation3 + $0x21] sm:$0x1] %vm422, %v505
        %522 = vst.msk [vmem:[#allocation3 + $0x31] sm:$0x1] %vm422, %v506
        %523 = vst.msk [vmem:[#allocation3 + $0x41] sm:$0x1] %vm422, %v507
        %524 = vst.msk [vmem:[#allocation3 + $0x51] sm:$0x1] %vm422, %v508
        %525 = vst.msk [vmem:[#allocation3 + $0x61] sm:$0x1] %vm422, %v509
        %526 = vst.msk [vmem:[#allocation3 + $0x71] sm:$0x1] %vm422, %v510
        %527 = vst.msk [vmem:[#allocation3 + $0x81] sm:$0x1] %vm422, %v511
        %528 = vst.msk [vmem:[#allocation3 + $0x91] sm:$0x1] %vm422, %v512
        %529 = vst.msk [vmem:[#allocation3 + $0xa1] sm:$0x1] %vm422, %v513
        %530 = vst.msk [vmem:[#allocation3 + $0xb1] sm:$0x1] %vm422, %v514
        %531 = vst.msk [vmem:[#allocation3 + $0xc1] sm:$0x1] %vm422, %v515
        %532 = vst.msk [vmem:[#allocation3 + $0xd1] sm:$0x1] %vm422, %v516
        %533 = vst.msk [vmem:[#allocation3 + $0xe1] sm:$0x1] %vm422, %v517
        %534 = vst.msk [vmem:[#allocation3 + $0xf1] sm:$0x1] %vm422, %v518
        %v535 = vld [vmem:[#allocation2] sm:$0x1]
        %v536 = vld [vmem:[#allocation2 + $0x8] sm:$0x1]
        %v537 = vld [vmem:[#allocation2 + $0x10] sm:$0x1]
        %v538 = vld [vmem:[#allocation2 + $0x18] sm:$0x1]
        %v539 = vld [vmem:[#allocation2 + $0x20] sm:$0x1]
        %v540 = vld [vmem:[#allocation2 + $0x28] sm:$0x1]
        %v541 = vld [vmem:[#allocation2 + $0x30] sm:$0x1]
        %v542 = vld [vmem:[#allocation2 + $0x38] sm:$0x1]
        %v543 = vld [vmem:[#allocation2 + $0x40] sm:$0x1]
        %v544 = vld [vmem:[#allocation2 + $0x48] sm:$0x1]
        %v545 = vld [vmem:[#allocation2 + $0x50] sm:$0x1]
        %v546 = vld [vmem:[#allocation2 + $0x58] sm:$0x1]
        %v547 = vld [vmem:[#allocation2 + $0x60] sm:$0x1]
        %v548 = vld [vmem:[#allocation2 + $0x68] sm:$0x1]
        %v549 = vld [vmem:[#allocation2 + $0x70] sm:$0x1]
        %v550 = vld [vmem:[#allocation2 + $0x78] sm:$0x1]
        %v551 = vmul.f32 %v535, 0.25
        %v552 = vmul.f32 %v536, 0.25
        %v553 = vmul.f32 %v537, 0.25
        %v554 = vmul.f32 %v538, 0.25
        %v555 = vmul.f32 %v539, 0.25
        %v556 = vmul.f32 %v540, 0.25
        %v557 = vmul.f32 %v541, 0.25
        %v558 = vmul.f32 %v542, 0.25
        %v559 = vmul.f32 %v543, 0.25
        %v560 = vmul.f32 %v544, 0.25
        %v561 = vmul.f32 %v545, 0.25
        %v562 = vmul.f32 %v546, 0.25
        %v563 = vmul.f32 %v547, 0.25
        %v564 = vmul.f32 %v548, 0.25
        %v565 = vmul.f32 %v549, 0.25
        %v566 = vmul.f32 %v550, 0.25
        %v567 = vld [vmem:[#allocation2 + $0x1] sm:$0x1]
        %v568 = vld [vmem:[#allocation2 + $0x9] sm:$0x1]
        %v569 = vld [vmem:[#allocation2 + $0x11] sm:$0x1]
        %v570 = vld [vmem:[#allocation2 + $0x19] sm:$0x1]
        %v571 = vld [vmem:[#allocation2 + $0x21] sm:$0x1]
        %v572 = vld [vmem:[#allocation2 + $0x29] sm:$0x1]
        %v573 = vld [vmem:[#allocation2 + $0x31] sm:$0x1]
        %v574 = vld [vmem:[#allocation2 + $0x39] sm:$0x1]
        %v575 = vld [vmem:[#allocation2 + $0x41] sm:$0x1]
        %v576 = vld [vmem:[#allocation2 + $0x49] sm:$0x1]
        %v577 = vld [vmem:[#allocation2 + $0x51] sm:$0x1]
        %v578 = vld [vmem:[#allocation2 + $0x59] sm:$0x1]
        %v579 = vld [vmem:[#allocation2 + $0x61] sm:$0x1]
        %v580 = vld [vmem:[#allocation2 + $0x69] sm:$0x1]
        %v581 = vld [vmem:[#allocation2 + $0x71] sm:$0x1]
        %v582 = vld [vmem:[#allocation2 + $0x79] sm:$0x1]
        %v583 = vmul.f32 %v567, 0.75
        %v584 = vmul.f32 %v568, 0.75
        %v585 = vmul.f32 %v569, 0.75
        %v586 = vmul.f32 %v570, 0.75
        %v587 = vmul.f32 %v571, 0.75
        %v588 = vmul.f32 %v572, 0.75
        %v589 = vmul.f32 %v573, 0.75
        %v590 = vmul.f32 %v574, 0.75
        %v591 = vmul.f32 %v575, 0.75
        %v592 = vmul.f32 %v576, 0.75
        %v593 = vmul.f32 %v577, 0.75
        %v594 = vmul.f32 %v578, 0.75
        %v595 = vmul.f32 %v579, 0.75
        %v596 = vmul.f32 %v580, 0.75
        %v597 = vmul.f32 %v581, 0.75
        %v598 = vmul.f32 %v582, 0.75
        %v599 = vadd.f32 %v551, %v583
        %v600 = vadd.f32 %v552, %v584
        %v601 = vadd.f32 %v553, %v585
        %v602 = vadd.f32 %v554, %v586
        %v603 = vadd.f32 %v555, %v587
        %v604 = vadd.f32 %v556, %v588
        %v605 = vadd.f32 %v557, %v589
        %v606 = vadd.f32 %v558, %v590
        %v607 = vadd.f32 %v559, %v591
        %v608 = vadd.f32 %v560, %v592
        %v609 = vadd.f32 %v561, %v593
        %v610 = vadd.f32 %v562, %v594
        %v611 = vadd.f32 %v563, %v595
        %v612 = vadd.f32 %v564, %v596
        %v613 = vadd.f32 %v565, %v597
        %v614 = vadd.f32 %v566, %v598
        %615 = vst.msk [vmem:[#allocation3 + $0x2] sm:$0x1] %vm422, %v599
        %616 = vst.msk [vmem:[#allocation3 + $0x12] sm:$0x1] %vm422, %v600
        %617 = vst.msk [vmem:[#allocation3 + $0x22] sm:$0x1] %vm422, %v601
        %618 = vst.msk [vmem:[#allocation3 + $0x32] sm:$0x1] %vm422, %v602
        %619 = vst.msk [vmem:[#allocation3 + $0x42] sm:$0x1] %vm422, %v603
        %620 = vst.msk [vmem:[#allocation3 + $0x52] sm:$0x1] %vm422, %v604
        %621 = vst.msk [vmem:[#allocation3 + $0x62] sm:$0x1] %vm422, %v605
        %622 = vst.msk [vmem:[#allocation3 + $0x72] sm:$0x1] %vm422, %v606
        %623 = vst.msk [vmem:[#allocation3 + $0x82] sm:$0x1] %vm422, %v607
        %624 = vst.msk [vmem:[#allocation3 + $0x92] sm:$0x1] %vm422, %v608
        %625 = vst.msk [vmem:[#allocation3 + $0xa2] sm:$0x1] %vm422, %v609
        %626 = vst.msk [vmem:[#allocation3 + $0xb2] sm:$0x1] %vm422, %v610
        %627 = vst.msk [vmem:[#allocation3 + $0xc2] sm:$0x1] %vm422, %v611
        %628 = vst.msk [vmem:[#allocation3 + $0xd2] sm:$0x1] %vm422, %v612
        %629 = vst.msk [vmem:[#allocation3 + $0xe2] sm:$0x1] %vm422, %v613
        %630 = vst.msk [vmem:[#allocation3 + $0xf2] sm:$0x1] %vm422, %v614
        %v631 = vld [vmem:[#allocation2 + $0x1] sm:$0x1]
        %v632 = vld [vmem:[#allocation2 + $0x9] sm:$0x1]
        %v633 = vld [vmem:[#allocation2 + $0x11] sm:$0x1]
        %v634 = vld [vmem:[#allocation2 + $0x19] sm:$0x1]
        %v635 = vld [vmem:[#allocation2 + $0x21] sm:$0x1]
        %v636 = vld [vmem:[#allocation2 + $0x29] sm:$0x1]
        %v637 = vld [vmem:[#allocation2 + $0x31] sm:$0x1]
        %v638 = vld [vmem:[#allocation2 + $0x39] sm:$0x1]
        %v639 = vld [vmem:[#allocation2 + $0x41] sm:$0x1]
        %v640 = vld [vmem:[#allocation2 + $0x49] sm:$0x1]
        %v641 = vld [vmem:[#allocation2 + $0x51] sm:$0x1]
        %v642 = vld [vmem:[#allocation2 + $0x59] sm:$0x1]
        %v643 = vld [vmem:[#allocation2 + $0x61] sm:$0x1]
        %v644 = vld [vmem:[#allocation2 + $0x69] sm:$0x1]
        %v645 = vld [vmem:[#allocation2 + $0x71] sm:$0x1]
        %v646 = vld [vmem:[#allocation2 + $0x79] sm:$0x1]
        %v647 = vmul.f32 %v631, 0.75
        %v648 = vmul.f32 %v632, 0.75
        %v649 = vmul.f32 %v633, 0.75
        %v650 = vmul.f32 %v634, 0.75
        %v651 = vmul.f32 %v635, 0.75
        %v652 = vmul.f32 %v636, 0.75
        %v653 = vmul.f32 %v637, 0.75
        %v654 = vmul.f32 %v638, 0.75
        %v655 = vmul.f32 %v639, 0.75
        %v656 = vmul.f32 %v640, 0.75
        %v657 = vmul.f32 %v641, 0.75
        %v658 = vmul.f32 %v642, 0.75
        %v659 = vmul.f32 %v643, 0.75
        %v660 = vmul.f32 %v644, 0.75
        %v661 = vmul.f32 %v645, 0.75
        %v662 = vmul.f32 %v646, 0.75
        %v663 = vld [vmem:[#allocation2 + $0x2] sm:$0x1]
        %v664 = vld [vmem:[#allocation2 + $0xa] sm:$0x1]
        %v665 = vld [vmem:[#allocation2 + $0x12] sm:$0x1]
        %v666 = vld [vmem:[#allocation2 + $0x1a] sm:$0x1]
        %v667 = vld [vmem:[#allocation2 + $0x22] sm:$0x1]
        %v668 = vld [vmem:[#allocation2 + $0x2a] sm:$0x1]
        %v669 = vld [vmem:[#allocation2 + $0x32] sm:$0x1]
        %v670 = vld [vmem:[#allocation2 + $0x3a] sm:$0x1]
        %v671 = vld [vmem:[#allocation2 + $0x42] sm:$0x1]
        %v672 = vld [vmem:[#allocation2 + $0x4a] sm:$0x1]
        %v673 = vld [vmem:[#allocation2 + $0x52] sm:$0x1]
        %v674 = vld [vmem:[#allocation2 + $0x5a] sm:$0x1]
        %v675 = vld [vmem:[#allocation2 + $0x62] sm:$0x1]
        %v676 = vld [vmem:[#allocation2 + $0x6a] sm:$0x1]
        %v677 = vld [vmem:[#allocation2 + $0x72] sm:$0x1]
        %v678 = vld [vmem:[#allocation2 + $0x7a] sm:$0x1]
        %v679 = vmul.f32 %v663, 0.25
        %v680 = vmul.f32 %v664, 0.25
        %v681 = vmul.f32 %v665, 0.25
        %v682 = vmul.f32 %v666, 0.25
        %v683 = vmul.f32 %v667, 0.25
        %v684 = vmul.f32 %v668, 0.25
        %v685 = vmul.f32 %v669, 0.25
        %v686 = vmul.f32 %v670, 0.25
        %v687 = vmul.f32 %v671, 0.25
        %v688 = vmul.f32 %v672, 0.25
        %v689 = vmul.f32 %v673, 0.25
        %v690 = vmul.f32 %v674, 0.25
        %v691 = vmul.f32 %v675, 0.25
        %v692 = vmul.f32 %v676, 0.25
        %v693 = vmul.f32 %v677, 0.25
        %v694 = vmul.f32 %v678, 0.25
        %v695 = vadd.f32 %v647, %v679
        %v696 = vadd.f32 %v648, %v680
        %v697 = vadd.f32 %v649, %v681
        %v698 = vadd.f32 %v650, %v682
        %v699 = vadd.f32 %v651, %v683
        %v700 = vadd.f32 %v652, %v684
        %v701 = vadd.f32 %v653, %v685
        %v702 = vadd.f32 %v654, %v686
        %v703 = vadd.f32 %v655, %v687
        %v704 = vadd.f32 %v656, %v688
        %v705 = vadd.f32 %v657, %v689
        %v706 = vadd.f32 %v658, %v690
        %v707 = vadd.f32 %v659, %v691
        %v708 = vadd.f32 %v660, %v692
        %v709 = vadd.f32 %v661, %v693
        %v710 = vadd.f32 %v662, %v694
        %711 = vst.msk [vmem:[#allocation3 + $0x3] sm:$0x1] %vm422, %v695
        %712 = vst.msk [vmem:[#allocation3 + $0x13] sm:$0x1] %vm422, %v696
        %713 = vst.msk [vmem:[#allocation3 + $0x23] sm:$0x1] %vm422, %v697
        %714 = vst.msk [vmem:[#allocation3 + $0x33] sm:$0x1] %vm422, %v698
        %715 = vst.msk [vmem:[#allocation3 + $0x43] sm:$0x1] %vm422, %v699
        %716 = vst.msk [vmem:[#allocation3 + $0x53] sm:$0x1] %vm422, %v700
        %717 = vst.msk [vmem:[#allocation3 + $0x63] sm:$0x1] %vm422, %v701
        %718 = vst.msk [vmem:[#allocation3 + $0x73] sm:$0x1] %vm422, %v702
        %719 = vst.msk [vmem:[#allocation3 + $0x83] sm:$0x1] %vm422, %v703
        %720 = vst.msk [vmem:[#allocation3 + $0x93] sm:$0x1] %vm422, %v704
        %721 = vst.msk [vmem:[#allocation3 + $0xa3] sm:$0x1] %vm422, %v705
        %722 = vst.msk [vmem:[#allocation3 + $0xb3] sm:$0x1] %vm422, %v706
        %723 = vst.msk [vmem:[#allocation3 + $0xc3] sm:$0x1] %vm422, %v707
        %724 = vst.msk [vmem:[#allocation3 + $0xd3] sm:$0x1] %vm422, %v708
        %725 = vst.msk [vmem:[#allocation3 + $0xe3] sm:$0x1] %vm422, %v709
        %726 = vst.msk [vmem:[#allocation3 + $0xf3] sm:$0x1] %vm422, %v710
        %v727 = vld [vmem:[#allocation2 + $0x1] sm:$0x1]
        %v728 = vld [vmem:[#allocation2 + $0x9] sm:$0x1]
        %v729 = vld [vmem:[#allocation2 + $0x11] sm:$0x1]
        %v730 = vld [vmem:[#allocation2 + $0x19] sm:$0x1]
        %v731 = vld [vmem:[#allocation2 + $0x21] sm:$0x1]
        %v732 = vld [vmem:[#allocation2 + $0x29] sm:$0x1]
        %v733 = vld [vmem:[#allocation2 + $0x31] sm:$0x1]
        %v734 = vld [vmem:[#allocation2 + $0x39] sm:$0x1]
        %v735 = vld [vmem:[#allocation2 + $0x41] sm:$0x1]
        %v736 = vld [vmem:[#allocation2 + $0x49] sm:$0x1]
        %v737 = vld [vmem:[#allocation2 + $0x51] sm:$0x1]
        %v738 = vld [vmem:[#allocation2 + $0x59] sm:$0x1]
        %v739 = vld [vmem:[#allocation2 + $0x61] sm:$0x1]
        %v740 = vld [vmem:[#allocation2 + $0x69] sm:$0x1]
        %v741 = vld [vmem:[#allocation2 + $0x71] sm:$0x1]
        %v742 = vld [vmem:[#allocation2 + $0x79] sm:$0x1]
        %v743 = vmul.f32 %v727, 0.25
        %v744 = vmul.f32 %v728, 0.25
        %v745 = vmul.f32 %v729, 0.25
        %v746 = vmul.f32 %v730, 0.25
        %v747 = vmul.f32 %v731, 0.25
        %v748 = vmul.f32 %v732, 0.25
        %v749 = vmul.f32 %v733, 0.25
        %v750 = vmul.f32 %v734, 0.25
        %v751 = vmul.f32 %v735, 0.25
        %v752 = vmul.f32 %v736, 0.25
        %v753 = vmul.f32 %v737, 0.25
        %v754 = vmul.f32 %v738, 0.25
        %v755 = vmul.f32 %v739, 0.25
        %v756 = vmul.f32 %v740, 0.25
        %v757 = vmul.f32 %v741, 0.25
        %v758 = vmul.f32 %v742, 0.25
        %v759 = vld [vmem:[#allocation2 + $0x2] sm:$0x1]
        %v760 = vld [vmem:[#allocation2 + $0xa] sm:$0x1]
        %v761 = vld [vmem:[#allocation2 + $0x12] sm:$0x1]
        %v762 = vld [vmem:[#allocation2 + $0x1a] sm:$0x1]
        %v763 = vld [vmem:[#allocation2 + $0x22] sm:$0x1]
        %v764 = vld [vmem:[#allocation2 + $0x2a] sm:$0x1]
        %v765 = vld [vmem:[#allocation2 + $0x32] sm:$0x1]
        %v766 = vld [vmem:[#allocation2 + $0x3a] sm:$0x1]
        %v767 = vld [vmem:[#allocation2 + $0x42] sm:$0x1]
        %v768 = vld [vmem:[#allocation2 + $0x4a] sm:$0x1]
        %v769 = vld [vmem:[#allocation2 + $0x52] sm:$0x1]
        %v770 = vld [vmem:[#allocation2 + $0x5a] sm:$0x1]
        %v771 = vld [vmem:[#allocation2 + $0x62] sm:$0x1]
        %v772 = vld [vmem:[#allocation2 + $0x6a] sm:$0x1]
        %v773 = vld [vmem:[#allocation2 + $0x72] sm:$0x1]
        %v774 = vld [vmem:[#allocation2 + $0x7a] sm:$0x1]
        %v775 = vmul.f32 %v759, 0.75
        %v776 = vmul.f32 %v760, 0.75
        %v777 = vmul.f32 %v761, 0.75
        %v778 = vmul.f32 %v762, 0.75
        %v779 = vmul.f32 %v763, 0.75
        %v780 = vmul.f32 %v764, 0.75
        %v781 = vmul.f32 %v765, 0.75
        %v782 = vmul.f32 %v766, 0.75
        %v783 = vmul.f32 %v767, 0.75
        %v784 = vmul.f32 %v768, 0.75
        %v785 = vmul.f32 %v769, 0.75
        %v786 = vmul.f32 %v770, 0.75
        %v787 = vmul.f32 %v771, 0.75
        %v788 = vmul.f32 %v772, 0.75
        %v789 = vmul.f32 %v773, 0.75
        %v790 = vmul.f32 %v774, 0.75
        %v791 = vadd.f32 %v743, %v775
        %v792 = vadd.f32 %v744, %v776
        %v793 = vadd.f32 %v745, %v777
        %v794 = vadd.f32 %v746, %v778
        %v795 = vadd.f32 %v747, %v779
        %v796 = vadd.f32 %v748, %v780
        %v797 = vadd.f32 %v749, %v781
        %v798 = vadd.f32 %v750, %v782
        %v799 = vadd.f32 %v751, %v783
        %v800 = vadd.f32 %v752, %v784
        %v801 = vadd.f32 %v753, %v785
        %v802 = vadd.f32 %v754, %v786
        %v803 = vadd.f32 %v755, %v787
        %v804 = vadd.f32 %v756, %v788
        %v805 = vadd.f32 %v757, %v789
        %v806 = vadd.f32 %v758, %v790
        %807 = vst.msk [vmem:[#allocation3 + $0x4] sm:$0x1] %vm422, %v791
        %808 = vst.msk [vmem:[#allocation3 + $0x14] sm:$0x1] %vm422, %v792
        %809 = vst.msk [vmem:[#allocation3 + $0x24] sm:$0x1] %vm422, %v793
        %810 = vst.msk [vmem:[#allocation3 + $0x34] sm:$0x1] %vm422, %v794
        %811 = vst.msk [vmem:[#allocation3 + $0x44] sm:$0x1] %vm422, %v795
        %812 = vst.msk [vmem:[#allocation3 + $0x54] sm:$0x1] %vm422, %v796
        %813 = vst.msk [vmem:[#allocation3 + $0x64] sm:$0x1] %vm422, %v797
        %814 = vst.msk [vmem:[#allocation3 + $0x74] sm:$0x1] %vm422, %v798
        %815 = vst.msk [vmem:[#allocation3 + $0x84] sm:$0x1] %vm422, %v799
        %816 = vst.msk [vmem:[#allocation3 + $0x94] sm:$0x1] %vm422, %v800
        %817 = vst.msk [vmem:[#allocation3 + $0xa4] sm:$0x1] %vm422, %v801
        %818 = vst.msk [vmem:[#allocation3 + $0xb4] sm:$0x1] %vm422, %v802
        %819 = vst.msk [vmem:[#allocation3 + $0xc4] sm:$0x1] %vm422, %v803
        %820 = vst.msk [vmem:[#allocation3 + $0xd4] sm:$0x1] %vm422, %v804
        %821 = vst.msk [vmem:[#allocation3 + $0xe4] sm:$0x1] %vm422, %v805
        %822 = vst.msk [vmem:[#allocation3 + $0xf4] sm:$0x1] %vm422, %v806
        %v823 = vld [vmem:[#allocation2 + $0x2] sm:$0x1]
        %v824 = vld [vmem:[#allocation2 + $0xa] sm:$0x1]
        %v825 = vld [vmem:[#allocation2 + $0x12] sm:$0x1]
        %v826 = vld [vmem:[#allocation2 + $0x1a] sm:$0x1]
        %v827 = vld [vmem:[#allocation2 + $0x22] sm:$0x1]
        %v828 = vld [vmem:[#allocation2 + $0x2a] sm:$0x1]
        %v829 = vld [vmem:[#allocation2 + $0x32] sm:$0x1]
        %v830 = vld [vmem:[#allocation2 + $0x3a] sm:$0x1]
        %v831 = vld [vmem:[#allocation2 + $0x42] sm:$0x1]
        %v832 = vld [vmem:[#allocation2 + $0x4a] sm:$0x1]
        %v833 = vld [vmem:[#allocation2 + $0x52] sm:$0x1]
        %v834 = vld [vmem:[#allocation2 + $0x5a] sm:$0x1]
        %v835 = vld [vmem:[#allocation2 + $0x62] sm:$0x1]
        %v836 = vld [vmem:[#allocation2 + $0x6a] sm:$0x1]
        %v837 = vld [vmem:[#allocation2 + $0x72] sm:$0x1]
        %v838 = vld [vmem:[#allocation2 + $0x7a] sm:$0x1]
        %v839 = vmul.f32 %v823, 0.75
        %v840 = vmul.f32 %v824, 0.75
        %v841 = vmul.f32 %v825, 0.75
        %v842 = vmul.f32 %v826, 0.75
        %v843 = vmul.f32 %v827, 0.75
        %v844 = vmul.f32 %v828, 0.75
        %v845 = vmul.f32 %v829, 0.75
        %v846 = vmul.f32 %v830, 0.75
        %v847 = vmul.f32 %v831, 0.75
        %v848 = vmul.f32 %v832, 0.75
        %v849 = vmul.f32 %v833, 0.75
        %v850 = vmul.f32 %v834, 0.75
        %v851 = vmul.f32 %v835, 0.75
        %v852 = vmul.f32 %v836, 0.75
        %v853 = vmul.f32 %v837, 0.75
        %v854 = vmul.f32 %v838, 0.75
        %v855 = vld [vmem:[#allocation2 + $0x3] sm:$0x1]
        %v856 = vld [vmem:[#allocation2 + $0xb] sm:$0x1]
        %v857 = vld [vmem:[#allocation2 + $0x13] sm:$0x1]
        %v858 = vld [vmem:[#allocation2 + $0x1b] sm:$0x1]
        %v859 = vld [vmem:[#allocation2 + $0x23] sm:$0x1]
        %v860 = vld [vmem:[#allocation2 + $0x2b] sm:$0x1]
        %v861 = vld [vmem:[#allocation2 + $0x33] sm:$0x1]
        %v862 = vld [vmem:[#allocation2 + $0x3b] sm:$0x1]
        %v863 = vld [vmem:[#allocation2 + $0x43] sm:$0x1]
        %v864 = vld [vmem:[#allocation2 + $0x4b] sm:$0x1]
        %v865 = vld [vmem:[#allocation2 + $0x53] sm:$0x1]
        %v866 = vld [vmem:[#allocation2 + $0x5b] sm:$0x1]
        %v867 = vld [vmem:[#allocation2 + $0x63] sm:$0x1]
        %v868 = vld [vmem:[#allocation2 + $0x6b] sm:$0x1]
        %v869 = vld [vmem:[#allocation2 + $0x73] sm:$0x1]
        %v870 = vld [vmem:[#allocation2 + $0x7b] sm:$0x1]
        %v871 = vmul.f32 %v855, 0.25
        %v872 = vmul.f32 %v856, 0.25
        %v873 = vmul.f32 %v857, 0.25
        %v874 = vmul.f32 %v858, 0.25
        %v875 = vmul.f32 %v859, 0.25
        %v876 = vmul.f32 %v860, 0.25
        %v877 = vmul.f32 %v861, 0.25
        %v878 = vmul.f32 %v862, 0.25
        %v879 = vmul.f32 %v863, 0.25
        %v880 = vmul.f32 %v864, 0.25
        %v881 = vmul.f32 %v865, 0.25
        %v882 = vmul.f32 %v866, 0.25
        %v883 = vmul.f32 %v867, 0.25
        %v884 = vmul.f32 %v868, 0.25
        %v885 = vmul.f32 %v869, 0.25
        %v886 = vmul.f32 %v870, 0.25
        %v887 = vadd.f32 %v839, %v871
        %v888 = vadd.f32 %v840, %v872
        %v889 = vadd.f32 %v841, %v873
        %v890 = vadd.f32 %v842, %v874
        %v891 = vadd.f32 %v843, %v875
        %v892 = vadd.f32 %v844, %v876
        %v893 = vadd.f32 %v845, %v877
        %v894 = vadd.f32 %v846, %v878
        %v895 = vadd.f32 %v847, %v879
        %v896 = vadd.f32 %v848, %v880
        %v897 = vadd.f32 %v849, %v881
        %v898 = vadd.f32 %v850, %v882
        %v899 = vadd.f32 %v851, %v883
        %v900 = vadd.f32 %v852, %v884
        %v901 = vadd.f32 %v853, %v885
        %v902 = vadd.f32 %v854, %v886
        %903 = vst.msk [vmem:[#allocation3 + $0x5] sm:$0x1] %vm422, %v887
        %904 = vst.msk [vmem:[#allocation3 + $0x15] sm:$0x1] %vm422, %v888
        %905 = vst.msk [vmem:[#allocation3 + $0x25] sm:$0x1] %vm422, %v889
        %906 = vst.msk [vmem:[#allocation3 + $0x35] sm:$0x1] %vm422, %v890
        %907 = vst.msk [vmem:[#allocation3 + $0x45] sm:$0x1] %vm422, %v891
        %908 = vst.msk [vmem:[#allocation3 + $0x55] sm:$0x1] %vm422, %v892
        %909 = vst.msk [vmem:[#allocation3 + $0x65] sm:$0x1] %vm422, %v893
        %910 = vst.msk [vmem:[#allocation3 + $0x75] sm:$0x1] %vm422, %v894
        %911 = vst.msk [vmem:[#allocation3 + $0x85] sm:$0x1] %vm422, %v895
        %912 = vst.msk [vmem:[#allocation3 + $0x95] sm:$0x1] %vm422, %v896
        %913 = vst.msk [vmem:[#allocation3 + $0xa5] sm:$0x1] %vm422, %v897
        %914 = vst.msk [vmem:[#allocation3 + $0xb5] sm:$0x1] %vm422, %v898
        %915 = vst.msk [vmem:[#allocation3 + $0xc5] sm:$0x1] %vm422, %v899
        %916 = vst.msk [vmem:[#allocation3 + $0xd5] sm:$0x1] %vm422, %v900
        %917 = vst.msk [vmem:[#allocation3 + $0xe5] sm:$0x1] %vm422, %v901
        %918 = vst.msk [vmem:[#allocation3 + $0xf5] sm:$0x1] %vm422, %v902
        %v919 = vld [vmem:[#allocation2 + $0x2] sm:$0x1]
        %v920 = vld [vmem:[#allocation2 + $0xa] sm:$0x1]
        %v921 = vld [vmem:[#allocation2 + $0x12] sm:$0x1]
        %v922 = vld [vmem:[#allocation2 + $0x1a] sm:$0x1]
        %v923 = vld [vmem:[#allocation2 + $0x22] sm:$0x1]
        %v924 = vld [vmem:[#allocation2 + $0x2a] sm:$0x1]
        %v925 = vld [vmem:[#allocation2 + $0x32] sm:$0x1]
        %v926 = vld [vmem:[#allocation2 + $0x3a] sm:$0x1]
        %v927 = vld [vmem:[#allocation2 + $0x42] sm:$0x1]
        %v928 = vld [vmem:[#allocation2 + $0x4a] sm:$0x1]
        %v929 = vld [vmem:[#allocation2 + $0x52] sm:$0x1]
        %v930 = vld [vmem:[#allocation2 + $0x5a] sm:$0x1]
        %v931 = vld [vmem:[#allocation2 + $0x62] sm:$0x1]
        %v932 = vld [vmem:[#allocation2 + $0x6a] sm:$0x1]
        %v933 = vld [vmem:[#allocation2 + $0x72] sm:$0x1]
        %v934 = vld [vmem:[#allocation2 + $0x7a] sm:$0x1]
        %v935 = vmul.f32 %v919, 0.25
        %v936 = vmul.f32 %v920, 0.25
        %v937 = vmul.f32 %v921, 0.25
        %v938 = vmul.f32 %v922, 0.25
        %v939 = vmul.f32 %v923, 0.25
        %v940 = vmul.f32 %v924, 0.25
        %v941 = vmul.f32 %v925, 0.25
        %v942 = vmul.f32 %v926, 0.25
        %v943 = vmul.f32 %v927, 0.25
        %v944 = vmul.f32 %v928, 0.25
        %v945 = vmul.f32 %v929, 0.25
        %v946 = vmul.f32 %v930, 0.25
        %v947 = vmul.f32 %v931, 0.25
        %v948 = vmul.f32 %v932, 0.25
        %v949 = vmul.f32 %v933, 0.25
        %v950 = vmul.f32 %v934, 0.25
        %v951 = vld [vmem:[#allocation2 + $0x3] sm:$0x1]
        %v952 = vld [vmem:[#allocation2 + $0xb] sm:$0x1]
        %v953 = vld [vmem:[#allocation2 + $0x13] sm:$0x1]
        %v954 = vld [vmem:[#allocation2 + $0x1b] sm:$0x1]
        %v955 = vld [vmem:[#allocation2 + $0x23] sm:$0x1]
        %v956 = vld [vmem:[#allocation2 + $0x2b] sm:$0x1]
        %v957 = vld [vmem:[#allocation2 + $0x33] sm:$0x1]
        %v958 = vld [vmem:[#allocation2 + $0x3b] sm:$0x1]
        %v959 = vld [vmem:[#allocation2 + $0x43] sm:$0x1]
        %v960 = vld [vmem:[#allocation2 + $0x4b] sm:$0x1]
        %v961 = vld [vmem:[#allocation2 + $0x53] sm:$0x1]
        %v962 = vld [vmem:[#allocation2 + $0x5b] sm:$0x1]
        %v963 = vld [vmem:[#allocation2 + $0x63] sm:$0x1]
        %v964 = vld [vmem:[#allocation2 + $0x6b] sm:$0x1]
        %v965 = vld [vmem:[#allocation2 + $0x73] sm:$0x1]
        %v966 = vld [vmem:[#allocation2 + $0x7b] sm:$0x1]
        %v967 = vmul.f32 %v951, 0.75
        %v968 = vmul.f32 %v952, 0.75
        %v969 = vmul.f32 %v953, 0.75
        %v970 = vmul.f32 %v954, 0.75
        %v971 = vmul.f32 %v955, 0.75
        %v972 = vmul.f32 %v956, 0.75
        %v973 = vmul.f32 %v957, 0.75
        %v974 = vmul.f32 %v958, 0.75
        %v975 = vmul.f32 %v959, 0.75
        %v976 = vmul.f32 %v960, 0.75
        %v977 = vmul.f32 %v961, 0.75
        %v978 = vmul.f32 %v962, 0.75
        %v979 = vmul.f32 %v963, 0.75
        %v980 = vmul.f32 %v964, 0.75
        %v981 = vmul.f32 %v965, 0.75
        %v982 = vmul.f32 %v966, 0.75
        %v983 = vadd.f32 %v935, %v967
        %v984 = vadd.f32 %v936, %v968
        %v985 = vadd.f32 %v937, %v969
        %v986 = vadd.f32 %v938, %v970
        %v987 = vadd.f32 %v939, %v971
        %v988 = vadd.f32 %v940, %v972
        %v989 = vadd.f32 %v941, %v973
        %v990 = vadd.f32 %v942, %v974
        %v991 = vadd.f32 %v943, %v975
        %v992 = vadd.f32 %v944, %v976
        %v993 = vadd.f32 %v945, %v977
        %v994 = vadd.f32 %v946, %v978
        %v995 = vadd.f32 %v947, %v979
        %v996 = vadd.f32 %v948, %v980
        %v997 = vadd.f32 %v949, %v981
        %v998 = vadd.f32 %v950, %v982
        %999 = vst.msk [vmem:[#allocation3 + $0x6] sm:$0x1] %vm422, %v983
        %1000 = vst.msk [vmem:[#allocation3 + $0x16] sm:$0x1] %vm422, %v984
        %1001 = vst.msk [vmem:[#allocation3 + $0x26] sm:$0x1] %vm422, %v985
        %1002 = vst.msk [vmem:[#allocation3 + $0x36] sm:$0x1] %vm422, %v986
        %1003 = vst.msk [vmem:[#allocation3 + $0x46] sm:$0x1] %vm422, %v987
        %1004 = vst.msk [vmem:[#allocation3 + $0x56] sm:$0x1] %vm422, %v988
        %1005 = vst.msk [vmem:[#allocation3 + $0x66] sm:$0x1] %vm422, %v989
        %1006 = vst.msk [vmem:[#allocation3 + $0x76] sm:$0x1] %vm422, %v990
        %1007 = vst.msk [vmem:[#allocation3 + $0x86] sm:$0x1] %vm422, %v991
        %1008 = vst.msk [vmem:[#allocation3 + $0x96] sm:$0x1] %vm422, %v992
        %1009 = vst.msk [vmem:[#allocation3 + $0xa6] sm:$0x1] %vm422, %v993
        %1010 = vst.msk [vmem:[#allocation3 + $0xb6] sm:$0x1] %vm422, %v994
        %1011 = vst.msk [vmem:[#allocation3 + $0xc6] sm:$0x1] %vm422, %v995
        %1012 = vst.msk [vmem:[#allocation3 + $0xd6] sm:$0x1] %vm422, %v996
        %1013 = vst.msk [vmem:[#allocation3 + $0xe6] sm:$0x1] %vm422, %v997
        %1014 = vst.msk [vmem:[#allocation3 + $0xf6] sm:$0x1] %vm422, %v998
        %v1015 = vld [vmem:[#allocation2 + $0x3] sm:$0x1]
        %v1016 = vld [vmem:[#allocation2 + $0xb] sm:$0x1]
        %v1017 = vld [vmem:[#allocation2 + $0x13] sm:$0x1]
        %v1018 = vld [vmem:[#allocation2 + $0x1b] sm:$0x1]
        %v1019 = vld [vmem:[#allocation2 + $0x23] sm:$0x1]
        %v1020 = vld [vmem:[#allocation2 + $0x2b] sm:$0x1]
        %v1021 = vld [vmem:[#allocation2 + $0x33] sm:$0x1]
        %v1022 = vld [vmem:[#allocation2 + $0x3b] sm:$0x1]
        %v1023 = vld [vmem:[#allocation2 + $0x43] sm:$0x1]
        %v1024 = vld [vmem:[#allocation2 + $0x4b] sm:$0x1]
        %v1025 = vld [vmem:[#allocation2 + $0x53] sm:$0x1]
        %v1026 = vld [vmem:[#allocation2 + $0x5b] sm:$0x1]
        %v1027 = vld [vmem:[#allocation2 + $0x63] sm:$0x1]
        %v1028 = vld [vmem:[#allocation2 + $0x6b] sm:$0x1]
        %v1029 = vld [vmem:[#allocation2 + $0x73] sm:$0x1]
        %v1030 = vld [vmem:[#allocation2 + $0x7b] sm:$0x1]
        %v1031 = vmul.f32 %v1015, 0.75
        %v1032 = vmul.f32 %v1016, 0.75
        %v1033 = vmul.f32 %v1017, 0.75
        %v1034 = vmul.f32 %v1018, 0.75
        %v1035 = vmul.f32 %v1019, 0.75
        %v1036 = vmul.f32 %v1020, 0.75
        %v1037 = vmul.f32 %v1021, 0.75
        %v1038 = vmul.f32 %v1022, 0.75
        %v1039 = vmul.f32 %v1023, 0.75
        %v1040 = vmul.f32 %v1024, 0.75
        %v1041 = vmul.f32 %v1025, 0.75
        %v1042 = vmul.f32 %v1026, 0.75
        %v1043 = vmul.f32 %v1027, 0.75
        %v1044 = vmul.f32 %v1028, 0.75
        %v1045 = vmul.f32 %v1029, 0.75
        %v1046 = vmul.f32 %v1030, 0.75
        %v1047 = vld [vmem:[#allocation2 + $0x4] sm:$0x1]
        %v1048 = vld [vmem:[#allocation2 + $0xc] sm:$0x1]
        %v1049 = vld [vmem:[#allocation2 + $0x14] sm:$0x1]
        %v1050 = vld [vmem:[#allocation2 + $0x1c] sm:$0x1]
        %v1051 = vld [vmem:[#allocation2 + $0x24] sm:$0x1]
        %v1052 = vld [vmem:[#allocation2 + $0x2c] sm:$0x1]
        %v1053 = vld [vmem:[#allocation2 + $0x34] sm:$0x1]
        %v1054 = vld [vmem:[#allocation2 + $0x3c] sm:$0x1]
        %v1055 = vld [vmem:[#allocation2 + $0x44] sm:$0x1]
        %v1056 = vld [vmem:[#allocation2 + $0x4c] sm:$0x1]
        %v1057 = vld [vmem:[#allocation2 + $0x54] sm:$0x1]
        %v1058 = vld [vmem:[#allocation2 + $0x5c] sm:$0x1]
        %v1059 = vld [vmem:[#allocation2 + $0x64] sm:$0x1]
        %v1060 = vld [vmem:[#allocation2 + $0x6c] sm:$0x1]
        %v1061 = vld [vmem:[#allocation2 + $0x74] sm:$0x1]
        %v1062 = vld [vmem:[#allocation2 + $0x7c] sm:$0x1]
        %v1063 = vmul.f32 %v1047, 0.25
        %v1064 = vmul.f32 %v1048, 0.25
        %v1065 = vmul.f32 %v1049, 0.25
        %v1066 = vmul.f32 %v1050, 0.25
        %v1067 = vmul.f32 %v1051, 0.25
        %v1068 = vmul.f32 %v1052, 0.25
        %v1069 = vmul.f32 %v1053, 0.25
        %v1070 = vmul.f32 %v1054, 0.25
        %v1071 = vmul.f32 %v1055, 0.25
        %v1072 = vmul.f32 %v1056, 0.25
        %v1073 = vmul.f32 %v1057, 0.25
        %v1074 = vmul.f32 %v1058, 0.25
        %v1075 = vmul.f32 %v1059, 0.25
        %v1076 = vmul.f32 %v1060, 0.25
        %v1077 = vmul.f32 %v1061, 0.25
        %v1078 = vmul.f32 %v1062, 0.25
        %v1079 = vadd.f32 %v1031, %v1063
        %v1080 = vadd.f32 %v1032, %v1064
        %v1081 = vadd.f32 %v1033, %v1065
        %v1082 = vadd.f32 %v1034, %v1066
        %v1083 = vadd.f32 %v1035, %v1067
        %v1084 = vadd.f32 %v1036, %v1068
        %v1085 = vadd.f32 %v1037, %v1069
        %v1086 = vadd.f32 %v1038, %v1070
        %v1087 = vadd.f32 %v1039, %v1071
        %v1088 = vadd.f32 %v1040, %v1072
        %v1089 = vadd.f32 %v1041, %v1073
        %v1090 = vadd.f32 %v1042, %v1074
        %v1091 = vadd.f32 %v1043, %v1075
        %v1092 = vadd.f32 %v1044, %v1076
        %v1093 = vadd.f32 %v1045, %v1077
        %v1094 = vadd.f32 %v1046, %v1078
        %1095 = vst.msk [vmem:[#allocation3 + $0x7] sm:$0x1] %vm422, %v1079
        %1096 = vst.msk [vmem:[#allocation3 + $0x17] sm:$0x1] %vm422, %v1080
        %1097 = vst.msk [vmem:[#allocation3 + $0x27] sm:$0x1] %vm422, %v1081
        %1098 = vst.msk [vmem:[#allocation3 + $0x37] sm:$0x1] %vm422, %v1082
        %1099 = vst.msk [vmem:[#allocation3 + $0x47] sm:$0x1] %vm422, %v1083
        %1100 = vst.msk [vmem:[#allocation3 + $0x57] sm:$0x1] %vm422, %v1084
        %1101 = vst.msk [vmem:[#allocation3 + $0x67] sm:$0x1] %vm422, %v1085
        %1102 = vst.msk [vmem:[#allocation3 + $0x77] sm:$0x1] %vm422, %v1086
        %1103 = vst.msk [vmem:[#allocation3 + $0x87] sm:$0x1] %vm422, %v1087
        %1104 = vst.msk [vmem:[#allocation3 + $0x97] sm:$0x1] %vm422, %v1088
        %1105 = vst.msk [vmem:[#allocation3 + $0xa7] sm:$0x1] %vm422, %v1089
        %1106 = vst.msk [vmem:[#allocation3 + $0xb7] sm:$0x1] %vm422, %v1090
        %1107 = vst.msk [vmem:[#allocation3 + $0xc7] sm:$0x1] %vm422, %v1091
        %1108 = vst.msk [vmem:[#allocation3 + $0xd7] sm:$0x1] %vm422, %v1092
        %1109 = vst.msk [vmem:[#allocation3 + $0xe7] sm:$0x1] %vm422, %v1093
        %1110 = vst.msk [vmem:[#allocation3 + $0xf7] sm:$0x1] %vm422, %v1094
        %v1111 = vld [vmem:[#allocation2 + $0x3] sm:$0x1]
        %v1112 = vld [vmem:[#allocation2 + $0xb] sm:$0x1]
        %v1113 = vld [vmem:[#allocation2 + $0x13] sm:$0x1]
        %v1114 = vld [vmem:[#allocation2 + $0x1b] sm:$0x1]
        %v1115 = vld [vmem:[#allocation2 + $0x23] sm:$0x1]
        %v1116 = vld [vmem:[#allocation2 + $0x2b] sm:$0x1]
        %v1117 = vld [vmem:[#allocation2 + $0x33] sm:$0x1]
        %v1118 = vld [vmem:[#allocation2 + $0x3b] sm:$0x1]
        %v1119 = vld [vmem:[#allocation2 + $0x43] sm:$0x1]
        %v1120 = vld [vmem:[#allocation2 + $0x4b] sm:$0x1]
        %v1121 = vld [vmem:[#allocation2 + $0x53] sm:$0x1]
        %v1122 = vld [vmem:[#allocation2 + $0x5b] sm:$0x1]
        %v1123 = vld [vmem:[#allocation2 + $0x63] sm:$0x1]
        %v1124 = vld [vmem:[#allocation2 + $0x6b] sm:$0x1]
        %v1125 = vld [vmem:[#allocation2 + $0x73] sm:$0x1]
        %v1126 = vld [vmem:[#allocation2 + $0x7b] sm:$0x1]
        %v1127 = vmul.f32 %v1111, 0.25
        %v1128 = vmul.f32 %v1112, 0.25
        %v1129 = vmul.f32 %v1113, 0.25
        %v1130 = vmul.f32 %v1114, 0.25
        %v1131 = vmul.f32 %v1115, 0.25
        %v1132 = vmul.f32 %v1116, 0.25
        %v1133 = vmul.f32 %v1117, 0.25
        %v1134 = vmul.f32 %v1118, 0.25
        %v1135 = vmul.f32 %v1119, 0.25
        %v1136 = vmul.f32 %v1120, 0.25
        %v1137 = vmul.f32 %v1121, 0.25
        %v1138 = vmul.f32 %v1122, 0.25
        %v1139 = vmul.f32 %v1123, 0.25
        %v1140 = vmul.f32 %v1124, 0.25
        %v1141 = vmul.f32 %v1125, 0.25
        %v1142 = vmul.f32 %v1126, 0.25
        %v1143 = vld [vmem:[#allocation2 + $0x4] sm:$0x1]
        %v1144 = vld [vmem:[#allocation2 + $0xc] sm:$0x1]
        %v1145 = vld [vmem:[#allocation2 + $0x14] sm:$0x1]
        %v1146 = vld [vmem:[#allocation2 + $0x1c] sm:$0x1]
        %v1147 = vld [vmem:[#allocation2 + $0x24] sm:$0x1]
        %v1148 = vld [vmem:[#allocation2 + $0x2c] sm:$0x1]
        %v1149 = vld [vmem:[#allocation2 + $0x34] sm:$0x1]
        %v1150 = vld [vmem:[#allocation2 + $0x3c] sm:$0x1]
        %v1151 = vld [vmem:[#allocation2 + $0x44] sm:$0x1]
        %v1152 = vld [vmem:[#allocation2 + $0x4c] sm:$0x1]
        %v1153 = vld [vmem:[#allocation2 + $0x54] sm:$0x1]
        %v1154 = vld [vmem:[#allocation2 + $0x5c] sm:$0x1]
        %v1155 = vld [vmem:[#allocation2 + $0x64] sm:$0x1]
        %v1156 = vld [vmem:[#allocation2 + $0x6c] sm:$0x1]
        %v1157 = vld [vmem:[#allocation2 + $0x74] sm:$0x1]
        %v1158 = vld [vmem:[#allocation2 + $0x7c] sm:$0x1]
        %v1159 = vmul.f32 %v1143, 0.75
        %v1160 = vmul.f32 %v1144, 0.75
        %v1161 = vmul.f32 %v1145, 0.75
        %v1162 = vmul.f32 %v1146, 0.75
        %v1163 = vmul.f32 %v1147, 0.75
        %v1164 = vmul.f32 %v1148, 0.75
        %v1165 = vmul.f32 %v1149, 0.75
        %v1166 = vmul.f32 %v1150, 0.75
        %v1167 = vmul.f32 %v1151, 0.75
        %v1168 = vmul.f32 %v1152, 0.75
        %v1169 = vmul.f32 %v1153, 0.75
        %v1170 = vmul.f32 %v1154, 0.75
        %v1171 = vmul.f32 %v1155, 0.75
        %v1172 = vmul.f32 %v1156, 0.75
        %v1173 = vmul.f32 %v1157, 0.75
        %v1174 = vmul.f32 %v1158, 0.75
        %v1175 = vadd.f32 %v1127, %v1159
        %v1176 = vadd.f32 %v1128, %v1160
        %v1177 = vadd.f32 %v1129, %v1161
        %v1178 = vadd.f32 %v1130, %v1162
        %v1179 = vadd.f32 %v1131, %v1163
        %v1180 = vadd.f32 %v1132, %v1164
        %v1181 = vadd.f32 %v1133, %v1165
        %v1182 = vadd.f32 %v1134, %v1166
        %v1183 = vadd.f32 %v1135, %v1167
        %v1184 = vadd.f32 %v1136, %v1168
        %v1185 = vadd.f32 %v1137, %v1169
        %v1186 = vadd.f32 %v1138, %v1170
        %v1187 = vadd.f32 %v1139, %v1171
        %v1188 = vadd.f32 %v1140, %v1172
        %v1189 = vadd.f32 %v1141, %v1173
        %v1190 = vadd.f32 %v1142, %v1174
        %1191 = vst.msk [vmem:[#allocation3 + $0x8] sm:$0x1] %vm422, %v1175
        %1192 = vst.msk [vmem:[#allocation3 + $0x18] sm:$0x1] %vm422, %v1176
        %1193 = vst.msk [vmem:[#allocation3 + $0x28] sm:$0x1] %vm422, %v1177
        %1194 = vst.msk [vmem:[#allocation3 + $0x38] sm:$0x1] %vm422, %v1178
        %1195 = vst.msk [vmem:[#allocation3 + $0x48] sm:$0x1] %vm422, %v1179
        %1196 = vst.msk [vmem:[#allocation3 + $0x58] sm:$0x1] %vm422, %v1180
        %1197 = vst.msk [vmem:[#allocation3 + $0x68] sm:$0x1] %vm422, %v1181
        %1198 = vst.msk [vmem:[#allocation3 + $0x78] sm:$0x1] %vm422, %v1182
        %1199 = vst.msk [vmem:[#allocation3 + $0x88] sm:$0x1] %vm422, %v1183
        %1200 = vst.msk [vmem:[#allocation3 + $0x98] sm:$0x1] %vm422, %v1184
        %1201 = vst.msk [vmem:[#allocation3 + $0xa8] sm:$0x1] %vm422, %v1185
        %1202 = vst.msk [vmem:[#allocation3 + $0xb8] sm:$0x1] %vm422, %v1186
        %1203 = vst.msk [vmem:[#allocation3 + $0xc8] sm:$0x1] %vm422, %v1187
        %1204 = vst.msk [vmem:[#allocation3 + $0xd8] sm:$0x1] %vm422, %v1188
        %1205 = vst.msk [vmem:[#allocation3 + $0xe8] sm:$0x1] %vm422, %v1189
        %1206 = vst.msk [vmem:[#allocation3 + $0xf8] sm:$0x1] %vm422, %v1190
        %v1207 = vld [vmem:[#allocation2 + $0x4] sm:$0x1]
        %v1208 = vld [vmem:[#allocation2 + $0xc] sm:$0x1]
        %v1209 = vld [vmem:[#allocation2 + $0x14] sm:$0x1]
        %v1210 = vld [vmem:[#allocation2 + $0x1c] sm:$0x1]
        %v1211 = vld [vmem:[#allocation2 + $0x24] sm:$0x1]
        %v1212 = vld [vmem:[#allocation2 + $0x2c] sm:$0x1]
        %v1213 = vld [vmem:[#allocation2 + $0x34] sm:$0x1]
        %v1214 = vld [vmem:[#allocation2 + $0x3c] sm:$0x1]
        %v1215 = vld [vmem:[#allocation2 + $0x44] sm:$0x1]
        %v1216 = vld [vmem:[#allocation2 + $0x4c] sm:$0x1]
        %v1217 = vld [vmem:[#allocation2 + $0x54] sm:$0x1]
        %v1218 = vld [vmem:[#allocation2 + $0x5c] sm:$0x1]
        %v1219 = vld [vmem:[#allocation2 + $0x64] sm:$0x1]
        %v1220 = vld [vmem:[#allocation2 + $0x6c] sm:$0x1]
        %v1221 = vld [vmem:[#allocation2 + $0x74] sm:$0x1]
        %v1222 = vld [vmem:[#allocation2 + $0x7c] sm:$0x1]
        %v1223 = vmul.f32 %v1207, 0.75
        %v1224 = vmul.f32 %v1208, 0.75
        %v1225 = vmul.f32 %v1209, 0.75
        %v1226 = vmul.f32 %v1210, 0.75
        %v1227 = vmul.f32 %v1211, 0.75
        %v1228 = vmul.f32 %v1212, 0.75
        %v1229 = vmul.f32 %v1213, 0.75
        %v1230 = vmul.f32 %v1214, 0.75
        %v1231 = vmul.f32 %v1215, 0.75
        %v1232 = vmul.f32 %v1216, 0.75
        %v1233 = vmul.f32 %v1217, 0.75
        %v1234 = vmul.f32 %v1218, 0.75
        %v1235 = vmul.f32 %v1219, 0.75
        %v1236 = vmul.f32 %v1220, 0.75
        %v1237 = vmul.f32 %v1221, 0.75
        %v1238 = vmul.f32 %v1222, 0.75
        %v1239 = vld [vmem:[#allocation2 + $0x5] sm:$0x1]
        %v1240 = vld [vmem:[#allocation2 + $0xd] sm:$0x1]
        %v1241 = vld [vmem:[#allocation2 + $0x15] sm:$0x1]
        %v1242 = vld [vmem:[#allocation2 + $0x1d] sm:$0x1]
        %v1243 = vld [vmem:[#allocation2 + $0x25] sm:$0x1]
        %v1244 = vld [vmem:[#allocation2 + $0x2d] sm:$0x1]
        %v1245 = vld [vmem:[#allocation2 + $0x35] sm:$0x1]
        %v1246 = vld [vmem:[#allocation2 + $0x3d] sm:$0x1]
        %v1247 = vld [vmem:[#allocation2 + $0x45] sm:$0x1]
        %v1248 = vld [vmem:[#allocation2 + $0x4d] sm:$0x1]
        %v1249 = vld [vmem:[#allocation2 + $0x55] sm:$0x1]
        %v1250 = vld [vmem:[#allocation2 + $0x5d] sm:$0x1]
        %v1251 = vld [vmem:[#allocation2 + $0x65] sm:$0x1]
        %v1252 = vld [vmem:[#allocation2 + $0x6d] sm:$0x1]
        %v1253 = vld [vmem:[#allocation2 + $0x75] sm:$0x1]
        %v1254 = vld [vmem:[#allocation2 + $0x7d] sm:$0x1]
        %v1255 = vmul.f32 %v1239, 0.25
        %v1256 = vmul.f32 %v1240, 0.25
        %v1257 = vmul.f32 %v1241, 0.25
        %v1258 = vmul.f32 %v1242, 0.25
        %v1259 = vmul.f32 %v1243, 0.25
        %v1260 = vmul.f32 %v1244, 0.25
        %v1261 = vmul.f32 %v1245, 0.25
        %v1262 = vmul.f32 %v1246, 0.25
        %v1263 = vmul.f32 %v1247, 0.25
        %v1264 = vmul.f32 %v1248, 0.25
        %v1265 = vmul.f32 %v1249, 0.25
        %v1266 = vmul.f32 %v1250, 0.25
        %v1267 = vmul.f32 %v1251, 0.25
        %v1268 = vmul.f32 %v1252, 0.25
        %v1269 = vmul.f32 %v1253, 0.25
        %v1270 = vmul.f32 %v1254, 0.25
        %v1271 = vadd.f32 %v1223, %v1255
        %v1272 = vadd.f32 %v1224, %v1256
        %v1273 = vadd.f32 %v1225, %v1257
        %v1274 = vadd.f32 %v1226, %v1258
        %v1275 = vadd.f32 %v1227, %v1259
        %v1276 = vadd.f32 %v1228, %v1260
        %v1277 = vadd.f32 %v1229, %v1261
        %v1278 = vadd.f32 %v1230, %v1262
        %v1279 = vadd.f32 %v1231, %v1263
        %v1280 = vadd.f32 %v1232, %v1264
        %v1281 = vadd.f32 %v1233, %v1265
        %v1282 = vadd.f32 %v1234, %v1266
        %v1283 = vadd.f32 %v1235, %v1267
        %v1284 = vadd.f32 %v1236, %v1268
        %v1285 = vadd.f32 %v1237, %v1269
        %v1286 = vadd.f32 %v1238, %v1270
        %1287 = vst.msk [vmem:[#allocation3 + $0x9] sm:$0x1] %vm422, %v1271
        %1288 = vst.msk [vmem:[#allocation3 + $0x19] sm:$0x1] %vm422, %v1272
        %1289 = vst.msk [vmem:[#allocation3 + $0x29] sm:$0x1] %vm422, %v1273
        %1290 = vst.msk [vmem:[#allocation3 + $0x39] sm:$0x1] %vm422, %v1274
        %1291 = vst.msk [vmem:[#allocation3 + $0x49] sm:$0x1] %vm422, %v1275
        %1292 = vst.msk [vmem:[#allocation3 + $0x59] sm:$0x1] %vm422, %v1276
        %1293 = vst.msk [vmem:[#allocation3 + $0x69] sm:$0x1] %vm422, %v1277
        %1294 = vst.msk [vmem:[#allocation3 + $0x79] sm:$0x1] %vm422, %v1278
        %1295 = vst.msk [vmem:[#allocation3 + $0x89] sm:$0x1] %vm422, %v1279
        %1296 = vst.msk [vmem:[#allocation3 + $0x99] sm:$0x1] %vm422, %v1280
        %1297 = vst.msk [vmem:[#allocation3 + $0xa9] sm:$0x1] %vm422, %v1281
        %1298 = vst.msk [vmem:[#allocation3 + $0xb9] sm:$0x1] %vm422, %v1282
        %1299 = vst.msk [vmem:[#allocation3 + $0xc9] sm:$0x1] %vm422, %v1283
        %1300 = vst.msk [vmem:[#allocation3 + $0xd9] sm:$0x1] %vm422, %v1284
        %1301 = vst.msk [vmem:[#allocation3 + $0xe9] sm:$0x1] %vm422, %v1285
        %1302 = vst.msk [vmem:[#allocation3 + $0xf9] sm:$0x1] %vm422, %v1286
        %v1303 = vld [vmem:[#allocation2 + $0x4] sm:$0x1]
        %v1304 = vld [vmem:[#allocation2 + $0xc] sm:$0x1]
        %v1305 = vld [vmem:[#allocation2 + $0x14] sm:$0x1]
        %v1306 = vld [vmem:[#allocation2 + $0x1c] sm:$0x1]
        %v1307 = vld [vmem:[#allocation2 + $0x24] sm:$0x1]
        %v1308 = vld [vmem:[#allocation2 + $0x2c] sm:$0x1]
        %v1309 = vld [vmem:[#allocation2 + $0x34] sm:$0x1]
        %v1310 = vld [vmem:[#allocation2 + $0x3c] sm:$0x1]
        %v1311 = vld [vmem:[#allocation2 + $0x44] sm:$0x1]
        %v1312 = vld [vmem:[#allocation2 + $0x4c] sm:$0x1]
        %v1313 = vld [vmem:[#allocation2 + $0x54] sm:$0x1]
        %v1314 = vld [vmem:[#allocation2 + $0x5c] sm:$0x1]
        %v1315 = vld [vmem:[#allocation2 + $0x64] sm:$0x1]
        %v1316 = vld [vmem:[#allocation2 + $0x6c] sm:$0x1]
        %v1317 = vld [vmem:[#allocation2 + $0x74] sm:$0x1]
        %v1318 = vld [vmem:[#allocation2 + $0x7c] sm:$0x1]
        %v1319 = vmul.f32 %v1303, 0.25
        %v1320 = vmul.f32 %v1304, 0.25
        %v1321 = vmul.f32 %v1305, 0.25
        %v1322 = vmul.f32 %v1306, 0.25
        %v1323 = vmul.f32 %v1307, 0.25
        %v1324 = vmul.f32 %v1308, 0.25
        %v1325 = vmul.f32 %v1309, 0.25
        %v1326 = vmul.f32 %v1310, 0.25
        %v1327 = vmul.f32 %v1311, 0.25
        %v1328 = vmul.f32 %v1312, 0.25
        %v1329 = vmul.f32 %v1313, 0.25
        %v1330 = vmul.f32 %v1314, 0.25
        %v1331 = vmul.f32 %v1315, 0.25
        %v1332 = vmul.f32 %v1316, 0.25
        %v1333 = vmul.f32 %v1317, 0.25
        %v1334 = vmul.f32 %v1318, 0.25
        %v1335 = vld [vmem:[#allocation2 + $0x5] sm:$0x1]
        %v1336 = vld [vmem:[#allocation2 + $0xd] sm:$0x1]
        %v1337 = vld [vmem:[#allocation2 + $0x15] sm:$0x1]
        %v1338 = vld [vmem:[#allocation2 + $0x1d] sm:$0x1]
        %v1339 = vld [vmem:[#allocation2 + $0x25] sm:$0x1]
        %v1340 = vld [vmem:[#allocation2 + $0x2d] sm:$0x1]
        %v1341 = vld [vmem:[#allocation2 + $0x35] sm:$0x1]
        %v1342 = vld [vmem:[#allocation2 + $0x3d] sm:$0x1]
        %v1343 = vld [vmem:[#allocation2 + $0x45] sm:$0x1]
        %v1344 = vld [vmem:[#allocation2 + $0x4d] sm:$0x1]
        %v1345 = vld [vmem:[#allocation2 + $0x55] sm:$0x1]
        %v1346 = vld [vmem:[#allocation2 + $0x5d] sm:$0x1]
        %v1347 = vld [vmem:[#allocation2 + $0x65] sm:$0x1]
        %v1348 = vld [vmem:[#allocation2 + $0x6d] sm:$0x1]
        %v1349 = vld [vmem:[#allocation2 + $0x75] sm:$0x1]
        %v1350 = vld [vmem:[#allocation2 + $0x7d] sm:$0x1]
        %v1351 = vmul.f32 %v1335, 0.75
        %v1352 = vmul.f32 %v1336, 0.75
        %v1353 = vmul.f32 %v1337, 0.75
        %v1354 = vmul.f32 %v1338, 0.75
        %v1355 = vmul.f32 %v1339, 0.75
        %v1356 = vmul.f32 %v1340, 0.75
        %v1357 = vmul.f32 %v1341, 0.75
        %v1358 = vmul.f32 %v1342, 0.75
        %v1359 = vmul.f32 %v1343, 0.75
        %v1360 = vmul.f32 %v1344, 0.75
        %v1361 = vmul.f32 %v1345, 0.75
        %v1362 = vmul.f32 %v1346, 0.75
        %v1363 = vmul.f32 %v1347, 0.75
        %v1364 = vmul.f32 %v1348, 0.75
        %v1365 = vmul.f32 %v1349, 0.75
        %v1366 = vmul.f32 %v1350, 0.75
        %v1367 = vadd.f32 %v1319, %v1351
        %v1368 = vadd.f32 %v1320, %v1352
        %v1369 = vadd.f32 %v1321, %v1353
        %v1370 = vadd.f32 %v1322, %v1354
        %v1371 = vadd.f32 %v1323, %v1355
        %v1372 = vadd.f32 %v1324, %v1356
        %v1373 = vadd.f32 %v1325, %v1357
        %v1374 = vadd.f32 %v1326, %v1358
        %v1375 = vadd.f32 %v1327, %v1359
        %v1376 = vadd.f32 %v1328, %v1360
        %v1377 = vadd.f32 %v1329, %v1361
        %v1378 = vadd.f32 %v1330, %v1362
        %v1379 = vadd.f32 %v1331, %v1363
        %v1380 = vadd.f32 %v1332, %v1364
        %v1381 = vadd.f32 %v1333, %v1365
        %v1382 = vadd.f32 %v1334, %v1366
        %1383 = vst.msk [vmem:[#allocation3 + $0xa] sm:$0x1] %vm422, %v1367
        %1384 = vst.msk [vmem:[#allocation3 + $0x1a] sm:$0x1] %vm422, %v1368
        %1385 = vst.msk [vmem:[#allocation3 + $0x2a] sm:$0x1] %vm422, %v1369
        %1386 = vst.msk [vmem:[#allocation3 + $0x3a] sm:$0x1] %vm422, %v1370
        %1387 = vst.msk [vmem:[#allocation3 + $0x4a] sm:$0x1] %vm422, %v1371
        %1388 = vst.msk [vmem:[#allocation3 + $0x5a] sm:$0x1] %vm422, %v1372
        %1389 = vst.msk [vmem:[#allocation3 + $0x6a] sm:$0x1] %vm422, %v1373
        %1390 = vst.msk [vmem:[#allocation3 + $0x7a] sm:$0x1] %vm422, %v1374
        %1391 = vst.msk [vmem:[#allocation3 + $0x8a] sm:$0x1] %vm422, %v1375
        %1392 = vst.msk [vmem:[#allocation3 + $0x9a] sm:$0x1] %vm422, %v1376
        %1393 = vst.msk [vmem:[#allocation3 + $0xaa] sm:$0x1] %vm422, %v1377
        %1394 = vst.msk [vmem:[#allocation3 + $0xba] sm:$0x1] %vm422, %v1378
        %1395 = vst.msk [vmem:[#allocation3 + $0xca] sm:$0x1] %vm422, %v1379
        %1396 = vst.msk [vmem:[#allocation3 + $0xda] sm:$0x1] %vm422, %v1380
        %1397 = vst.msk [vmem:[#allocation3 + $0xea] sm:$0x1] %vm422, %v1381
        %1398 = vst.msk [vmem:[#allocation3 + $0xfa] sm:$0x1] %vm422, %v1382
        %v1399 = vld [vmem:[#allocation2 + $0x5] sm:$0x1]
        %v1400 = vld [vmem:[#allocation2 + $0xd] sm:$0x1]
        %v1401 = vld [vmem:[#allocation2 + $0x15] sm:$0x1]
        %v1402 = vld [vmem:[#allocation2 + $0x1d] sm:$0x1]
        %v1403 = vld [vmem:[#allocation2 + $0x25] sm:$0x1]
        %v1404 = vld [vmem:[#allocation2 + $0x2d] sm:$0x1]
        %v1405 = vld [vmem:[#allocation2 + $0x35] sm:$0x1]
        %v1406 = vld [vmem:[#allocation2 + $0x3d] sm:$0x1]
        %v1407 = vld [vmem:[#allocation2 + $0x45] sm:$0x1]
        %v1408 = vld [vmem:[#allocation2 + $0x4d] sm:$0x1]
        %v1409 = vld [vmem:[#allocation2 + $0x55] sm:$0x1]
        %v1410 = vld [vmem:[#allocation2 + $0x5d] sm:$0x1]
        %v1411 = vld [vmem:[#allocation2 + $0x65] sm:$0x1]
        %v1412 = vld [vmem:[#allocation2 + $0x6d] sm:$0x1]
        %v1413 = vld [vmem:[#allocation2 + $0x75] sm:$0x1]
        %v1414 = vld [vmem:[#allocation2 + $0x7d] sm:$0x1]
        %v1415 = vmul.f32 %v1399, 0.75
        %v1416 = vmul.f32 %v1400, 0.75
        %v1417 = vmul.f32 %v1401, 0.75
        %v1418 = vmul.f32 %v1402, 0.75
        %v1419 = vmul.f32 %v1403, 0.75
        %v1420 = vmul.f32 %v1404, 0.75
        %v1421 = vmul.f32 %v1405, 0.75
        %v1422 = vmul.f32 %v1406, 0.75
        %v1423 = vmul.f32 %v1407, 0.75
        %v1424 = vmul.f32 %v1408, 0.75
        %v1425 = vmul.f32 %v1409, 0.75
        %v1426 = vmul.f32 %v1410, 0.75
        %v1427 = vmul.f32 %v1411, 0.75
        %v1428 = vmul.f32 %v1412, 0.75
        %v1429 = vmul.f32 %v1413, 0.75
        %v1430 = vmul.f32 %v1414, 0.75
        %v1431 = vld [vmem:[#allocation2 + $0x6] sm:$0x1]
        %v1432 = vld [vmem:[#allocation2 + $0xe] sm:$0x1]
        %v1433 = vld [vmem:[#allocation2 + $0x16] sm:$0x1]
        %v1434 = vld [vmem:[#allocation2 + $0x1e] sm:$0x1]
        %v1435 = vld [vmem:[#allocation2 + $0x26] sm:$0x1]
        %v1436 = vld [vmem:[#allocation2 + $0x2e] sm:$0x1]
        %v1437 = vld [vmem:[#allocation2 + $0x36] sm:$0x1]
        %v1438 = vld [vmem:[#allocation2 + $0x3e] sm:$0x1]
        %v1439 = vld [vmem:[#allocation2 + $0x46] sm:$0x1]
        %v1440 = vld [vmem:[#allocation2 + $0x4e] sm:$0x1]
        %v1441 = vld [vmem:[#allocation2 + $0x56] sm:$0x1]
        %v1442 = vld [vmem:[#allocation2 + $0x5e] sm:$0x1]
        %v1443 = vld [vmem:[#allocation2 + $0x66] sm:$0x1]
        %v1444 = vld [vmem:[#allocation2 + $0x6e] sm:$0x1]
        %v1445 = vld [vmem:[#allocation2 + $0x76] sm:$0x1]
        %v1446 = vld [vmem:[#allocation2 + $0x7e] sm:$0x1]
        %v1447 = vmul.f32 %v1431, 0.25
        %v1448 = vmul.f32 %v1432, 0.25
        %v1449 = vmul.f32 %v1433, 0.25
        %v1450 = vmul.f32 %v1434, 0.25
        %v1451 = vmul.f32 %v1435, 0.25
        %v1452 = vmul.f32 %v1436, 0.25
        %v1453 = vmul.f32 %v1437, 0.25
        %v1454 = vmul.f32 %v1438, 0.25
        %v1455 = vmul.f32 %v1439, 0.25
        %v1456 = vmul.f32 %v1440, 0.25
        %v1457 = vmul.f32 %v1441, 0.25
        %v1458 = vmul.f32 %v1442, 0.25
        %v1459 = vmul.f32 %v1443, 0.25
        %v1460 = vmul.f32 %v1444, 0.25
        %v1461 = vmul.f32 %v1445, 0.25
        %v1462 = vmul.f32 %v1446, 0.25
        %v1463 = vadd.f32 %v1415, %v1447
        %v1464 = vadd.f32 %v1416, %v1448
        %v1465 = vadd.f32 %v1417, %v1449
        %v1466 = vadd.f32 %v1418, %v1450
        %v1467 = vadd.f32 %v1419, %v1451
        %v1468 = vadd.f32 %v1420, %v1452
        %v1469 = vadd.f32 %v1421, %v1453
        %v1470 = vadd.f32 %v1422, %v1454
        %v1471 = vadd.f32 %v1423, %v1455
        %v1472 = vadd.f32 %v1424, %v1456
        %v1473 = vadd.f32 %v1425, %v1457
        %v1474 = vadd.f32 %v1426, %v1458
        %v1475 = vadd.f32 %v1427, %v1459
        %v1476 = vadd.f32 %v1428, %v1460
        %v1477 = vadd.f32 %v1429, %v1461
        %v1478 = vadd.f32 %v1430, %v1462
        %1479 = vst.msk [vmem:[#allocation3 + $0xb] sm:$0x1] %vm422, %v1463
        %1480 = vst.msk [vmem:[#allocation3 + $0x1b] sm:$0x1] %vm422, %v1464
        %1481 = vst.msk [vmem:[#allocation3 + $0x2b] sm:$0x1] %vm422, %v1465
        %1482 = vst.msk [vmem:[#allocation3 + $0x3b] sm:$0x1] %vm422, %v1466
        %1483 = vst.msk [vmem:[#allocation3 + $0x4b] sm:$0x1] %vm422, %v1467
        %1484 = vst.msk [vmem:[#allocation3 + $0x5b] sm:$0x1] %vm422, %v1468
        %1485 = vst.msk [vmem:[#allocation3 + $0x6b] sm:$0x1] %vm422, %v1469
        %1486 = vst.msk [vmem:[#allocation3 + $0x7b] sm:$0x1] %vm422, %v1470
        %1487 = vst.msk [vmem:[#allocation3 + $0x8b] sm:$0x1] %vm422, %v1471
        %1488 = vst.msk [vmem:[#allocation3 + $0x9b] sm:$0x1] %vm422, %v1472
        %1489 = vst.msk [vmem:[#allocation3 + $0xab] sm:$0x1] %vm422, %v1473
        %1490 = vst.msk [vmem:[#allocation3 + $0xbb] sm:$0x1] %vm422, %v1474
        %1491 = vst.msk [vmem:[#allocation3 + $0xcb] sm:$0x1] %vm422, %v1475
        %1492 = vst.msk [vmem:[#allocation3 + $0xdb] sm:$0x1] %vm422, %v1476
        %1493 = vst.msk [vmem:[#allocation3 + $0xeb] sm:$0x1] %vm422, %v1477
        %1494 = vst.msk [vmem:[#allocation3 + $0xfb] sm:$0x1] %vm422, %v1478
        %v1495 = vld [vmem:[#allocation2 + $0x5] sm:$0x1]
        %v1496 = vld [vmem:[#allocation2 + $0xd] sm:$0x1]
        %v1497 = vld [vmem:[#allocation2 + $0x15] sm:$0x1]
        %v1498 = vld [vmem:[#allocation2 + $0x1d] sm:$0x1]
        %v1499 = vld [vmem:[#allocation2 + $0x25] sm:$0x1]
        %v1500 = vld [vmem:[#allocation2 + $0x2d] sm:$0x1]
        %v1501 = vld [vmem:[#allocation2 + $0x35] sm:$0x1]
        %v1502 = vld [vmem:[#allocation2 + $0x3d] sm:$0x1]
        %v1503 = vld [vmem:[#allocation2 + $0x45] sm:$0x1]
        %v1504 = vld [vmem:[#allocation2 + $0x4d] sm:$0x1]
        %v1505 = vld [vmem:[#allocation2 + $0x55] sm:$0x1]
        %v1506 = vld [vmem:[#allocation2 + $0x5d] sm:$0x1]
        %v1507 = vld [vmem:[#allocation2 + $0x65] sm:$0x1]
        %v1508 = vld [vmem:[#allocation2 + $0x6d] sm:$0x1]
        %v1509 = vld [vmem:[#allocation2 + $0x75] sm:$0x1]
        %v1510 = vld [vmem:[#allocation2 + $0x7d] sm:$0x1]
        %v1511 = vmul.f32 %v1495, 0.25
        %v1512 = vmul.f32 %v1496, 0.25
        %v1513 = vmul.f32 %v1497, 0.25
        %v1514 = vmul.f32 %v1498, 0.25
        %v1515 = vmul.f32 %v1499, 0.25
        %v1516 = vmul.f32 %v1500, 0.25
        %v1517 = vmul.f32 %v1501, 0.25
        %v1518 = vmul.f32 %v1502, 0.25
        %v1519 = vmul.f32 %v1503, 0.25
        %v1520 = vmul.f32 %v1504, 0.25
        %v1521 = vmul.f32 %v1505, 0.25
        %v1522 = vmul.f32 %v1506, 0.25
        %v1523 = vmul.f32 %v1507, 0.25
        %v1524 = vmul.f32 %v1508, 0.25
        %v1525 = vmul.f32 %v1509, 0.25
        %v1526 = vmul.f32 %v1510, 0.25
        %v1527 = vld [vmem:[#allocation2 + $0x6] sm:$0x1]
        %v1528 = vld [vmem:[#allocation2 + $0xe] sm:$0x1]
        %v1529 = vld [vmem:[#allocation2 + $0x16] sm:$0x1]
        %v1530 = vld [vmem:[#allocation2 + $0x1e] sm:$0x1]
        %v1531 = vld [vmem:[#allocation2 + $0x26] sm:$0x1]
        %v1532 = vld [vmem:[#allocation2 + $0x2e] sm:$0x1]
        %v1533 = vld [vmem:[#allocation2 + $0x36] sm:$0x1]
        %v1534 = vld [vmem:[#allocation2 + $0x3e] sm:$0x1]
        %v1535 = vld [vmem:[#allocation2 + $0x46] sm:$0x1]
        %v1536 = vld [vmem:[#allocation2 + $0x4e] sm:$0x1]
        %v1537 = vld [vmem:[#allocation2 + $0x56] sm:$0x1]
        %v1538 = vld [vmem:[#allocation2 + $0x5e] sm:$0x1]
        %v1539 = vld [vmem:[#allocation2 + $0x66] sm:$0x1]
        %v1540 = vld [vmem:[#allocation2 + $0x6e] sm:$0x1]
        %v1541 = vld [vmem:[#allocation2 + $0x76] sm:$0x1]
        %v1542 = vld [vmem:[#allocation2 + $0x7e] sm:$0x1]
        %v1543 = vmul.f32 %v1527, 0.75
        %v1544 = vmul.f32 %v1528, 0.75
        %v1545 = vmul.f32 %v1529, 0.75
        %v1546 = vmul.f32 %v1530, 0.75
        %v1547 = vmul.f32 %v1531, 0.75
        %v1548 = vmul.f32 %v1532, 0.75
        %v1549 = vmul.f32 %v1533, 0.75
        %v1550 = vmul.f32 %v1534, 0.75
        %v1551 = vmul.f32 %v1535, 0.75
        %v1552 = vmul.f32 %v1536, 0.75
        %v1553 = vmul.f32 %v1537, 0.75
        %v1554 = vmul.f32 %v1538, 0.75
        %v1555 = vmul.f32 %v1539, 0.75
        %v1556 = vmul.f32 %v1540, 0.75
        %v1557 = vmul.f32 %v1541, 0.75
        %v1558 = vmul.f32 %v1542, 0.75
        %v1559 = vadd.f32 %v1511, %v1543
        %v1560 = vadd.f32 %v1512, %v1544
        %v1561 = vadd.f32 %v1513, %v1545
        %v1562 = vadd.f32 %v1514, %v1546
        %v1563 = vadd.f32 %v1515, %v1547
        %v1564 = vadd.f32 %v1516, %v1548
        %v1565 = vadd.f32 %v1517, %v1549
        %v1566 = vadd.f32 %v1518, %v1550
        %v1567 = vadd.f32 %v1519, %v1551
        %v1568 = vadd.f32 %v1520, %v1552
        %v1569 = vadd.f32 %v1521, %v1553
        %v1570 = vadd.f32 %v1522, %v1554
        %v1571 = vadd.f32 %v1523, %v1555
        %v1572 = vadd.f32 %v1524, %v1556
        %v1573 = vadd.f32 %v1525, %v1557
        %v1574 = vadd.f32 %v1526, %v1558
        %1575 = vst.msk [vmem:[#allocation3 + $0xc] sm:$0x1] %vm422, %v1559
        %1576 = vst.msk [vmem:[#allocation3 + $0x1c] sm:$0x1] %vm422, %v1560
        %1577 = vst.msk [vmem:[#allocation3 + $0x2c] sm:$0x1] %vm422, %v1561
        %1578 = vst.msk [vmem:[#allocation3 + $0x3c] sm:$0x1] %vm422, %v1562
        %1579 = vst.msk [vmem:[#allocation3 + $0x4c] sm:$0x1] %vm422, %v1563
        %1580 = vst.msk [vmem:[#allocation3 + $0x5c] sm:$0x1] %vm422, %v1564
        %1581 = vst.msk [vmem:[#allocation3 + $0x6c] sm:$0x1] %vm422, %v1565
        %1582 = vst.msk [vmem:[#allocation3 + $0x7c] sm:$0x1] %vm422, %v1566
        %1583 = vst.msk [vmem:[#allocation3 + $0x8c] sm:$0x1] %vm422, %v1567
        %1584 = vst.msk [vmem:[#allocation3 + $0x9c] sm:$0x1] %vm422, %v1568
        %1585 = vst.msk [vmem:[#allocation3 + $0xac] sm:$0x1] %vm422, %v1569
        %1586 = vst.msk [vmem:[#allocation3 + $0xbc] sm:$0x1] %vm422, %v1570
        %1587 = vst.msk [vmem:[#allocation3 + $0xcc] sm:$0x1] %vm422, %v1571
        %1588 = vst.msk [vmem:[#allocation3 + $0xdc] sm:$0x1] %vm422, %v1572
        %1589 = vst.msk [vmem:[#allocation3 + $0xec] sm:$0x1] %vm422, %v1573
        %1590 = vst.msk [vmem:[#allocation3 + $0xfc] sm:$0x1] %vm422, %v1574
        %v1591 = vld [vmem:[#allocation2 + $0x6] sm:$0x1]
        %v1592 = vld [vmem:[#allocation2 + $0xe] sm:$0x1]
        %v1593 = vld [vmem:[#allocation2 + $0x16] sm:$0x1]
        %v1594 = vld [vmem:[#allocation2 + $0x1e] sm:$0x1]
        %v1595 = vld [vmem:[#allocation2 + $0x26] sm:$0x1]
        %v1596 = vld [vmem:[#allocation2 + $0x2e] sm:$0x1]
        %v1597 = vld [vmem:[#allocation2 + $0x36] sm:$0x1]
        %v1598 = vld [vmem:[#allocation2 + $0x3e] sm:$0x1]
        %v1599 = vld [vmem:[#allocation2 + $0x46] sm:$0x1]
        %v1600 = vld [vmem:[#allocation2 + $0x4e] sm:$0x1]
        %v1601 = vld [vmem:[#allocation2 + $0x56] sm:$0x1]
        %v1602 = vld [vmem:[#allocation2 + $0x5e] sm:$0x1]
        %v1603 = vld [vmem:[#allocation2 + $0x66] sm:$0x1]
        %v1604 = vld [vmem:[#allocation2 + $0x6e] sm:$0x1]
        %v1605 = vld [vmem:[#allocation2 + $0x76] sm:$0x1]
        %v1606 = vld [vmem:[#allocation2 + $0x7e] sm:$0x1]
        %v1607 = vmul.f32 %v1591, 0.75
        %v1608 = vmul.f32 %v1592, 0.75
        %v1609 = vmul.f32 %v1593, 0.75
        %v1610 = vmul.f32 %v1594, 0.75
        %v1611 = vmul.f32 %v1595, 0.75
        %v1612 = vmul.f32 %v1596, 0.75
        %v1613 = vmul.f32 %v1597, 0.75
        %v1614 = vmul.f32 %v1598, 0.75
        %v1615 = vmul.f32 %v1599, 0.75
        %v1616 = vmul.f32 %v1600, 0.75
        %v1617 = vmul.f32 %v1601, 0.75
        %v1618 = vmul.f32 %v1602, 0.75
        %v1619 = vmul.f32 %v1603, 0.75
        %v1620 = vmul.f32 %v1604, 0.75
        %v1621 = vmul.f32 %v1605, 0.75
        %v1622 = vmul.f32 %v1606, 0.75
        %v1623 = vld [vmem:[#allocation2 + $0x7] sm:$0x1]
        %v1624 = vld [vmem:[#allocation2 + $0xf] sm:$0x1]
        %v1625 = vld [vmem:[#allocation2 + $0x17] sm:$0x1]
        %v1626 = vld [vmem:[#allocation2 + $0x1f] sm:$0x1]
        %v1627 = vld [vmem:[#allocation2 + $0x27] sm:$0x1]
        %v1628 = vld [vmem:[#allocation2 + $0x2f] sm:$0x1]
        %v1629 = vld [vmem:[#allocation2 + $0x37] sm:$0x1]
        %v1630 = vld [vmem:[#allocation2 + $0x3f] sm:$0x1]
        %v1631 = vld [vmem:[#allocation2 + $0x47] sm:$0x1]
        %v1632 = vld [vmem:[#allocation2 + $0x4f] sm:$0x1]
        %v1633 = vld [vmem:[#allocation2 + $0x57] sm:$0x1]
        %v1634 = vld [vmem:[#allocation2 + $0x5f] sm:$0x1]
        %v1635 = vld [vmem:[#allocation2 + $0x67] sm:$0x1]
        %v1636 = vld [vmem:[#allocation2 + $0x6f] sm:$0x1]
        %v1637 = vld [vmem:[#allocation2 + $0x77] sm:$0x1]
        %v1638 = vld [vmem:[#allocation2 + $0x7f] sm:$0x1]
        %v1639 = vmul.f32 %v1623, 0.25
        %v1640 = vmul.f32 %v1624, 0.25
        %v1641 = vmul.f32 %v1625, 0.25
        %v1642 = vmul.f32 %v1626, 0.25
        %v1643 = vmul.f32 %v1627, 0.25
        %v1644 = vmul.f32 %v1628, 0.25
        %v1645 = vmul.f32 %v1629, 0.25
        %v1646 = vmul.f32 %v1630, 0.25
        %v1647 = vmul.f32 %v1631, 0.25
        %v1648 = vmul.f32 %v1632, 0.25
        %v1649 = vmul.f32 %v1633, 0.25
        %v1650 = vmul.f32 %v1634, 0.25
        %v1651 = vmul.f32 %v1635, 0.25
        %v1652 = vmul.f32 %v1636, 0.25
        %v1653 = vmul.f32 %v1637, 0.25
        %v1654 = vmul.f32 %v1638, 0.25
        %v1655 = vadd.f32 %v1607, %v1639
        %v1656 = vadd.f32 %v1608, %v1640
        %v1657 = vadd.f32 %v1609, %v1641
        %v1658 = vadd.f32 %v1610, %v1642
        %v1659 = vadd.f32 %v1611, %v1643
        %v1660 = vadd.f32 %v1612, %v1644
        %v1661 = vadd.f32 %v1613, %v1645
        %v1662 = vadd.f32 %v1614, %v1646
        %v1663 = vadd.f32 %v1615, %v1647
        %v1664 = vadd.f32 %v1616, %v1648
        %v1665 = vadd.f32 %v1617, %v1649
        %v1666 = vadd.f32 %v1618, %v1650
        %v1667 = vadd.f32 %v1619, %v1651
        %v1668 = vadd.f32 %v1620, %v1652
        %v1669 = vadd.f32 %v1621, %v1653
        %v1670 = vadd.f32 %v1622, %v1654
        %1671 = vst.msk [vmem:[#allocation3 + $0xd] sm:$0x1] %vm422, %v1655
        %1672 = vst.msk [vmem:[#allocation3 + $0x1d] sm:$0x1] %vm422, %v1656
        %1673 = vst.msk [vmem:[#allocation3 + $0x2d] sm:$0x1] %vm422, %v1657
        %1674 = vst.msk [vmem:[#allocation3 + $0x3d] sm:$0x1] %vm422, %v1658
        %1675 = vst.msk [vmem:[#allocation3 + $0x4d] sm:$0x1] %vm422, %v1659
        %1676 = vst.msk [vmem:[#allocation3 + $0x5d] sm:$0x1] %vm422, %v1660
        %1677 = vst.msk [vmem:[#allocation3 + $0x6d] sm:$0x1] %vm422, %v1661
        %1678 = vst.msk [vmem:[#allocation3 + $0x7d] sm:$0x1] %vm422, %v1662
        %1679 = vst.msk [vmem:[#allocation3 + $0x8d] sm:$0x1] %vm422, %v1663
        %1680 = vst.msk [vmem:[#allocation3 + $0x9d] sm:$0x1] %vm422, %v1664
        %1681 = vst.msk [vmem:[#allocation3 + $0xad] sm:$0x1] %vm422, %v1665
        %1682 = vst.msk [vmem:[#allocation3 + $0xbd] sm:$0x1] %vm422, %v1666
        %1683 = vst.msk [vmem:[#allocation3 + $0xcd] sm:$0x1] %vm422, %v1667
        %1684 = vst.msk [vmem:[#allocation3 + $0xdd] sm:$0x1] %vm422, %v1668
        %1685 = vst.msk [vmem:[#allocation3 + $0xed] sm:$0x1] %vm422, %v1669
        %1686 = vst.msk [vmem:[#allocation3 + $0xfd] sm:$0x1] %vm422, %v1670
        %v1687 = vld [vmem:[#allocation2 + $0x6] sm:$0x1]
        %v1688 = vld [vmem:[#allocation2 + $0xe] sm:$0x1]
        %v1689 = vld [vmem:[#allocation2 + $0x16] sm:$0x1]
        %v1690 = vld [vmem:[#allocation2 + $0x1e] sm:$0x1]
        %v1691 = vld [vmem:[#allocation2 + $0x26] sm:$0x1]
        %v1692 = vld [vmem:[#allocation2 + $0x2e] sm:$0x1]
        %v1693 = vld [vmem:[#allocation2 + $0x36] sm:$0x1]
        %v1694 = vld [vmem:[#allocation2 + $0x3e] sm:$0x1]
        %v1695 = vld [vmem:[#allocation2 + $0x46] sm:$0x1]
        %v1696 = vld [vmem:[#allocation2 + $0x4e] sm:$0x1]
        %v1697 = vld [vmem:[#allocation2 + $0x56] sm:$0x1]
        %v1698 = vld [vmem:[#allocation2 + $0x5e] sm:$0x1]
        %v1699 = vld [vmem:[#allocation2 + $0x66] sm:$0x1]
        %v1700 = vld [vmem:[#allocation2 + $0x6e] sm:$0x1]
        %v1701 = vld [vmem:[#allocation2 + $0x76] sm:$0x1]
        %v1702 = vld [vmem:[#allocation2 + $0x7e] sm:$0x1]
        %v1703 = vmul.f32 %v1687, 0.25
        %v1704 = vmul.f32 %v1688, 0.25
        %v1705 = vmul.f32 %v1689, 0.25
        %v1706 = vmul.f32 %v1690, 0.25
        %v1707 = vmul.f32 %v1691, 0.25
        %v1708 = vmul.f32 %v1692, 0.25
        %v1709 = vmul.f32 %v1693, 0.25
        %v1710 = vmul.f32 %v1694, 0.25
        %v1711 = vmul.f32 %v1695, 0.25
        %v1712 = vmul.f32 %v1696, 0.25
        %v1713 = vmul.f32 %v1697, 0.25
        %v1714 = vmul.f32 %v1698, 0.25
        %v1715 = vmul.f32 %v1699, 0.25
        %v1716 = vmul.f32 %v1700, 0.25
        %v1717 = vmul.f32 %v1701, 0.25
        %v1718 = vmul.f32 %v1702, 0.25
        %v1719 = vld [vmem:[#allocation2 + $0x7] sm:$0x1]
        %v1720 = vld [vmem:[#allocation2 + $0xf] sm:$0x1]
        %v1721 = vld [vmem:[#allocation2 + $0x17] sm:$0x1]
        %v1722 = vld [vmem:[#allocation2 + $0x1f] sm:$0x1]
        %v1723 = vld [vmem:[#allocation2 + $0x27] sm:$0x1]
        %v1724 = vld [vmem:[#allocation2 + $0x2f] sm:$0x1]
        %v1725 = vld [vmem:[#allocation2 + $0x37] sm:$0x1]
        %v1726 = vld [vmem:[#allocation2 + $0x3f] sm:$0x1]
        %v1727 = vld [vmem:[#allocation2 + $0x47] sm:$0x1]
        %v1728 = vld [vmem:[#allocation2 + $0x4f] sm:$0x1]
        %v1729 = vld [vmem:[#allocation2 + $0x57] sm:$0x1]
        %v1730 = vld [vmem:[#allocation2 + $0x5f] sm:$0x1]
        %v1731 = vld [vmem:[#allocation2 + $0x67] sm:$0x1]
        %v1732 = vld [vmem:[#allocation2 + $0x6f] sm:$0x1]
        %v1733 = vld [vmem:[#allocation2 + $0x77] sm:$0x1]
        %v1734 = vld [vmem:[#allocation2 + $0x7f] sm:$0x1]
        %v1735 = vmul.f32 %v1719, 0.75
        %v1736 = vmul.f32 %v1720, 0.75
        %v1737 = vmul.f32 %v1721, 0.75
        %v1738 = vmul.f32 %v1722, 0.75
        %v1739 = vmul.f32 %v1723, 0.75
        %v1740 = vmul.f32 %v1724, 0.75
        %v1741 = vmul.f32 %v1725, 0.75
        %v1742 = vmul.f32 %v1726, 0.75
        %v1743 = vmul.f32 %v1727, 0.75
        %v1744 = vmul.f32 %v1728, 0.75
        %v1745 = vmul.f32 %v1729, 0.75
        %v1746 = vmul.f32 %v1730, 0.75
        %v1747 = vmul.f32 %v1731, 0.75
        %v1748 = vmul.f32 %v1732, 0.75
        %v1749 = vmul.f32 %v1733, 0.75
        %v1750 = vmul.f32 %v1734, 0.75
        %v1751 = vadd.f32 %v1703, %v1735
        %v1752 = vadd.f32 %v1704, %v1736
        %v1753 = vadd.f32 %v1705, %v1737
        %v1754 = vadd.f32 %v1706, %v1738
        %v1755 = vadd.f32 %v1707, %v1739
        %v1756 = vadd.f32 %v1708, %v1740
        %v1757 = vadd.f32 %v1709, %v1741
        %v1758 = vadd.f32 %v1710, %v1742
        %v1759 = vadd.f32 %v1711, %v1743
        %v1760 = vadd.f32 %v1712, %v1744
        %v1761 = vadd.f32 %v1713, %v1745
        %v1762 = vadd.f32 %v1714, %v1746
        %v1763 = vadd.f32 %v1715, %v1747
        %v1764 = vadd.f32 %v1716, %v1748
        %v1765 = vadd.f32 %v1717, %v1749
        %v1766 = vadd.f32 %v1718, %v1750
        %1767 = vst.msk [vmem:[#allocation3 + $0xe] sm:$0x1] %vm422, %v1751
        %1768 = vst.msk [vmem:[#allocation3 + $0x1e] sm:$0x1] %vm422, %v1752
        %1769 = vst.msk [vmem:[#allocation3 + $0x2e] sm:$0x1] %vm422, %v1753
        %1770 = vst.msk [vmem:[#allocation3 + $0x3e] sm:$0x1] %vm422, %v1754
        %1771 = vst.msk [vmem:[#allocation3 + $0x4e] sm:$0x1] %vm422, %v1755
        %1772 = vst.msk [vmem:[#allocation3 + $0x5e] sm:$0x1] %vm422, %v1756
        %1773 = vst.msk [vmem:[#allocation3 + $0x6e] sm:$0x1] %vm422, %v1757
        %1774 = vst.msk [vmem:[#allocation3 + $0x7e] sm:$0x1] %vm422, %v1758
        %1775 = vst.msk [vmem:[#allocation3 + $0x8e] sm:$0x1] %vm422, %v1759
        %1776 = vst.msk [vmem:[#allocation3 + $0x9e] sm:$0x1] %vm422, %v1760
        %1777 = vst.msk [vmem:[#allocation3 + $0xae] sm:$0x1] %vm422, %v1761
        %1778 = vst.msk [vmem:[#allocation3 + $0xbe] sm:$0x1] %vm422, %v1762
        %1779 = vst.msk [vmem:[#allocation3 + $0xce] sm:$0x1] %vm422, %v1763
        %1780 = vst.msk [vmem:[#allocation3 + $0xde] sm:$0x1] %vm422, %v1764
        %1781 = vst.msk [vmem:[#allocation3 + $0xee] sm:$0x1] %vm422, %v1765
        %1782 = vst.msk [vmem:[#allocation3 + $0xfe] sm:$0x1] %vm422, %v1766
        %v1783 = vld [vmem:[#allocation2 + $0x7] sm:$0x1]
        %v1784 = vld [vmem:[#allocation2 + $0xf] sm:$0x1]
        %v1785 = vld [vmem:[#allocation2 + $0x17] sm:$0x1]
        %v1786 = vld [vmem:[#allocation2 + $0x1f] sm:$0x1]
        %v1787 = vld [vmem:[#allocation2 + $0x27] sm:$0x1]
        %v1788 = vld [vmem:[#allocation2 + $0x2f] sm:$0x1]
        %v1789 = vld [vmem:[#allocation2 + $0x37] sm:$0x1]
        %v1790 = vld [vmem:[#allocation2 + $0x3f] sm:$0x1]
        %v1791 = vld [vmem:[#allocation2 + $0x47] sm:$0x1]
        %v1792 = vld [vmem:[#allocation2 + $0x4f] sm:$0x1]
        %v1793 = vld [vmem:[#allocation2 + $0x57] sm:$0x1]
        %v1794 = vld [vmem:[#allocation2 + $0x5f] sm:$0x1]
        %v1795 = vld [vmem:[#allocation2 + $0x67] sm:$0x1]
        %v1796 = vld [vmem:[#allocation2 + $0x6f] sm:$0x1]
        %v1797 = vld [vmem:[#allocation2 + $0x77] sm:$0x1]
        %v1798 = vld [vmem:[#allocation2 + $0x7f] sm:$0x1]
        %v1799 = vmul.f32 %v1783, 0.75
        %v1800 = vmul.f32 %v1784, 0.75
        %v1801 = vmul.f32 %v1785, 0.75
        %v1802 = vmul.f32 %v1786, 0.75
        %v1803 = vmul.f32 %v1787, 0.75
        %v1804 = vmul.f32 %v1788, 0.75
        %v1805 = vmul.f32 %v1789, 0.75
        %v1806 = vmul.f32 %v1790, 0.75
        %v1807 = vmul.f32 %v1791, 0.75
        %v1808 = vmul.f32 %v1792, 0.75
        %v1809 = vmul.f32 %v1793, 0.75
        %v1810 = vmul.f32 %v1794, 0.75
        %v1811 = vmul.f32 %v1795, 0.75
        %v1812 = vmul.f32 %v1796, 0.75
        %v1813 = vmul.f32 %v1797, 0.75
        %v1814 = vmul.f32 %v1798, 0.75
        %v1815 = vmul.f32 %v1783, 0.25
        %v1816 = vmul.f32 %v1784, 0.25
        %v1817 = vmul.f32 %v1785, 0.25
        %v1818 = vmul.f32 %v1786, 0.25
        %v1819 = vmul.f32 %v1787, 0.25
        %v1820 = vmul.f32 %v1788, 0.25
        %v1821 = vmul.f32 %v1789, 0.25
        %v1822 = vmul.f32 %v1790, 0.25
        %v1823 = vmul.f32 %v1791, 0.25
        %v1824 = vmul.f32 %v1792, 0.25
        %v1825 = vmul.f32 %v1793, 0.25
        %v1826 = vmul.f32 %v1794, 0.25
        %v1827 = vmul.f32 %v1795, 0.25
        %v1828 = vmul.f32 %v1796, 0.25
        %v1829 = vmul.f32 %v1797, 0.25
        %v1830 = vmul.f32 %v1798, 0.25
        %v1831 = vadd.f32 %v1799, %v1815
        %v1832 = vadd.f32 %v1800, %v1816
        %v1833 = vadd.f32 %v1801, %v1817
        %v1834 = vadd.f32 %v1802, %v1818
        %v1835 = vadd.f32 %v1803, %v1819
        %v1836 = vadd.f32 %v1804, %v1820
        %v1837 = vadd.f32 %v1805, %v1821
        %v1838 = vadd.f32 %v1806, %v1822
        %v1839 = vadd.f32 %v1807, %v1823
        %v1840 = vadd.f32 %v1808, %v1824
        %v1841 = vadd.f32 %v1809, %v1825
        %v1842 = vadd.f32 %v1810, %v1826
        %v1843 = vadd.f32 %v1811, %v1827
        %v1844 = vadd.f32 %v1812, %v1828
        %v1845 = vadd.f32 %v1813, %v1829
        %v1846 = vadd.f32 %v1814, %v1830
        %1847 = vst.msk [vmem:[#allocation3 + $0xf] sm:$0x1] %vm422, %v1831
        %1848 = vst.msk [vmem:[#allocation3 + $0x1f] sm:$0x1] %vm422, %v1832
        %1849 = vst.msk [vmem:[#allocation3 + $0x2f] sm:$0x1] %vm422, %v1833
        %1850 = vst.msk [vmem:[#allocation3 + $0x3f] sm:$0x1] %vm422, %v1834
        %1851 = vst.msk [vmem:[#allocation3 + $0x4f] sm:$0x1] %vm422, %v1835
        %1852 = vst.msk [vmem:[#allocation3 + $0x5f] sm:$0x1] %vm422, %v1836
        %1853 = vst.msk [vmem:[#allocation3 + $0x6f] sm:$0x1] %vm422, %v1837
        %1854 = vst.msk [vmem:[#allocation3 + $0x7f] sm:$0x1] %vm422, %v1838
        %1855 = vst.msk [vmem:[#allocation3 + $0x8f] sm:$0x1] %vm422, %v1839
        %1856 = vst.msk [vmem:[#allocation3 + $0x9f] sm:$0x1] %vm422, %v1840
        %1857 = vst.msk [vmem:[#allocation3 + $0xaf] sm:$0x1] %vm422, %v1841
        %1858 = vst.msk [vmem:[#allocation3 + $0xbf] sm:$0x1] %vm422, %v1842
        %1859 = vst.msk [vmem:[#allocation3 + $0xcf] sm:$0x1] %vm422, %v1843
        %1860 = vst.msk [vmem:[#allocation3 + $0xdf] sm:$0x1] %vm422, %v1844
        %1861 = vst.msk [vmem:[#allocation3 + $0xef] sm:$0x1] %vm422, %v1845
        %1862 = vst.msk [vmem:[#allocation3 + $0xff] sm:$0x1] %vm422, %v1846
        %v1863 = vld [vmem:[#allocation3] sm:$0xff]
        %v1864 = vld [vmem:[#allocation3 + $0x8] sm:$0xff]
        %v1865 = vld [vmem:[#allocation3 + $0x80] sm:$0xff]
        %v1866 = vld [vmem:[#allocation3 + $0x88] sm:$0xff]
        %1867 = vst.msk [vmem:[%s175] sm:$0xff] %vm389, %v1863
        %1868 = vst.msk [vmem:[%s175 + $0x8] sm:$0xff] %vm389, %v1864
        %1869 = vst.msk [vmem:[%s175 + $0x100] sm:$0xff] %vm389, %v1865
        %1870 = vst.msk [vmem:[%s175 + $0x108] sm:$0xff] %vm389, %v1866
        %v1871 = vld [vmem:[#allocation3] sm:$0xff]
        %v1872 = vld [vmem:[#allocation3 + $0x8] sm:$0xff]
        %v1873 = vld [vmem:[#allocation3 + $0x80] sm:$0xff]
        %v1874 = vld [vmem:[#allocation3 + $0x88] sm:$0xff]
        %v1875 = vmul.f32 %v1871, 0.75
        %v1876 = vmul.f32 %v1872, 0.75
        %v1877 = vmul.f32 %v1873, 0.75
        %v1878 = vmul.f32 %v1874, 0.75
        %s1879 = scalar_lea.vmem [#allocation3], 16
        %v1880 = vld [vmem:[%s1879] sm:$0xff]
        %v1881 = vld [vmem:[%s1879 + $0x8] sm:$0xff]
        %v1882 = vld [vmem:[%s1879 + $0x80] sm:$0xff]
        %v1883 = vld [vmem:[%s1879 + $0x88] sm:$0xff]
        %v1884 = vmul.f32 %v1880, 0.25
        %v1885 = vmul.f32 %v1881, 0.25
        %v1886 = vmul.f32 %v1882, 0.25
        %v1887 = vmul.f32 %v1883, 0.25
        %v1888 = vadd.f32 %v1875, %v1884
        %v1889 = vadd.f32 %v1876, %v1885
        %v1890 = vadd.f32 %v1877, %v1886
        %v1891 = vadd.f32 %v1878, %v1887
        %s1892 = scalar_lea.vmem %s175, 16 [#allocation9]
        %1893 = vst.msk [vmem:[%s1892] sm:$0xff] %vm389, %v1888
        %1894 = vst.msk [vmem:[%s1892 + $0x8] sm:$0xff] %vm389, %v1889
        %1895 = vst.msk [vmem:[%s1892 + $0x100] sm:$0xff] %vm389, %v1890
        %1896 = vst.msk [vmem:[%s1892 + $0x108] sm:$0xff] %vm389, %v1891
        %v1897 = vld [vmem:[#allocation3] sm:$0xff]
        %v1898 = vld [vmem:[#allocation3 + $0x8] sm:$0xff]
        %v1899 = vld [vmem:[#allocation3 + $0x80] sm:$0xff]
        %v1900 = vld [vmem:[#allocation3 + $0x88] sm:$0xff]
        %v1901 = vmul.f32 %v1897, 0.25
        %v1902 = vmul.f32 %v1898, 0.25
        %v1903 = vmul.f32 %v1899, 0.25
        %v1904 = vmul.f32 %v1900, 0.25
        %v1905 = vld [vmem:[%s1879] sm:$0xff]
        %v1906 = vld [vmem:[%s1879 + $0x8] sm:$0xff]
        %v1907 = vld [vmem:[%s1879 + $0x80] sm:$0xff]
        %v1908 = vld [vmem:[%s1879 + $0x88] sm:$0xff]
        %v1909 = vmul.f32 %v1905, 0.75
        %v1910 = vmul.f32 %v1906, 0.75
        %v1911 = vmul.f32 %v1907, 0.75
        %v1912 = vmul.f32 %v1908, 0.75
        %v1913 = vadd.f32 %v1901, %v1909
        %v1914 = vadd.f32 %v1902, %v1910
        %v1915 = vadd.f32 %v1903, %v1911
        %v1916 = vadd.f32 %v1904, %v1912
        %s1917 = scalar_lea.vmem %s175, 32 [#allocation9]
        %1918 = vst.msk [vmem:[%s1917] sm:$0xff] %vm389, %v1913
        %1919 = vst.msk [vmem:[%s1917 + $0x8] sm:$0xff] %vm389, %v1914
        %1920 = vst.msk [vmem:[%s1917 + $0x100] sm:$0xff] %vm389, %v1915
        %1921 = vst.msk [vmem:[%s1917 + $0x108] sm:$0xff] %vm389, %v1916
        %v1922 = vld [vmem:[%s1879] sm:$0xff]
        %v1923 = vld [vmem:[%s1879 + $0x8] sm:$0xff]
        %v1924 = vld [vmem:[%s1879 + $0x80] sm:$0xff]
        %v1925 = vld [vmem:[%s1879 + $0x88] sm:$0xff]
        %v1926 = vmul.f32 %v1922, 0.75
        %v1927 = vmul.f32 %v1923, 0.75
        %v1928 = vmul.f32 %v1924, 0.75
        %v1929 = vmul.f32 %v1925, 0.75
        %s1930 = scalar_lea.vmem [#allocation3], 32
        %v1931 = vld [vmem:[%s1930] sm:$0xff]
        %v1932 = vld [vmem:[%s1930 + $0x8] sm:$0xff]
        %v1933 = vld [vmem:[%s1930 + $0x80] sm:$0xff]
        %v1934 = vld [vmem:[%s1930 + $0x88] sm:$0xff]
        %v1935 = vmul.f32 %v1931, 0.25
        %v1936 = vmul.f32 %v1932, 0.25
        %v1937 = vmul.f32 %v1933, 0.25
        %v1938 = vmul.f32 %v1934, 0.25
        %v1939 = vadd.f32 %v1926, %v1935
        %v1940 = vadd.f32 %v1927, %v1936
        %v1941 = vadd.f32 %v1928, %v1937
        %v1942 = vadd.f32 %v1929, %v1938
        %s1943 = scalar_lea.vmem %s175, 48 [#allocation9]
        %1944 = vst.msk [vmem:[%s1943] sm:$0xff] %vm389, %v1939
        %1945 = vst.msk [vmem:[%s1943 + $0x8] sm:$0xff] %vm389, %v1940
        %1946 = vst.msk [vmem:[%s1943 + $0x100] sm:$0xff] %vm389, %v1941
        %1947 = vst.msk [vmem:[%s1943 + $0x108] sm:$0xff] %vm389, %v1942
        %v1948 = vld [vmem:[%s1879] sm:$0xff]
        %v1949 = vld [vmem:[%s1879 + $0x8] sm:$0xff]
        %v1950 = vld [vmem:[%s1879 + $0x80] sm:$0xff]
        %v1951 = vld [vmem:[%s1879 + $0x88] sm:$0xff]
        %v1952 = vmul.f32 %v1948, 0.25
        %v1953 = vmul.f32 %v1949, 0.25
        %v1954 = vmul.f32 %v1950, 0.25
        %v1955 = vmul.f32 %v1951, 0.25
        %v1956 = vld [vmem:[%s1930] sm:$0xff]
        %v1957 = vld [vmem:[%s1930 + $0x8] sm:$0xff]
        %v1958 = vld [vmem:[%s1930 + $0x80] sm:$0xff]
        %v1959 = vld [vmem:[%s1930 + $0x88] sm:$0xff]
        %v1960 = vmul.f32 %v1956, 0.75
        %v1961 = vmul.f32 %v1957, 0.75
        %v1962 = vmul.f32 %v1958, 0.75
        %v1963 = vmul.f32 %v1959, 0.75
        %v1964 = vadd.f32 %v1952, %v1960
        %v1965 = vadd.f32 %v1953, %v1961
        %v1966 = vadd.f32 %v1954, %v1962
        %v1967 = vadd.f32 %v1955, %v1963
        %s1968 = scalar_lea.vmem %s175, 64 [#allocation9]
        %1969 = vst.msk [vmem:[%s1968] sm:$0xff] %vm389, %v1964
        %1970 = vst.msk [vmem:[%s1968 + $0x8] sm:$0xff] %vm389, %v1965
        %1971 = vst.msk [vmem:[%s1968 + $0x100] sm:$0xff] %vm389, %v1966
        %1972 = vst.msk [vmem:[%s1968 + $0x108] sm:$0xff] %vm389, %v1967
        %v1973 = vld [vmem:[%s1930] sm:$0xff]
        %v1974 = vld [vmem:[%s1930 + $0x8] sm:$0xff]
        %v1975 = vld [vmem:[%s1930 + $0x80] sm:$0xff]
        %v1976 = vld [vmem:[%s1930 + $0x88] sm:$0xff]
        %v1977 = vmul.f32 %v1973, 0.75
        %v1978 = vmul.f32 %v1974, 0.75
        %v1979 = vmul.f32 %v1975, 0.75
        %v1980 = vmul.f32 %v1976, 0.75
        %s1981 = scalar_lea.vmem [#allocation3], 48
        %v1982 = vld [vmem:[%s1981] sm:$0xff]
        %v1983 = vld [vmem:[%s1981 + $0x8] sm:$0xff]
        %v1984 = vld [vmem:[%s1981 + $0x80] sm:$0xff]
        %v1985 = vld [vmem:[%s1981 + $0x88] sm:$0xff]
        %v1986 = vmul.f32 %v1982, 0.25
        %v1987 = vmul.f32 %v1983, 0.25
        %v1988 = vmul.f32 %v1984, 0.25
        %v1989 = vmul.f32 %v1985, 0.25
        %v1990 = vadd.f32 %v1977, %v1986
        %v1991 = vadd.f32 %v1978, %v1987
        %v1992 = vadd.f32 %v1979, %v1988
        %v1993 = vadd.f32 %v1980, %v1989
        %s1994 = scalar_lea.vmem %s175, 80 [#allocation9]
        %1995 = vst.msk [vmem:[%s1994] sm:$0xff] %vm389, %v1990
        %1996 = vst.msk [vmem:[%s1994 + $0x8] sm:$0xff] %vm389, %v1991
        %1997 = vst.msk [vmem:[%s1994 + $0x100] sm:$0xff] %vm389, %v1992
        %1998 = vst.msk [vmem:[%s1994 + $0x108] sm:$0xff] %vm389, %v1993
        %v1999 = vld [vmem:[%s1930] sm:$0xff]
        %v2000 = vld [vmem:[%s1930 + $0x8] sm:$0xff]
        %v2001 = vld [vmem:[%s1930 + $0x80] sm:$0xff]
        %v2002 = vld [vmem:[%s1930 + $0x88] sm:$0xff]
        %v2003 = vmul.f32 %v1999, 0.25
        %v2004 = vmul.f32 %v2000, 0.25
        %v2005 = vmul.f32 %v2001, 0.25
        %v2006 = vmul.f32 %v2002, 0.25
        %v2007 = vld [vmem:[%s1981] sm:$0xff]
        %v2008 = vld [vmem:[%s1981 + $0x8] sm:$0xff]
        %v2009 = vld [vmem:[%s1981 + $0x80] sm:$0xff]
        %v2010 = vld [vmem:[%s1981 + $0x88] sm:$0xff]
        %v2011 = vmul.f32 %v2007, 0.75
        %v2012 = vmul.f32 %v2008, 0.75
        %v2013 = vmul.f32 %v2009, 0.75
        %v2014 = vmul.f32 %v2010, 0.75
        %v2015 = vadd.f32 %v2003, %v2011
        %v2016 = vadd.f32 %v2004, %v2012
        %v2017 = vadd.f32 %v2005, %v2013
        %v2018 = vadd.f32 %v2006, %v2014
        %s2019 = scalar_lea.vmem %s175, 96 [#allocation9]
        %2020 = vst.msk [vmem:[%s2019] sm:$0xff] %vm389, %v2015
        %2021 = vst.msk [vmem:[%s2019 + $0x8] sm:$0xff] %vm389, %v2016
        %2022 = vst.msk [vmem:[%s2019 + $0x100] sm:$0xff] %vm389, %v2017
        %2023 = vst.msk [vmem:[%s2019 + $0x108] sm:$0xff] %vm389, %v2018
        %v2024 = vld [vmem:[%s1981] sm:$0xff]
        %v2025 = vld [vmem:[%s1981 + $0x8] sm:$0xff]
        %v2026 = vld [vmem:[%s1981 + $0x80] sm:$0xff]
        %v2027 = vld [vmem:[%s1981 + $0x88] sm:$0xff]
        %v2028 = vmul.f32 %v2024, 0.75
        %v2029 = vmul.f32 %v2025, 0.75
        %v2030 = vmul.f32 %v2026, 0.75
        %v2031 = vmul.f32 %v2027, 0.75
        %s2032 = scalar_lea.vmem [#allocation3], 64
        %v2033 = vld [vmem:[%s2032] sm:$0xff]
        %v2034 = vld [vmem:[%s2032 + $0x8] sm:$0xff]
        %v2035 = vld [vmem:[%s2032 + $0x80] sm:$0xff]
        %v2036 = vld [vmem:[%s2032 + $0x88] sm:$0xff]
        %v2037 = vmul.f32 %v2033, 0.25
        %v2038 = vmul.f32 %v2034, 0.25
        %v2039 = vmul.f32 %v2035, 0.25
        %v2040 = vmul.f32 %v2036, 0.25
        %v2041 = vadd.f32 %v2028, %v2037
        %v2042 = vadd.f32 %v2029, %v2038
        %v2043 = vadd.f32 %v2030, %v2039
        %v2044 = vadd.f32 %v2031, %v2040
        %s2045 = scalar_lea.vmem %s175, 112 [#allocation9]
        %2046 = vst.msk [vmem:[%s2045] sm:$0xff] %vm389, %v2041
        %2047 = vst.msk [vmem:[%s2045 + $0x8] sm:$0xff] %vm389, %v2042
        %2048 = vst.msk [vmem:[%s2045 + $0x100] sm:$0xff] %vm389, %v2043
        %2049 = vst.msk [vmem:[%s2045 + $0x108] sm:$0xff] %vm389, %v2044
        %v2050 = vld [vmem:[%s1981] sm:$0xff]
        %v2051 = vld [vmem:[%s1981 + $0x8] sm:$0xff]
        %v2052 = vld [vmem:[%s1981 + $0x80] sm:$0xff]
        %v2053 = vld [vmem:[%s1981 + $0x88] sm:$0xff]
        %v2054 = vmul.f32 %v2050, 0.25
        %v2055 = vmul.f32 %v2051, 0.25
        %v2056 = vmul.f32 %v2052, 0.25
        %v2057 = vmul.f32 %v2053, 0.25
        %v2058 = vld [vmem:[%s2032] sm:$0xff]
        %v2059 = vld [vmem:[%s2032 + $0x8] sm:$0xff]
        %v2060 = vld [vmem:[%s2032 + $0x80] sm:$0xff]
        %v2061 = vld [vmem:[%s2032 + $0x88] sm:$0xff]
        %v2062 = vmul.f32 %v2058, 0.75
        %v2063 = vmul.f32 %v2059, 0.75
        %v2064 = vmul.f32 %v2060, 0.75
        %v2065 = vmul.f32 %v2061, 0.75
        %v2066 = vadd.f32 %v2054, %v2062
        %v2067 = vadd.f32 %v2055, %v2063
        %v2068 = vadd.f32 %v2056, %v2064
        %v2069 = vadd.f32 %v2057, %v2065
        %s2070 = scalar_lea.vmem %s175, 128 [#allocation9]
        %2071 = vst.msk [vmem:[%s2070] sm:$0xff] %vm389, %v2066
        %2072 = vst.msk [vmem:[%s2070 + $0x8] sm:$0xff] %vm389, %v2067
        %2073 = vst.msk [vmem:[%s2070 + $0x100] sm:$0xff] %vm389, %v2068
        %2074 = vst.msk [vmem:[%s2070 + $0x108] sm:$0xff] %vm389, %v2069
        %v2075 = vld [vmem:[%s2032] sm:$0xff]
        %v2076 = vld [vmem:[%s2032 + $0x8] sm:$0xff]
        %v2077 = vld [vmem:[%s2032 + $0x80] sm:$0xff]
        %v2078 = vld [vmem:[%s2032 + $0x88] sm:$0xff]
        %v2079 = vmul.f32 %v2075, 0.75
        %v2080 = vmul.f32 %v2076, 0.75
        %v2081 = vmul.f32 %v2077, 0.75
        %v2082 = vmul.f32 %v2078, 0.75
        %s2083 = scalar_lea.vmem [#allocation3], 80
        %v2084 = vld [vmem:[%s2083] sm:$0xff]
        %v2085 = vld [vmem:[%s2083 + $0x8] sm:$0xff]
        %v2086 = vld [vmem:[%s2083 + $0x80] sm:$0xff]
        %v2087 = vld [vmem:[%s2083 + $0x88] sm:$0xff]
        %v2088 = vmul.f32 %v2084, 0.25
        %v2089 = vmul.f32 %v2085, 0.25
        %v2090 = vmul.f32 %v2086, 0.25
        %v2091 = vmul.f32 %v2087, 0.25
        %v2092 = vadd.f32 %v2079, %v2088
        %v2093 = vadd.f32 %v2080, %v2089
        %v2094 = vadd.f32 %v2081, %v2090
        %v2095 = vadd.f32 %v2082, %v2091
        %s2096 = scalar_lea.vmem %s175, 144 [#allocation9]
        %2097 = vst.msk [vmem:[%s2096] sm:$0xff] %vm389, %v2092
        %2098 = vst.msk [vmem:[%s2096 + $0x8] sm:$0xff] %vm389, %v2093
        %2099 = vst.msk [vmem:[%s2096 + $0x100] sm:$0xff] %vm389, %v2094
        %2100 = vst.msk [vmem:[%s2096 + $0x108] sm:$0xff] %vm389, %v2095
        %v2101 = vld [vmem:[%s2032] sm:$0xff]
        %v2102 = vld [vmem:[%s2032 + $0x8] sm:$0xff]
        %v2103 = vld [vmem:[%s2032 + $0x80] sm:$0xff]
        %v2104 = vld [vmem:[%s2032 + $0x88] sm:$0xff]
        %v2105 = vmul.f32 %v2101, 0.25
        %v2106 = vmul.f32 %v2102, 0.25
        %v2107 = vmul.f32 %v2103, 0.25
        %v2108 = vmul.f32 %v2104, 0.25
        %v2109 = vld [vmem:[%s2083] sm:$0xff]
        %v2110 = vld [vmem:[%s2083 + $0x8] sm:$0xff]
        %v2111 = vld [vmem:[%s2083 + $0x80] sm:$0xff]
        %v2112 = vld [vmem:[%s2083 + $0x88] sm:$0xff]
        %v2113 = vmul.f32 %v2109, 0.75
        %v2114 = vmul.f32 %v2110, 0.75
        %v2115 = vmul.f32 %v2111, 0.75
        %v2116 = vmul.f32 %v2112, 0.75
        %v2117 = vadd.f32 %v2105, %v2113
        %v2118 = vadd.f32 %v2106, %v2114
        %v2119 = vadd.f32 %v2107, %v2115
        %v2120 = vadd.f32 %v2108, %v2116
        %s2121 = scalar_lea.vmem %s175, 160 [#allocation9]
        %2122 = vst.msk [vmem:[%s2121] sm:$0xff] %vm389, %v2117
        %2123 = vst.msk [vmem:[%s2121 + $0x8] sm:$0xff] %vm389, %v2118
        %2124 = vst.msk [vmem:[%s2121 + $0x100] sm:$0xff] %vm389, %v2119
        %2125 = vst.msk [vmem:[%s2121 + $0x108] sm:$0xff] %vm389, %v2120
        %v2126 = vld [vmem:[%s2083] sm:$0xff]
        %v2127 = vld [vmem:[%s2083 + $0x8] sm:$0xff]
        %v2128 = vld [vmem:[%s2083 + $0x80] sm:$0xff]
        %v2129 = vld [vmem:[%s2083 + $0x88] sm:$0xff]
        %v2130 = vmul.f32 %v2126, 0.75
        %v2131 = vmul.f32 %v2127, 0.75
        %v2132 = vmul.f32 %v2128, 0.75
        %v2133 = vmul.f32 %v2129, 0.75
        %s2134 = scalar_lea.vmem [#allocation3], 96
        %v2135 = vld [vmem:[%s2134] sm:$0xff]
        %v2136 = vld [vmem:[%s2134 + $0x8] sm:$0xff]
        %v2137 = vld [vmem:[%s2134 + $0x80] sm:$0xff]
        %v2138 = vld [vmem:[%s2134 + $0x88] sm:$0xff]
        %v2139 = vmul.f32 %v2135, 0.25
        %v2140 = vmul.f32 %v2136, 0.25
        %v2141 = vmul.f32 %v2137, 0.25
        %v2142 = vmul.f32 %v2138, 0.25
        %v2143 = vadd.f32 %v2130, %v2139
        %v2144 = vadd.f32 %v2131, %v2140
        %v2145 = vadd.f32 %v2132, %v2141
        %v2146 = vadd.f32 %v2133, %v2142
        %s2147 = scalar_lea.vmem %s175, 176 [#allocation9]
        %2148 = vst.msk [vmem:[%s2147] sm:$0xff] %vm389, %v2143
        %2149 = vst.msk [vmem:[%s2147 + $0x8] sm:$0xff] %vm389, %v2144
        %2150 = vst.msk [vmem:[%s2147 + $0x100] sm:$0xff] %vm389, %v2145
        %2151 = vst.msk [vmem:[%s2147 + $0x108] sm:$0xff] %vm389, %v2146
        %v2152 = vld [vmem:[%s2083] sm:$0xff]
        %v2153 = vld [vmem:[%s2083 + $0x8] sm:$0xff]
        %v2154 = vld [vmem:[%s2083 + $0x80] sm:$0xff]
        %v2155 = vld [vmem:[%s2083 + $0x88] sm:$0xff]
        %v2156 = vmul.f32 %v2152, 0.25
        %v2157 = vmul.f32 %v2153, 0.25
        %v2158 = vmul.f32 %v2154, 0.25
        %v2159 = vmul.f32 %v2155, 0.25
        %v2160 = vld [vmem:[%s2134] sm:$0xff]
        %v2161 = vld [vmem:[%s2134 + $0x8] sm:$0xff]
        %v2162 = vld [vmem:[%s2134 + $0x80] sm:$0xff]
        %v2163 = vld [vmem:[%s2134 + $0x88] sm:$0xff]
        %v2164 = vmul.f32 %v2160, 0.75
        %v2165 = vmul.f32 %v2161, 0.75
        %v2166 = vmul.f32 %v2162, 0.75
        %v2167 = vmul.f32 %v2163, 0.75
        %v2168 = vadd.f32 %v2156, %v2164
        %v2169 = vadd.f32 %v2157, %v2165
        %v2170 = vadd.f32 %v2158, %v2166
        %v2171 = vadd.f32 %v2159, %v2167
        %s2172 = scalar_lea.vmem %s175, 192 [#allocation9]
        %2173 = vst.msk [vmem:[%s2172] sm:$0xff] %vm389, %v2168
        %2174 = vst.msk [vmem:[%s2172 + $0x8] sm:$0xff] %vm389, %v2169
        %2175 = vst.msk [vmem:[%s2172 + $0x100] sm:$0xff] %vm389, %v2170
        %2176 = vst.msk [vmem:[%s2172 + $0x108] sm:$0xff] %vm389, %v2171
        %v2177 = vld [vmem:[%s2134] sm:$0xff]
        %v2178 = vld [vmem:[%s2134 + $0x8] sm:$0xff]
        %v2179 = vld [vmem:[%s2134 + $0x80] sm:$0xff]
        %v2180 = vld [vmem:[%s2134 + $0x88] sm:$0xff]
        %v2181 = vmul.f32 %v2177, 0.75
        %v2182 = vmul.f32 %v2178, 0.75
        %v2183 = vmul.f32 %v2179, 0.75
        %v2184 = vmul.f32 %v2180, 0.75
        %s2185 = scalar_lea.vmem [#allocation3], 112
        %v2186 = vld [vmem:[%s2185] sm:$0xff]
        %v2187 = vld [vmem:[%s2185 + $0x8] sm:$0xff]
        %v2188 = vld [vmem:[%s2185 + $0x80] sm:$0xff]
        %v2189 = vld [vmem:[%s2185 + $0x88] sm:$0xff]
        %v2190 = vmul.f32 %v2186, 0.25
        %v2191 = vmul.f32 %v2187, 0.25
        %v2192 = vmul.f32 %v2188, 0.25
        %v2193 = vmul.f32 %v2189, 0.25
        %v2194 = vadd.f32 %v2181, %v2190
        %v2195 = vadd.f32 %v2182, %v2191
        %v2196 = vadd.f32 %v2183, %v2192
        %v2197 = vadd.f32 %v2184, %v2193
        %s2198 = scalar_lea.vmem %s175, 208 [#allocation9]
        %2199 = vst.msk [vmem:[%s2198] sm:$0xff] %vm389, %v2194
        %2200 = vst.msk [vmem:[%s2198 + $0x8] sm:$0xff] %vm389, %v2195
        %2201 = vst.msk [vmem:[%s2198 + $0x100] sm:$0xff] %vm389, %v2196
        %2202 = vst.msk [vmem:[%s2198 + $0x108] sm:$0xff] %vm389, %v2197
        %v2203 = vld [vmem:[%s2134] sm:$0xff]
        %v2204 = vld [vmem:[%s2134 + $0x8] sm:$0xff]
        %v2205 = vld [vmem:[%s2134 + $0x80] sm:$0xff]
        %v2206 = vld [vmem:[%s2134 + $0x88] sm:$0xff]
        %v2207 = vmul.f32 %v2203, 0.25
        %v2208 = vmul.f32 %v2204, 0.25
        %v2209 = vmul.f32 %v2205, 0.25
        %v2210 = vmul.f32 %v2206, 0.25
        %v2211 = vld [vmem:[%s2185] sm:$0xff]
        %v2212 = vld [vmem:[%s2185 + $0x8] sm:$0xff]
        %v2213 = vld [vmem:[%s2185 + $0x80] sm:$0xff]
        %v2214 = vld [vmem:[%s2185 + $0x88] sm:$0xff]
        %v2215 = vmul.f32 %v2211, 0.75
        %v2216 = vmul.f32 %v2212, 0.75
        %v2217 = vmul.f32 %v2213, 0.75
        %v2218 = vmul.f32 %v2214, 0.75
        %v2219 = vadd.f32 %v2207, %v2215
        %v2220 = vadd.f32 %v2208, %v2216
        %v2221 = vadd.f32 %v2209, %v2217
        %v2222 = vadd.f32 %v2210, %v2218
        %s2223 = scalar_lea.vmem %s175, 224 [#allocation9]
        %2224 = vst.msk [vmem:[%s2223] sm:$0xff] %vm389, %v2219
        %2225 = vst.msk [vmem:[%s2223 + $0x8] sm:$0xff] %vm389, %v2220
        %2226 = vst.msk [vmem:[%s2223 + $0x100] sm:$0xff] %vm389, %v2221
        %2227 = vst.msk [vmem:[%s2223 + $0x108] sm:$0xff] %vm389, %v2222
        %v2228 = vld [vmem:[%s2185] sm:$0xff]
        %v2229 = vld [vmem:[%s2185 + $0x8] sm:$0xff]
        %v2230 = vld [vmem:[%s2185 + $0x80] sm:$0xff]
        %v2231 = vld [vmem:[%s2185 + $0x88] sm:$0xff]
        %v2232 = vmul.f32 %v2228, 0.75
        %v2233 = vmul.f32 %v2229, 0.75
        %v2234 = vmul.f32 %v2230, 0.75
        %v2235 = vmul.f32 %v2231, 0.75
        %v2236 = vmul.f32 %v2228, 0.25
        %v2237 = vmul.f32 %v2229, 0.25
        %v2238 = vmul.f32 %v2230, 0.25
        %v2239 = vmul.f32 %v2231, 0.25
        %v2240 = vadd.f32 %v2232, %v2236
        %v2241 = vadd.f32 %v2233, %v2237
        %v2242 = vadd.f32 %v2234, %v2238
        %v2243 = vadd.f32 %v2235, %v2239
        %s2244 = scalar_lea.vmem %s175, 240 [#allocation9]
        %2245 = vst.msk [vmem:[%s2244] sm:$0xff] %vm389, %v2240
        %2246 = vst.msk [vmem:[%s2244 + $0x8] sm:$0xff] %vm389, %v2241
        %2247 = vst.msk [vmem:[%s2244 + $0x100] sm:$0xff] %vm389, %v2242
        %2248 = vst.msk [vmem:[%s2244 + $0x108] sm:$0xff] %vm389, %v2243
        %s2249 = sand.u32 %s75, 1
        %s2250 = scalar_lea.sflag [#allocation6], %s2249
        %s2251 = sand.u32 %s75, 1
        %s2252 = smul.addr %s2251, 512
        %s2253 = scalar_lea.vmem [#allocation9], %s2252
        // Predicated region
        $region37: #{tpu_custom_call.1} parent=27 // pred_check
          %p2254 = pneg %p85
        $region38: #{tpu_custom_call.1} parent=27 // pred_check_branch
          %2256 = sbr.rel (%p2254) target = $region40
        $region39: #{tpu_custom_call.1} parent=27 // pred_region
          %s2257 = smul.u32 2, %s20
          %s2259 = ssub.s32 8192, 8192
          %2260 = vsyncadd %s2250, %s2259
          %s2261 = smul.addr %s2257, 32
          %s2262 = smul.addr %s2261, 128
          %s2263 = scalar_lea.hbm %s2, %s2262
          %s2264 = sshll.u32 %s2253, 4
          %s2265 = int_to_ptr.vmem [resolvable:$true] %s2264
          %2270 = dma.vmem_to_hbm [thread:$0]  %s2265, 8192, %s2263, %s2250, 128, 128, 8
        $region40: #{tpu_custom_call.1} parent=27 // pred_fallthru
          _
      $region28: #{tpu_custom_call.1} parent=5 // pred_fallthru
        _
      %p2271 = scmp.le.s32.totalorder 2, %s15
      // Predicated region
      $region41: #{tpu_custom_call.1} parent=5 // pred_check
        %p2272 = pneg %p2271
      $region42: #{tpu_custom_call.1} parent=5 // pred_check_branch
        %2274 = sbr.rel (%p2272) target = $region44
      $region43: #{tpu_custom_call.1} parent=5 // pred_region
        %s2275 = ssub.s32 %s15, 2
        // Predicated region
        $region45: #{tpu_custom_call.1} parent=43 // pred_check
          %p2276 = pneg %p91
        $region46: #{tpu_custom_call.1} parent=43 // pred_check_branch
          %2278 = sbr.rel (%p2276) target = $region48
        $region47: #{tpu_custom_call.1} parent=43 // pred_region
          %s2279 = sand.u32 %s76, 1
          %s2280 = scalar_lea.sflag [#allocation6], %s2279
          %s2281 = sand.u32 %s76, 1
          %s2282 = smul.addr %s2281, 512
          %s2283 = scalar_lea.vmem [#allocation9], %s2282
          %2284 = dma.done %s2280, 8192
        $region48: #{tpu_custom_call.1} parent=43 // pred_fallthru
          _
      $region44: #{tpu_custom_call.1} parent=5 // pred_fallthru
        _
    $region6: #{tpu_custom_call.1} parent=1 // loop_footer
      %s19 = sadd.s32 1, %s15
    $region7: #{tpu_custom_call.1} parent=1 // loop_footer_branch
      %14 = sbr.rel target = $region3
    $region8: #{tpu_custom_call.1} parent=1 // loop_exit
      _
    %2285 = vsyncpa [#allocation5], 1
    %s2286 = scalar_lea.sflag [#allocation5], 1
    %2287 = vsyncpa %s2286, 1
    %2288 = vsyncpa [#allocation8], 1
    %2289 = vsyncpa [#allocation6], 1
    %s2290 = scalar_lea.sflag [#allocation6], 1
    %2291 = vsyncpa %s2290, 1

</llo_original>
